<compile_context>
chip_gen: v5e
topology: v5e:2x2
jax: 0.10.0
libtpu: 0.0.40
codegen_flags: <defaults>
</compile_context>

<pallas_src>
import math

import jax
import jax.numpy as jnp
from jax import lax
from jax.experimental import pallas as pl
from jax.experimental.pallas import tpu as pltpu


# ----------------------------------------------------------------------------
# Pallas kernel: DescMatchingLayer.forward
#   pairs[o, i, j] = sum_c d1[c, i] * d2[c, j] * W[o, c] + bias[o]
#   norm[i, j]     = || d1[:,i]/(1e-6+||d1[:,i]||) - d2[:,j]/(1e-6+||d2[:,j]||) ||_2
# ----------------------------------------------------------------------------
def desc_matching_kernel(d1_ref, d2_ref, wt_ref, b_ref, pairs_ref, norm_ref):
    d1 = d1_ref[0]                   # (C, K1)   native layout, no transpose
    d2 = d2_ref[0]                   # (C, K2)   native layout
    wt = wt_ref[...]                 # (C, OC)   pre-transposed Linear weight
    c = d1_ref.shape[1]
    oc = wt_ref.shape[1]
    k2 = d2_ref.shape[2]

    dims = (((0,), (0,)), ((), ()))  # contract channel dim 0 of both operands

    # --- d2-side statistics and normalization (lane-dense (C, K2) layout) ---
    sq2 = jnp.sum(d2 * d2, axis=0, keepdims=True)            # (1, K2)
    inv2 = 1.0 / (1e-6 + jnp.sqrt(sq2))                      # exact (not approx)
    n2 = d2 * inv2                                            # (C, K2)
    n2sq = sq2 * (inv2 * inv2)                                # (1, K2) = ||n2||^2

    # --- d1-side row statistics as (K1, 1) columns via a tiny matvec --------
    ones_col = jnp.ones((c, 1), dtype=jnp.float32)
    sq1_col = lax.dot_general(d1 * d1, ones_col, dims,
                              preferred_element_type=jnp.float32,
                              precision=lax.Precision.HIGHEST)   # (K1, 1)
    inv1_col = 1.0 / (1e-6 + jnp.sqrt(sq1_col))                  # (K1, 1)
    n1sq_col = sq1_col * (inv1_col * inv1_col)                   # (K1, 1) = ||n1||^2

    # --- single fused MXU matmul: RHS-stacked channel scaling + n2 ----------
    #   rhs = [ w[:,0]*d2 | w[:,1]*d2 | ... | n2 ]   shape (C, (OC+1)*K2)
    rhs = jnp.concatenate([wt[:, o:o + 1] * d2 for o in range(oc)] + [n2],
                          axis=1)
    fused = lax.dot_general(d1, rhs, dims,
                            preferred_element_type=jnp.float32,
                            precision=lax.Precision.HIGHEST)     # (K1, (OC+1)*K2)

    # Linear output channels: lane-dense (K1, K2) stores, scalar bias from SMEM.
    for o in range(oc):              # OC is tiny and static
        pairs_ref[0, o] = fused[:, o * k2:(o + 1) * k2] + b_ref[o]

    # Normalized pairwise L2 distance (exact expansion, inv2 already folded
    # into the RHS so cross = d1 . n2; one per-row scale by inv1 remains).
    cross = fused[:, oc * k2:]                                    # (K1, K2)
    dist2 = n1sq_col + n2sq - (2.0 * inv1_col) * cross
    norm_ref[0] = jnp.sqrt(jnp.maximum(dist2, 0.0))


def desc_matching_layer(desc1, desc2, fc_w, fc_b):
    """desc1: (B, C, d1, h1, w1), desc2: (B, C, d2, h2, w2); here d=h=1, w=K."""
    B, C = desc1.shape[0], desc1.shape[1]
    K1 = math.prod(desc1.shape[2:])
    K2 = math.prod(desc2.shape[2:])
    OC = fc_w.shape[0]

    # glue: keep native (B, C, K) layouts — reshape only, no transposes.
    d1 = desc1.reshape(B, C, K1).astype(jnp.float32)
    d2 = desc2.reshape(B, C, K2).astype(jnp.float32)
    w_t = jnp.transpose(fc_w).astype(jnp.float32)     # (C, OC), tiny
    b = fc_b.astype(jnp.float32)

    pairs, out_norm = pl.pallas_call(
        desc_matching_kernel,
        out_shape=(jax.ShapeDtypeStruct((B, OC, K1, K2), jnp.float32),
                   jax.ShapeDtypeStruct((B, K1, K2), jnp.float32)),
        grid_spec=pltpu.PrefetchScalarGridSpec(
            num_scalar_prefetch=0,
            grid=(B,),
            in_specs=[
                pl.BlockSpec((1, C, K1), lambda i: (i, 0, 0)),
                pl.BlockSpec((1, C, K2), lambda i: (i, 0, 0)),
                pl.BlockSpec((C, OC), lambda i: (0, 0)),
                pl.BlockSpec(memory_space=pltpu.MemorySpace.SMEM),
            ],
            out_specs=[
                pl.BlockSpec((1, OC, K1, K2), lambda i: (i, 0, 0, 0)),
                pl.BlockSpec((1, K1, K2), lambda i: (i, 0, 0)),
            ],
        ),
        compiler_params=pltpu.CompilerParams(
            dimension_semantics=("parallel",)),
    )(d1, d2, w_t, b)

    # glue: (B, OC, K1, K2) -> (B*K1*K2, OC), matching torch's .view(-1, c)->fc
    desc_pairs = jnp.transpose(pairs, (0, 2, 3, 1)).reshape(B * K1 * K2, OC)
    return desc_pairs, out_norm


# ----------------------------------------------------------------------------
# Pure-JAX reference (mirrors DescMatchingLayer.forward line by line)
# ----------------------------------------------------------------------------
def desc_matching_ref(desc1, desc2, fc_w, fc_b):
    B, C = desc1.shape[0], desc1.shape[1]
    K1 = math.prod(desc1.shape[2:])
    K2 = math.prod(desc2.shape[2:])
    o1 = jnp.transpose(desc1.reshape(B, C, K1), (0, 2, 1))[:, :, None, :]
    o2 = jnp.transpose(desc2.reshape(B, C, K2), (0, 2, 1))[:, None, :, :]
    out = jnp.dot((o1 * o2).reshape(-1, C), fc_w.T,
                  precision=lax.Precision.HIGHEST) + fc_b
    n1 = o1 / (1e-6 + jnp.linalg.norm(o1, axis=3, keepdims=True))
    n2 = o2 / (1e-6 + jnp.linalg.norm(o2, axis=3, keepdims=True))
    out_norm = jnp.linalg.norm(n1 - n2, axis=3)
    return out, out_norm


if __name__ == "__main__":
    # Small synthetic shapes implied by Net.forward:
    #   descriptors from sampling_layer: (B, C, 1, 1, K)
    B, C, K, OC = 2, 32, 128, 2
    key = jax.random.PRNGKey(0)
    k1, k2, k3 = jax.random.split(key, 3)

    desc1 = jax.random.normal(k1, (B, C, 1, 1, K), dtype=jnp.float32)
    desc2 = jax.random.normal(k2, (B, C, 1, 1, K), dtype=jnp.float32)

    # Deterministic param init, matching weight_init: kaiming_normal (fan_in,
    # gain=sqrt(2)) for the Linear weight, zeros for bias.
    fc_w = jax.random.normal(k3, (OC, C), dtype=jnp.float32) * math.sqrt(2.0 / C)
    fc_b = jnp.zeros((OC,), dtype=jnp.float32)

    desc_pairs, desc_pairs_norm = desc_matching_layer(desc1, desc2, fc_w, fc_b)
    jax.block_until_ready((desc_pairs, desc_pairs_norm))

    ref_pairs, ref_norm = desc_matching_ref(desc1, desc2, fc_w, fc_b)
    assert desc_pairs.shape == (B * K * K, OC)
    assert desc_pairs_norm.shape == (B, K, K)
    assert jnp.allclose(desc_pairs, ref_pairs, atol=2e-3, rtol=2e-3)
    assert jnp.allclose(desc_pairs_norm, ref_norm, atol=2e-3, rtol=2e-3)

    print("KERNEL_OK")
</pallas_src>

<mosaic_0001>
module attributes {stable_mosaic.version = 11 : i64} {
  func.func @desc_matching_kernel(%arg0: i32, %arg1: memref<1x32x128xf32, #tpu.memory_space<vmem>>, %arg2: memref<1x32x128xf32, #tpu.memory_space<vmem>>, %arg3: memref<32x2xf32, #tpu.memory_space<vmem>>, %arg4: memref<2xf32, #tpu.memory_space<smem>>, %arg5: memref<1x2x128x128xf32, #tpu.memory_space<vmem>>, %arg6: memref<1x128x128xf32, #tpu.memory_space<vmem>>) attributes {dimension_semantics = [#tpu.dimension_semantics<parallel>], iteration_bounds = array<i64: 2>, scalar_prefetch = 0 : i64, scratch_operands = 0 : i64, tpu.core_type = #tpu.core_type<tc>, window_params = [{transform_indices = @transform_0, window_bounds = array<i64: 1, 32, 128>}, {transform_indices = @transform_1, window_bounds = array<i64: 1, 32, 128>}, {pipeline_mode = #tpu.pipeline_mode<synchronous>, transform_indices = @transform_2, window_bounds = array<i64: 32, 2>}, {transform_indices = @transform_3, window_bounds = array<i64: 2>}, {transform_indices = @transform_4, window_bounds = array<i64: 1, 2, 128, 128>}, {transform_indices = @transform_5, window_bounds = array<i64: 1, 128, 128>}]} {
    %c0 = arith.constant 0 : index
    %c0_0 = arith.constant 0 : index
    %c0_1 = arith.constant 0 : index
    %0 = vector.load %arg1[%c0, %c0_0, %c0_1] : memref<1x32x128xf32, #tpu.memory_space<vmem>>, vector<1x32x128xf32>
    %1 = vector.shape_cast %0 : vector<1x32x128xf32> to vector<32x128xf32>
    %c0_2 = arith.constant 0 : index
    %c0_3 = arith.constant 0 : index
    %c0_4 = arith.constant 0 : index
    %2 = vector.load %arg2[%c0_2, %c0_3, %c0_4] : memref<1x32x128xf32, #tpu.memory_space<vmem>>, vector<1x32x128xf32>
    %3 = vector.shape_cast %2 : vector<1x32x128xf32> to vector<32x128xf32>
    %c0_5 = arith.constant 0 : index
    %c0_6 = arith.constant 0 : index
    %4 = vector.load %arg3[%c0_5, %c0_6] : memref<32x2xf32, #tpu.memory_space<vmem>>, vector<32x2xf32>
    %5 = arith.mulf %3, %3 : vector<32x128xf32>
    %cst = arith.constant dense<0.000000e+00> : vector<128xf32>
    %6 = vector.multi_reduction <add>, %5, %cst [0] : vector<32x128xf32> to vector<128xf32>
    %7 = vector.shape_cast %6 : vector<128xf32> to vector<1x128xf32>
    %8 = math.sqrt %7 : vector<1x128xf32>
    %cst_7 = arith.constant 9.99999997E-7 : f32
    %9 = vector.broadcast %cst_7 : f32 to vector<1x128xf32>
    %10 = arith.addf %9, %8 : vector<1x128xf32>
    %cst_8 = arith.constant 1.000000e+00 : f32
    %11 = vector.broadcast %cst_8 : f32 to vector<1x128xf32>
    %12 = arith.divf %11, %10 : vector<1x128xf32>
    %13 = vector.broadcast %12 : vector<1x128xf32> to vector<32x128xf32>
    %14 = arith.mulf %3, %13 : vector<32x128xf32>
    %15 = arith.mulf %12, %12 : vector<1x128xf32>
    %16 = arith.mulf %7, %15 : vector<1x128xf32>
    %cst_9 = arith.constant 1.000000e+00 : f32
    %17 = vector.broadcast %cst_9 : f32 to vector<32x1xf32>
    %18 = arith.mulf %1, %1 : vector<32x128xf32>
    %cst_10 = arith.constant dense<0.000000e+00> : vector<128x1xf32>
    %19 = tpu.matmul %18, %17, %cst_10 {dimension_numbers = #tpu.dot_dimension_numbers<[0], [0], [1], [1], [0, 1, 1, 1], [], []>, precision = #tpu.contract_precision<fp32>} : vector<32x128xf32>, vector<32x1xf32>, vector<128x1xf32> -> vector<128x1xf32>
    %20 = math.sqrt %19 : vector<128x1xf32>
    %cst_11 = arith.constant 9.99999997E-7 : f32
    %21 = vector.broadcast %cst_11 : f32 to vector<128x1xf32>
    %22 = arith.addf %21, %20 : vector<128x1xf32>
    %cst_12 = arith.constant 1.000000e+00 : f32
    %23 = vector.broadcast %cst_12 : f32 to vector<128x1xf32>
    %24 = arith.divf %23, %22 : vector<128x1xf32>
    %25 = arith.mulf %24, %24 : vector<128x1xf32>
    %26 = arith.mulf %19, %25 : vector<128x1xf32>
    %27 = vector.extract_strided_slice %4 {offsets = [0, 0], sizes = [32, 1], strides = [1, 1]} : vector<32x2xf32> to vector<32x1xf32>
    %28 = vector.broadcast %27 : vector<32x1xf32> to vector<32x128xf32>
    %29 = arith.mulf %28, %3 : vector<32x128xf32>
    %30 = vector.extract_strided_slice %4 {offsets = [0, 1], sizes = [32, 1], strides = [1, 1]} : vector<32x2xf32> to vector<32x1xf32>
    %31 = vector.broadcast %30 : vector<32x1xf32> to vector<32x128xf32>
    %32 = arith.mulf %31, %3 : vector<32x128xf32>
    %33 = tpu.concatenate %29, %32, %14 in 1 : vector<32x128xf32>, vector<32x128xf32>, vector<32x128xf32> -> vector<32x384xf32>
    %cst_13 = arith.constant dense<0.000000e+00> : vector<128x384xf32>
    %34 = tpu.matmul %1, %33, %cst_13 {dimension_numbers = #tpu.dot_dimension_numbers<[0], [0], [1], [1], [0, 1, 1, 1], [], []>, precision = #tpu.contract_precision<fp32>} : vector<32x128xf32>, vector<32x384xf32>, vector<128x384xf32> -> vector<128x384xf32>
    %35 = vector.extract_strided_slice %34 {offsets = [0, 0], sizes = [128, 128], strides = [1, 1]} : vector<128x384xf32> to vector<128x128xf32>
    %c0_14 = arith.constant 0 : index
    %36 = memref.load %arg4[%c0_14] : memref<2xf32, #tpu.memory_space<smem>>
    %37 = vector.broadcast %36 : f32 to vector<128x128xf32>
    %38 = arith.addf %35, %37 : vector<128x128xf32>
    %c0_15 = arith.constant 0 : index
    %c0_16 = arith.constant 0 : index
    %c0_17 = arith.constant 0 : index
    %c0_18 = arith.constant 0 : index
    %39 = vector.load %arg5[%c0_15, %c0_16, %c0_17, %c0_18] : memref<1x2x128x128xf32, #tpu.memory_space<vmem>>, vector<1x1x128x128xf32>
    %40 = vector.shape_cast %39 : vector<1x1x128x128xf32> to vector<128x128xf32>
    %41 = vector.shape_cast %38 : vector<128x128xf32> to vector<1x1x128x128xf32>
    tpu.vector_store %arg5[%c0_15, %c0_16, %c0_17, %c0_18], %41 {strides = array<i32>} : memref<1x2x128x128xf32, #tpu.memory_space<vmem>>, vector<1x1x128x128xf32>,
    %42 = vector.extract_strided_slice %34 {offsets = [0, 128], sizes = [128, 128], strides = [1, 1]} : vector<128x384xf32> to vector<128x128xf32>
    %c1 = arith.constant 1 : index
    %43 = memref.load %arg4[%c1] : memref<2xf32, #tpu.memory_space<smem>>
    %44 = vector.broadcast %43 : f32 to vector<128x128xf32>
    %45 = arith.addf %42, %44 : vector<128x128xf32>
    %c0_19 = arith.constant 0 : index
    %c1_20 = arith.constant 1 : index
    %c0_21 = arith.constant 0 : index
    %c0_22 = arith.constant 0 : index
    %46 = vector.load %arg5[%c0_19, %c1_20, %c0_21, %c0_22] : memref<1x2x128x128xf32, #tpu.memory_space<vmem>>, vector<1x1x128x128xf32>
    %47 = vector.shape_cast %46 : vector<1x1x128x128xf32> to vector<128x128xf32>
    %48 = vector.shape_cast %45 : vector<128x128xf32> to vector<1x1x128x128xf32>
    tpu.vector_store %arg5[%c0_19, %c1_20, %c0_21, %c0_22], %48 {strides = array<i32>} : memref<1x2x128x128xf32, #tpu.memory_space<vmem>>, vector<1x1x128x128xf32>,
    %49 = vector.extract_strided_slice %34 {offsets = [0, 256], sizes = [128, 128], strides = [1, 1]} : vector<128x384xf32> to vector<128x128xf32>
    %50 = vector.broadcast %26 : vector<128x1xf32> to vector<128x128xf32>
    %51 = vector.broadcast %16 : vector<1x128xf32> to vector<128x128xf32>
    %52 = arith.addf %50, %51 : vector<128x128xf32>
    %cst_23 = arith.constant 2.000000e+00 : f32
    %53 = vector.broadcast %cst_23 : f32 to vector<128x1xf32>
    %54 = arith.mulf %53, %24 : vector<128x1xf32>
    %55 = vector.broadcast %54 : vector<128x1xf32> to vector<128x128xf32>
    %56 = arith.mulf %55, %49 : vector<128x128xf32>
    %57 = arith.subf %52, %56 : vector<128x128xf32>
    %cst_24 = arith.constant 0.000000e+00 : f32
    %58 = vector.broadcast %cst_24 : f32 to vector<128x128xf32>
    %59 = arith.maximumf %57, %58 : vector<128x128xf32>
    %60 = math.sqrt %59 : vector<128x128xf32>
    %c0_25 = arith.constant 0 : index
    %c0_26 = arith.constant 0 : index
    %c0_27 = arith.constant 0 : index
    %61 = vector.load %arg6[%c0_25, %c0_26, %c0_27] : memref<1x128x128xf32, #tpu.memory_space<vmem>>, vector<1x128x128xf32>
    %62 = vector.shape_cast %61 : vector<1x128x128xf32> to vector<128x128xf32>
    %63 = vector.shape_cast %60 : vector<128x128xf32> to vector<1x128x128xf32>
    tpu.vector_store %arg6[%c0_25, %c0_26, %c0_27], %63 {strides = array<i32>} : memref<1x128x128xf32, #tpu.memory_space<vmem>>, vector<1x128x128xf32>,
    return
  }
  func.func @transform_0(%arg0: i32) -> (i32, i32, i32) {
    %c0_i32 = arith.constant 0 : i32
    %c0_i32_0 = arith.constant 0 : i32
    %c0_i32_1 = arith.constant 0 : i32
    return %arg0, %c0_i32, %c0_i32_0 : i32, i32, i32
  }
  func.func @transform_1(%arg0: i32) -> (i32, i32, i32) {
    %c0_i32 = arith.constant 0 : i32
    %c0_i32_0 = arith.constant 0 : i32
    %c0_i32_1 = arith.constant 0 : i32
    return %arg0, %c0_i32, %c0_i32_0 : i32, i32, i32
  }
  func.func @transform_2(%arg0: i32) -> (i32, i32) {
    %c0_i32 = arith.constant 0 : i32
    %c0_i32_0 = arith.constant 0 : i32
    %c0_i32_1 = arith.constant 0 : i32
    return %c0_i32, %c0_i32_0 : i32, i32
  }
  func.func @transform_3(%arg0: i32) -> i32 {
    %c0_i32 = arith.constant 0 : i32
    %c0_i32_0 = arith.constant 0 : i32
    return %c0_i32 : i32
  }
  func.func @transform_4(%arg0: i32) -> (i32, i32, i32, i32) {
    %c0_i32 = arith.constant 0 : i32
    %c0_i32_0 = arith.constant 0 : i32
    %c0_i32_1 = arith.constant 0 : i32
    %c0_i32_2 = arith.constant 0 : i32
    return %arg0, %c0_i32, %c0_i32_0, %c0_i32_1 : i32, i32, i32, i32
  }
  func.func @transform_5(%arg0: i32) -> (i32, i32, i32) {
    %c0_i32 = arith.constant 0 : i32
    %c0_i32_0 = arith.constant 0 : i32
    %c0_i32_1 = arith.constant 0 : i32
    return %arg0, %c0_i32, %c0_i32_0 : i32, i32, i32
  }
}

</mosaic_0001>

<llo_original>
// kernel: tpu_custom_call.1
$region0: #{tpu_custom_call.1}
  #allocation0 [shape = 'u32[]', space=smem, size = 0x4, offset = 0x4, fixed_abs, tag = 'smem constant byte address 0x4 - core index']
  #allocation1 [shape = 'u32[72,128]{1,0:T(1,128)}', space=vmem, size = 0x9000, scoped, tag = 'internal scratch']
  %s0 = inlined_call_operand.hbm [shape: f32[2,32,128], index: 0, kind: input, shape index: {}]
  %s1 = inlined_call_operand.hbm [shape: f32[2,32,128], index: 1, kind: input, shape index: {}]
  %s2 = inlined_call_operand.vmem [shape: f32[32,2], index: 2, kind: input, shape index: {}]
  %s3 = inlined_call_operand.vmem [shape: f32[2], index: 3, kind: input, shape index: {}]
  %s4 = inlined_call_operand.hbm [shape: f32[2,2,128,128], index: 4, kind: output, shape index: {0}]
  %s5 = inlined_call_operand.hbm [shape: f32[2,128,128], index: 5, kind: output, shape index: {1}]
  %6 = xla_tuple %s4, %s5
  %s7 = sld [smem:[#allocation0]]
  $region69: #{tpu_custom_call.1} parent=0
    _
  %s9 = ssub.s32 1, %s7
  %s10 = scalar_select 0, %s9, %s7
  $region1: #{tpu_custom_call.1} parent=0
    #allocation2 [shape = 'u8[32768]{0}', space=vmem, size = 0x8000, scoped, tag = 'input window, operand 0']
    #allocation3 [shape = 's32[2]{0}', space=sflag, size = 0x8, scoped, tag = 'scoped memory for tpu_custom_call.1']
    #allocation4 [shape = 's32[2]{0}', space=sflag, size = 0x8, scoped, tag = 'scoped memory for tpu_custom_call.1']
    #allocation5 [shape = 's32[2]{0}', space=sflag, size = 0x8, scoped, tag = 'scoped memory for tpu_custom_call.1']
    #allocation6 [shape = 'u8[32768]{0}', space=vmem, size = 0x8000, scoped, tag = 'input window, operand 1']
    #allocation7 [shape = 's32[2]{0}', space=sflag, size = 0x8, scoped, tag = 'scoped memory for tpu_custom_call.1']
    #allocation8 [shape = 'u8[512]{0}', space=smem, size = 0x200, scoped, tag = 'input window, operand 3, single buffered']
    #allocation9 [shape = 'u8[262144]{0}', space=vmem, size = 0x40000, scoped, tag = 'output window, operand 0']
    #allocation10 [shape = 'u8[131072]{0}', space=vmem, size = 0x20000, scoped, tag = 'output window, operand 1']
    #allocation11 [shape = 's32[2]{0}', space=sflag, size = 0x8, scoped, tag = 'scoped memory for tpu_custom_call.1']
    %11 = vsyncpa [#allocation3], 0
    %s12 = scalar_lea.sflag [#allocation3], 1
    %13 = vsyncpa %s12, 0
    %14 = vsyncpa [#allocation7], 0
    %s15 = scalar_lea.sflag [#allocation7], 1
    %16 = vsyncpa %s15, 0
    %17 = vsyncpa [#allocation5], 0
    %18 = vsyncpa [#allocation4], 0
    %s19 = scalar_lea.sflag [#allocation4], 1
    %20 = vsyncpa %s19, 0
    %21 = vsyncpa [#allocation11], 0
    %s22 = scalar_lea.sflag [#allocation11], 1
    %23 = vsyncpa %s22, 0
    loop: start=0, step=1, limit=4
    $region2: #{tpu_custom_call.1} parent=1 // loop_pre_header
      _
    $region3: #{tpu_custom_call.1} parent=1 // loop_header
      %s25 = sphi 0, %s29
      %p26 = scmp.ge.s32.totalorder %s25, 4
      %s35 = sphi 0, %s37
      %s38 = sphi 0, %s35
      %s39 = sphi 0, %s38
      %s55 = sphi 0, %s39
      %s61 = sphi 0, %s63
      %s64 = sphi 0, %s61
      %s65 = sphi 0, %s64
      %s81 = sphi 0, %s65
      %s85 = sphi 0, %s85
      %s87 = sphi 0, %s85
      %s88 = sphi 0, %s87
      %s102 = sphi 0, %s88
      %s106 = sphi 0, %s106
      %s108 = sphi 0, %s106
      %s109 = sphi 0, %s108
      %s123 = sphi 0, %s109
      %s129 = sphi 0, %s131
      %s132 = sphi 0, %s129
      %s133 = sphi 0, %s132
      %s149 = sphi 0, %s133
      %s155 = sphi 0, %s157
      %s158 = sphi 0, %s155
      %s159 = sphi 0, %s158
      %s175 = sphi 0, %s159
    $region4: #{tpu_custom_call.1} parent=1 // loop_header_branch
      %28 = sbr.rel (%p26) target = $region8
    $region5: #{tpu_custom_call.1} parent=1 // loop_body
      %s30 = ssub.s32 %s25, 1
      %s31 = ssub.s32 %s25, 2
      %s32 = sadd.s32 %s25, 1
      %s33 = ssub.s32 %s25, %s32
      %p34 = scmp.eq.s32.totalorder %s33, 0
      %s36 = sadd.s32 %s35, 1
      %s37 = scalar_select %p34, %s35, %s36
      %p40 = pneg %p34
      %p41 = scmp.eq.s32.totalorder %s25, 1
      %p42 = por %p40, %p41
      %p43 = scmp.ne.s32.totalorder %s35, %s38
      %p44 = scmp.eq.s32.totalorder %s25, 0
      %p45 = por %p43, %p44
      %p46 = scmp.ne.s32.totalorder %s35, %s38
      %p47 = scmp.eq.s32.totalorder %s30, 1
      %p48 = por %p46, %p47
      %p49 = scmp.ne.s32.totalorder %s38, %s39
      %p50 = scmp.eq.s32.totalorder %s30, 0
      %p51 = por %p49, %p50
      %p52 = scmp.ne.s32.totalorder %s38, %s39
      %p53 = scmp.eq.s32.totalorder %s31, 1
      %p54 = por %p52, %p53
      %p56 = scmp.ne.s32.totalorder %s39, %s55
      %p57 = scmp.eq.s32.totalorder %s31, 0
      %p58 = por %p56, %p57
      %s59 = ssub.s32 %s25, %s32
      %p60 = scmp.eq.s32.totalorder %s59, 0
      %s62 = sadd.s32 %s61, 1
      %s63 = scalar_select %p60, %s61, %s62
      %p66 = pneg %p60
      %p67 = scmp.eq.s32.totalorder %s25, 1
      %p68 = por %p66, %p67
      %p69 = scmp.ne.s32.totalorder %s61, %s64
      %p70 = scmp.eq.s32.totalorder %s25, 0
      %p71 = por %p69, %p70
      %p72 = scmp.ne.s32.totalorder %s61, %s64
      %p73 = scmp.eq.s32.totalorder %s30, 1
      %p74 = por %p72, %p73
      %p75 = scmp.ne.s32.totalorder %s64, %s65
      %p76 = scmp.eq.s32.totalorder %s30, 0
      %p77 = por %p75, %p76
      %p78 = scmp.ne.s32.totalorder %s64, %s65
      %p79 = scmp.eq.s32.totalorder %s31, 1
      %p80 = por %p78, %p79
      %p82 = scmp.ne.s32.totalorder %s65, %s81
      %p83 = scmp.eq.s32.totalorder %s31, 0
      %p84 = por %p82, %p83
      %s86 = sadd.s32 %s85, 1
      %p89 = scmp.eq.s32.totalorder %s25, 1
      %p90 = scmp.ne.s32.totalorder %s85, %s87
      %p91 = scmp.eq.s32.totalorder %s25, 0
      %p92 = por %p90, %p91
      %p93 = scmp.ne.s32.totalorder %s85, %s87
      %p94 = scmp.eq.s32.totalorder %s30, 1
      %p95 = por %p93, %p94
      %p96 = scmp.ne.s32.totalorder %s87, %s88
      %p97 = scmp.eq.s32.totalorder %s30, 0
      %p98 = por %p96, %p97
      %p99 = scmp.ne.s32.totalorder %s87, %s88
      %p100 = scmp.eq.s32.totalorder %s31, 1
      %p101 = por %p99, %p100
      %p103 = scmp.ne.s32.totalorder %s88, %s102
      %p104 = scmp.eq.s32.totalorder %s31, 0
      %p105 = por %p103, %p104
      %s107 = sadd.s32 %s106, 1
      %p110 = scmp.eq.s32.totalorder %s25, 1
      %p111 = scmp.ne.s32.totalorder %s106, %s108
      %p112 = scmp.eq.s32.totalorder %s25, 0
      %p113 = por %p111, %p112
      %p114 = scmp.ne.s32.totalorder %s106, %s108
      %p115 = scmp.eq.s32.totalorder %s30, 1
      %p116 = por %p114, %p115
      %p117 = scmp.ne.s32.totalorder %s108, %s109
      %p118 = scmp.eq.s32.totalorder %s30, 0
      %p119 = por %p117, %p118
      %p120 = scmp.ne.s32.totalorder %s108, %s109
      %p121 = scmp.eq.s32.totalorder %s31, 1
      %p122 = por %p120, %p121
      %p124 = scmp.ne.s32.totalorder %s109, %s123
      %p125 = scmp.eq.s32.totalorder %s31, 0
      %p126 = por %p124, %p125
      %s127 = ssub.s32 %s25, %s32
      %p128 = scmp.eq.s32.totalorder %s127, 0
      %s130 = sadd.s32 %s129, 1
      %s131 = scalar_select %p128, %s129, %s130
      %p134 = pneg %p128
      %p135 = scmp.eq.s32.totalorder %s25, 1
      %p136 = por %p134, %p135
      %p137 = scmp.ne.s32.totalorder %s129, %s132
      %p138 = scmp.eq.s32.totalorder %s25, 0
      %p139 = por %p137, %p138
      %p140 = scmp.ne.s32.totalorder %s129, %s132
      %p141 = scmp.eq.s32.totalorder %s30, 1
      %p142 = por %p140, %p141
      %p143 = scmp.ne.s32.totalorder %s132, %s133
      %p144 = scmp.eq.s32.totalorder %s30, 0
      %p145 = por %p143, %p144
      %p146 = scmp.ne.s32.totalorder %s132, %s133
      %p147 = scmp.eq.s32.totalorder %s31, 1
      %p148 = por %p146, %p147
      %p150 = scmp.ne.s32.totalorder %s133, %s149
      %p151 = scmp.eq.s32.totalorder %s31, 0
      %p152 = por %p150, %p151
      %s153 = ssub.s32 %s25, %s32
      %p154 = scmp.eq.s32.totalorder %s153, 0
      %s156 = sadd.s32 %s155, 1
      %s157 = scalar_select %p154, %s155, %s156
      %p160 = pneg %p154
      %p161 = scmp.eq.s32.totalorder %s25, 1
      %p162 = por %p160, %p161
      %p163 = scmp.ne.s32.totalorder %s155, %s158
      %p164 = scmp.eq.s32.totalorder %s25, 0
      %p165 = por %p163, %p164
      %p166 = scmp.ne.s32.totalorder %s155, %s158
      %p167 = scmp.eq.s32.totalorder %s30, 1
      %p168 = por %p166, %p167
      %p169 = scmp.ne.s32.totalorder %s158, %s159
      %p170 = scmp.eq.s32.totalorder %s30, 0
      %p171 = por %p169, %p170
      %p172 = scmp.ne.s32.totalorder %s158, %s159
      %p173 = scmp.eq.s32.totalorder %s31, 1
      %p174 = por %p172, %p173
      %p176 = scmp.ne.s32.totalorder %s159, %s175
      %p177 = scmp.eq.s32.totalorder %s31, 0
      %p178 = por %p176, %p177
      %p179 = scmp.le.s32.totalorder 1, %s25
      %p180 = scmp.lt.s32.totalorder %s25, 3
      %p181 = pnand %p179, %p180
      %p182 = pneg %p181
      // Predicated region
      $region9: #{tpu_custom_call.1} parent=5 // pred_check
        _
      $region10: #{tpu_custom_call.1} parent=5 // pred_check_branch
        %184 = sbr.rel (%p181) target = $region12
      $region11: #{tpu_custom_call.1} parent=5 // pred_region
        %s185 = ssub.s32 %s25, 1
        // Predicated region
        $region13: #{tpu_custom_call.1} parent=11 // pred_check
          %p186 = pneg %p98
        $region14: #{tpu_custom_call.1} parent=11 // pred_check_branch
          %188 = sbr.rel (%p186) target = $region16
        $region15: #{tpu_custom_call.1} parent=11 // pred_region
          _
        $region16: #{tpu_custom_call.1} parent=11 // pred_fallthru
          _
        // Predicated region
        $region17: #{tpu_custom_call.1} parent=11 // pred_check
          %p189 = pneg %p119
        $region18: #{tpu_custom_call.1} parent=11 // pred_check_branch
          %191 = sbr.rel (%p189) target = $region20
        $region19: #{tpu_custom_call.1} parent=11 // pred_region
          %193 = vsyncadd [#allocation5], 0
          %s195 = sshll.u32 %s3, 4
          %s196 = int_to_ptr.vmem [resolvable:$true] %s195
          %198 = dma.vmem_to_smem %s196, 16, [#allocation8], [#allocation5]
        $region20: #{tpu_custom_call.1} parent=11 // pred_fallthru
          _
      $region12: #{tpu_custom_call.1} parent=5 // pred_fallthru
        _
      %p199 = scmp.lt.s32.totalorder %s25, 2
      // Predicated region
      $region21: #{tpu_custom_call.1} parent=5 // pred_check
        %p200 = pneg %p199
      $region22: #{tpu_custom_call.1} parent=5 // pred_check_branch
        %202 = sbr.rel (%p200) target = $region24
      $region23: #{tpu_custom_call.1} parent=5 // pred_region
        // Predicated region
        $region25: #{tpu_custom_call.1} parent=23 // pred_check
          %p203 = pneg %p45
        $region26: #{tpu_custom_call.1} parent=23 // pred_check_branch
          %205 = sbr.rel (%p203) target = $region28
        $region27: #{tpu_custom_call.1} parent=23 // pred_region
          %s206 = sand.u32 %s35, 1
          %s207 = scalar_lea.sflag [#allocation3], %s206
          %s208 = sand.u32 %s35, 1
          %s209 = smul.addr %s208, 32
          %s210 = scalar_lea.vmem [#allocation2], %s209
          %212 = vsyncadd %s207, 0
          %s213 = smul.addr %s25, 4
          %s214 = smul.addr %s213, 8
          %s215 = scalar_lea.hbm %s0, %s214
          %s216 = sshll.u32 %s215, 4
          %s217 = int_to_ptr.hbm [resolvable:$true] %s216
          %s218 = sshll.u32 %s210, 4
          %s219 = int_to_ptr.vmem [resolvable:$true] %s218
          %224 = dma.hbm_to_vmem [thread:$0]  %s217, 512, %s219, %s207, 128, 128, 8
        $region28: #{tpu_custom_call.1} parent=23 // pred_fallthru
          _
        // Predicated region
        $region29: #{tpu_custom_call.1} parent=23 // pred_check
          %p225 = pneg %p71
        $region30: #{tpu_custom_call.1} parent=23 // pred_check_branch
          %227 = sbr.rel (%p225) target = $region32
        $region31: #{tpu_custom_call.1} parent=23 // pred_region
          %s228 = sand.u32 %s61, 1
          %s229 = scalar_lea.sflag [#allocation7], %s228
          %s230 = sand.u32 %s61, 1
          %s231 = smul.addr %s230, 32
          %s232 = scalar_lea.vmem [#allocation6], %s231
          %234 = vsyncadd %s229, 0
          %s235 = smul.addr %s25, 4
          %s236 = smul.addr %s235, 8
          %s237 = scalar_lea.hbm %s1, %s236
          %s238 = sshll.u32 %s237, 4
          %s239 = int_to_ptr.hbm [resolvable:$true] %s238
          %s240 = sshll.u32 %s232, 4
          %s241 = int_to_ptr.vmem [resolvable:$true] %s240
          %246 = dma.hbm_to_vmem [thread:$0]  %s239, 512, %s241, %s229, 128, 128, 8
        $region32: #{tpu_custom_call.1} parent=23 // pred_fallthru
          _
      $region24: #{tpu_custom_call.1} parent=5 // pred_fallthru
        _
      %p247 = scmp.le.s32.totalorder 1, %s25
      %p248 = scmp.lt.s32.totalorder %s25, 3
      %p249 = pnand %p247, %p248
      %p250 = pneg %p249
      // Predicated region
      $region33: #{tpu_custom_call.1} parent=5 // pred_check
        _
      $region34: #{tpu_custom_call.1} parent=5 // pred_check_branch
        %252 = sbr.rel (%p249) target = $region36
      $region35: #{tpu_custom_call.1} parent=5 // pred_region
        %s253 = ssub.s32 %s25, 1
        %s254 = sand.u32 %s38, 1
        %s255 = scalar_lea.sflag [#allocation3], %s254
        %s256 = sand.u32 %s38, 1
        %s257 = smul.addr %s256, 32
        %s258 = scalar_lea.vmem [#allocation2], %s257
        // Predicated region
        $region37: #{tpu_custom_call.1} parent=35 // pred_check
          %p259 = pneg %p51
        $region38: #{tpu_custom_call.1} parent=35 // pred_check_branch
          %261 = sbr.rel (%p259) target = $region40
        $region39: #{tpu_custom_call.1} parent=35 // pred_region
          %263 = dma.done %s255, 512
        $region40: #{tpu_custom_call.1} parent=35 // pred_fallthru
          _
        %s264 = sand.u32 %s64, 1
        %s265 = scalar_lea.sflag [#allocation7], %s264
        %s266 = sand.u32 %s64, 1
        %s267 = smul.addr %s266, 32
        %s268 = scalar_lea.vmem [#allocation6], %s267
        // Predicated region
        $region41: #{tpu_custom_call.1} parent=35 // pred_check
          %p269 = pneg %p77
        $region42: #{tpu_custom_call.1} parent=35 // pred_check_branch
          %271 = sbr.rel (%p269) target = $region44
        $region43: #{tpu_custom_call.1} parent=35 // pred_region
          %273 = dma.done %s265, 512
        $region44: #{tpu_custom_call.1} parent=35 // pred_fallthru
          _
        // Predicated region
        $region45: #{tpu_custom_call.1} parent=35 // pred_check
          %p274 = pneg %p119
        $region46: #{tpu_custom_call.1} parent=35 // pred_check_branch
          %276 = sbr.rel (%p274) target = $region48
        $region47: #{tpu_custom_call.1} parent=35 // pred_region
          %278 = dma.done [#allocation5], 16
        $region48: #{tpu_custom_call.1} parent=35 // pred_fallthru
          _
        %279 = sfence
        %s280 = sand.u32 %s38, 1
        %s281 = scalar_lea.sflag [#allocation3], %s280
        %s282 = sand.u32 %s38, 1
        %s283 = smul.addr %s282, 32
        %s284 = scalar_lea.vmem [#allocation2], %s283
        %p285 = pneg %p51
        %p286 = pneg %p48
        %s287 = sand.u32 %s64, 1
        %s288 = scalar_lea.sflag [#allocation7], %s287
        %s289 = sand.u32 %s64, 1
        %s290 = smul.addr %s289, 32
        %s291 = scalar_lea.vmem [#allocation6], %s290
        %p292 = pneg %p77
        %p293 = pneg %p74
        %p294 = pneg %p98
        %p295 = pneg %p95
        %p296 = pneg %p119
        %p297 = pneg %p116
        %p298 = pneg %p145
        %p299 = pneg %p142
        %s300 = sand.u32 %s132, 1
        %s301 = scalar_lea.sflag [#allocation4], %s300
        %s302 = sand.u32 %s132, 1
        %s303 = smul.addr %s302, 256
        %s304 = scalar_lea.vmem [#allocation9], %s303
        %p305 = pneg %p171
        %p306 = pneg %p168
        %s307 = sand.u32 %s158, 1
        %s308 = scalar_lea.sflag [#allocation11], %s307
        %s309 = sand.u32 %s158, 1
        %s310 = smul.addr %s309, 128
        %s311 = scalar_lea.vmem [#allocation10], %s310
        %v312 = vld [vmem:[%s258] sm:$0xff]
        %v313 = vld [vmem:[%s258 + $0x8] sm:$0xff]
        %v314 = vld [vmem:[%s258 + $0x10] sm:$0xff]
        %v315 = vld [vmem:[%s258 + $0x18] sm:$0xff]
        %v316 = vld [vmem:[%s268] sm:$0xff]
        %v317 = vld [vmem:[%s268 + $0x8] sm:$0xff]
        %v318 = vld [vmem:[%s268 + $0x10] sm:$0xff]
        %v319 = vld [vmem:[%s268 + $0x18] sm:$0xff]
        %v320 = vld [vmem:[%s2] sm:$0xff]
        %v321 = vld [vmem:[%s2 + $0x8] sm:$0xff]
        %v322 = vld [vmem:[%s2 + $0x10] sm:$0xff]
        %v323 = vld [vmem:[%s2 + $0x18] sm:$0xff]
        %v324 = vmul.f32 %v316, %v316
        %v325 = vmul.f32 %v317, %v317
        %v326 = vmul.f32 %v318, %v318
        %v327 = vmul.f32 %v319, %v319
        %v328 = vadd.f32 %v324, %v325
        %v329 = vadd.f32 %v328, %v326
        %v330 = vadd.f32 %v329, %v327
        %v331 = vrot.slane %v330, 4
        %v332 = vadd.f32 %v330, %v331
        %v333 = vrot.slane %v332, 2
        %v334 = vadd.f32 %v332, %v333
        %v335 = vrot.slane %v334, 1
        %v336 = vadd.f32 %v334, %v335
        %v337 = vrsqrt.pop %v336
        %v338 = vmul.f32 %v337, %v336
        %v339 = vmul.f32 %v338, %v337
        %v340 = vmul.f32 0.5, %v339
        %v341 = vsub.f32 1.5, %v340
        %v342 = vmul.f32 %v337, %v341
        %v343 = vmul.f32 %v336, %v342
        %vm344 = vcmp.eq.f32.partialorder %v336, inf
        %v345 = vsel %vm344, %v336, %v343
        %vm346 = vcmp.eq.f32.partialorder %v336, 0.0
        %v347 = vand.u32 %v336, 2147483648
        %v348 = vsel %vm346, %v347, %v345
        %v349 = vadd.f32 %v348, 1e-06
        %v350 = vrcp.pop %v349
        %v351 = vmul.f32 %v349, %v350
        %v352 = vsub.f32 1.0, %v351
        %v353 = vmul.f32 %v350, %v352
        %v354 = vadd.f32 %v350, %v353
        %vm355 = vweird.f32 %v349
        %vm356 = vweird.f32 %v350
        %vm357 = vmor %vm355, %vm356
        %v358 = vsel %vm357, %v350, %v354
        %v359 = vand.u32 2147483647, %v349
        %vm360 = vcmp.eq.f32.partialorder %v359, 8.507059e+37
        %v361 = vand.u32 %v349, 2147483648
        %v362 = vor.u32 1.1754944e-38, %v361
        %v363 = vsel %vm360, %v362, %v358
        %v364 = vmul.f32 1.0, %v363
        %v365 = vmul.f32 %v316, %v364
        %v366 = vmul.f32 %v317, %v364
        %v367 = vmul.f32 %v318, %v364
        %v368 = vmul.f32 %v319, %v364
        %v369 = vmul.f32 %v364, %v364
        %v370 = vmul.f32 %v336, %v369
        %v371 = vmul.f32 %v312, %v312
        %v372 = vmul.f32 %v313, %v313
        %v373 = vmul.f32 %v314, %v314
        %v374 = vmul.f32 %v315, %v315
        %375 = vxpose.xlu0.b32.start [1/16] %v371, 128
        %376 = vxpose.xlu0.b32.cont [2/16] %v372, 128
        %377 = vxpose.xlu0.b32.cont [3/16] %v373, 128
        %378 = vxpose.xlu0.b32.cont [4/16] %v374, 128
        %379 = vxpose.xlu0.b32.cont [5/16] 0.0, 128
        %380 = vxpose.xlu0.b32.cont [6/16] 0.0, 128
        %381 = vxpose.xlu0.b32.cont [7/16] 0.0, 128
        %382 = vxpose.xlu0.b32.cont [8/16] 0.0, 128
        %383 = vxpose.xlu0.b32.cont [9/16] 0.0, 128
        %384 = vxpose.xlu0.b32.cont [10/16] 0.0, 128
        %385 = vxpose.xlu0.b32.cont [11/16] 0.0, 128
        %386 = vxpose.xlu0.b32.cont [12/16] 0.0, 128
        %387 = vxpose.xlu0.b32.cont [13/16] 0.0, 128
        %388 = vxpose.xlu0.b32.cont [14/16] 0.0, 128
        %389 = vxpose.xlu0.b32.cont [15/16] 0.0, 128
        %390 = vxpose.xlu0.b32.end [16/16] 0.0, 128
        %v391 = vpop.trf.xlu0
        %v392 = vpop.trf.xlu0
        %v393 = vpop.trf.xlu0
        %v394 = vpop.trf.xlu0
        %v395 = vpop.trf.xlu0
        %v396 = vpop.trf.xlu0
        %v397 = vpop.trf.xlu0
        %v398 = vpop.trf.xlu0
        %v399 = vpop.trf.xlu0
        %v400 = vpop.trf.xlu0
        %v401 = vpop.trf.xlu0
        %v402 = vpop.trf.xlu0
        %v403 = vpop.trf.xlu0
        %v404 = vpop.trf.xlu0
        %v405 = vpop.trf.xlu0
        %v406 = vpop.trf.xlu0
        %vm407 = vcmask 261120
        %v409 = vsel %vm407, %v391, 0
        %v412 = vsel %vm407, %v392, 0
        %v415 = vsel %vm407, %v393, 0
        %v418 = vsel %vm407, %v394, 0
        %v421 = vsel %vm407, %v395, 0
        %v424 = vsel %vm407, %v396, 0
        %v427 = vsel %vm407, %v397, 0
        %v430 = vsel %vm407, %v398, 0
        %v433 = vsel %vm407, %v399, 0
        %v436 = vsel %vm407, %v400, 0
        %v439 = vsel %vm407, %v401, 0
        %v442 = vsel %vm407, %v402, 0
        %v445 = vsel %vm407, %v403, 0
        %v448 = vsel %vm407, %v404, 0
        %v451 = vsel %vm407, %v405, 0
        %v454 = vsel %vm407, %v406, 0
        %456 = vmatpush.msra.mxu0 0.0
        %457 = vmatpush.msra.mxu0 0.0
        %458 = vmatpush.msra.mxu0 0.0
        %459 = vmatpush.msra.mxu0 0.0
        %460 = vmatpush.msra.mxu0 0.0
        %461 = vmatpush.msra.mxu0 0.0
        %462 = vmatpush.msra.mxu0 0.0
        %463 = vmatpush.msra.mxu0 0.0
        %464 = vmatpush.msra.mxu0 0.0
        %465 = vmatpush.msra.mxu0 0.0
        %466 = vmatpush.msra.mxu0 0.0
        %467 = vmatpush.msra.mxu0 0.0
        %468 = vmatpush.msra.mxu0 1.0
        %469 = vmatpush.msra.mxu0 1.0
        %470 = vmatpush.msra.mxu0 1.0
        %471 = vmatpush.msra.mxu0 1.0
        %v472 = vand.u32 %v409, 4294901760
        %v473 = vsub.f32 %v409, %v472
        %v474 = vand.u32 %v473, 4294901760
        %v475 = vsub.f32 %v473, %v474
        %v476 = vand.u32 %v475, 4294901760
        %477 = vmatmul.f32.gmra.mxu0 %v476
        %v478 = vpop.f32.mrf.mxu0
        %v479 = vadd.f32 0.0, %v478
        %v480 = vand.u32 %v412, 4294901760
        %v481 = vsub.f32 %v412, %v480
        %v482 = vand.u32 %v481, 4294901760
        %v483 = vsub.f32 %v481, %v482
        %v484 = vand.u32 %v483, 4294901760
        %485 = vmatmul.f32.gmra.mxu0 %v484
        %v486 = vpop.f32.mrf.mxu0
        %v487 = vadd.f32 0.0, %v486
        %v488 = vand.u32 %v415, 4294901760
        %v489 = vsub.f32 %v415, %v488
        %v490 = vand.u32 %v489, 4294901760
        %v491 = vsub.f32 %v489, %v490
        %v492 = vand.u32 %v491, 4294901760
        %493 = vmatmul.f32.gmra.mxu0 %v492
        %v494 = vpop.f32.mrf.mxu0
        %v495 = vadd.f32 0.0, %v494
        %v496 = vand.u32 %v418, 4294901760
        %v497 = vsub.f32 %v418, %v496
        %v498 = vand.u32 %v497, 4294901760
        %v499 = vsub.f32 %v497, %v498
        %v500 = vand.u32 %v499, 4294901760
        %501 = vmatmul.f32.gmra.mxu0 %v500
        %v502 = vpop.f32.mrf.mxu0
        %v503 = vadd.f32 0.0, %v502
        %v504 = vand.u32 %v421, 4294901760
        %v505 = vsub.f32 %v421, %v504
        %v506 = vand.u32 %v505, 4294901760
        %v507 = vsub.f32 %v505, %v506
        %v508 = vand.u32 %v507, 4294901760
        %509 = vmatmul.f32.gmra.mxu0 %v508
        %v510 = vpop.f32.mrf.mxu0
        %v511 = vadd.f32 0.0, %v510
        %v512 = vand.u32 %v424, 4294901760
        %v513 = vsub.f32 %v424, %v512
        %v514 = vand.u32 %v513, 4294901760
        %v515 = vsub.f32 %v513, %v514
        %v516 = vand.u32 %v515, 4294901760
        %517 = vmatmul.f32.gmra.mxu0 %v516
        %v518 = vpop.f32.mrf.mxu0
        %v519 = vadd.f32 0.0, %v518
        %v520 = vand.u32 %v427, 4294901760
        %v521 = vsub.f32 %v427, %v520
        %v522 = vand.u32 %v521, 4294901760
        %v523 = vsub.f32 %v521, %v522
        %v524 = vand.u32 %v523, 4294901760
        %525 = vmatmul.f32.gmra.mxu0 %v524
        %v526 = vpop.f32.mrf.mxu0
        %v527 = vadd.f32 0.0, %v526
        %v528 = vand.u32 %v430, 4294901760
        %v529 = vsub.f32 %v430, %v528
        %v530 = vand.u32 %v529, 4294901760
        %v531 = vsub.f32 %v529, %v530
        %v532 = vand.u32 %v531, 4294901760
        %533 = vmatmul.f32.gmra.mxu0 %v532
        %v534 = vpop.f32.mrf.mxu0
        %v535 = vadd.f32 0.0, %v534
        %v536 = vand.u32 %v433, 4294901760
        %v537 = vsub.f32 %v433, %v536
        %v538 = vand.u32 %v537, 4294901760
        %v539 = vsub.f32 %v537, %v538
        %v540 = vand.u32 %v539, 4294901760
        %541 = vmatmul.f32.gmra.mxu0 %v540
        %v542 = vpop.f32.mrf.mxu0
        %v543 = vadd.f32 0.0, %v542
        %v544 = vand.u32 %v436, 4294901760
        %v545 = vsub.f32 %v436, %v544
        %v546 = vand.u32 %v545, 4294901760
        %v547 = vsub.f32 %v545, %v546
        %v548 = vand.u32 %v547, 4294901760
        %549 = vmatmul.f32.gmra.mxu0 %v548
        %v550 = vpop.f32.mrf.mxu0
        %v551 = vadd.f32 0.0, %v550
        %v552 = vand.u32 %v439, 4294901760
        %v553 = vsub.f32 %v439, %v552
        %v554 = vand.u32 %v553, 4294901760
        %v555 = vsub.f32 %v553, %v554
        %v556 = vand.u32 %v555, 4294901760
        %557 = vmatmul.f32.gmra.mxu0 %v556
        %v558 = vpop.f32.mrf.mxu0
        %v559 = vadd.f32 0.0, %v558
        %v560 = vand.u32 %v442, 4294901760
        %v561 = vsub.f32 %v442, %v560
        %v562 = vand.u32 %v561, 4294901760
        %v563 = vsub.f32 %v561, %v562
        %v564 = vand.u32 %v563, 4294901760
        %565 = vmatmul.f32.gmra.mxu0 %v564
        %v566 = vpop.f32.mrf.mxu0
        %v567 = vadd.f32 0.0, %v566
        %v568 = vand.u32 %v445, 4294901760
        %v569 = vsub.f32 %v445, %v568
        %v570 = vand.u32 %v569, 4294901760
        %v571 = vsub.f32 %v569, %v570
        %v572 = vand.u32 %v571, 4294901760
        %573 = vmatmul.f32.gmra.mxu0 %v572
        %v574 = vpop.f32.mrf.mxu0
        %v575 = vadd.f32 0.0, %v574
        %v576 = vand.u32 %v448, 4294901760
        %v577 = vsub.f32 %v448, %v576
        %v578 = vand.u32 %v577, 4294901760
        %v579 = vsub.f32 %v577, %v578
        %v580 = vand.u32 %v579, 4294901760
        %581 = vmatmul.f32.gmra.mxu0 %v580
        %v582 = vpop.f32.mrf.mxu0
        %v583 = vadd.f32 0.0, %v582
        %v584 = vand.u32 %v451, 4294901760
        %v585 = vsub.f32 %v451, %v584
        %v586 = vand.u32 %v585, 4294901760
        %v587 = vsub.f32 %v585, %v586
        %v588 = vand.u32 %v587, 4294901760
        %589 = vmatmul.f32.gmra.mxu0 %v588
        %v590 = vpop.f32.mrf.mxu0
        %v591 = vadd.f32 0.0, %v590
        %v592 = vand.u32 %v454, 4294901760
        %v593 = vsub.f32 %v454, %v592
        %v594 = vand.u32 %v593, 4294901760
        %v595 = vsub.f32 %v593, %v594
        %v596 = vand.u32 %v595, 4294901760
        %597 = vmatmul.f32.gmra.mxu0 %v596
        %v598 = vpop.f32.mrf.mxu0
        %v599 = vadd.f32 0.0, %v598
        %600 = vdwg.mxu0
        %601 = vmatpush.msra.mxu0 0.0
        %602 = vmatpush.msra.mxu0 0.0
        %603 = vmatpush.msra.mxu0 0.0
        %604 = vmatpush.msra.mxu0 0.0
        %605 = vmatpush.msra.mxu0 0.0
        %606 = vmatpush.msra.mxu0 0.0
        %607 = vmatpush.msra.mxu0 0.0
        %608 = vmatpush.msra.mxu0 0.0
        %609 = vmatpush.msra.mxu0 0.0
        %610 = vmatpush.msra.mxu0 0.0
        %611 = vmatpush.msra.mxu0 0.0
        %612 = vmatpush.msra.mxu0 0.0
        %613 = vmatpush.msra.mxu0 0.0
        %614 = vmatpush.msra.mxu0 0.0
        %615 = vmatpush.msra.mxu0 0.0
        %616 = vmatpush.msra.mxu0 0.0
        %v617 = vand.u32 %v409, 4294901760
        %618 = vmatmul.f32.gmra.mxu0 %v617
        %v619 = vpop.f32.mrf.mxu0
        %v620 = vadd.f32 %v479, %v619
        %v621 = vand.u32 %v412, 4294901760
        %622 = vmatmul.f32.gmra.mxu0 %v621
        %v623 = vpop.f32.mrf.mxu0
        %v624 = vadd.f32 %v487, %v623
        %v625 = vand.u32 %v415, 4294901760
        %626 = vmatmul.f32.gmra.mxu0 %v625
        %v627 = vpop.f32.mrf.mxu0
        %v628 = vadd.f32 %v495, %v627
        %v629 = vand.u32 %v418, 4294901760
        %630 = vmatmul.f32.gmra.mxu0 %v629
        %v631 = vpop.f32.mrf.mxu0
        %v632 = vadd.f32 %v503, %v631
        %v633 = vand.u32 %v421, 4294901760
        %634 = vmatmul.f32.gmra.mxu0 %v633
        %v635 = vpop.f32.mrf.mxu0
        %v636 = vadd.f32 %v511, %v635
        %v637 = vand.u32 %v424, 4294901760
        %638 = vmatmul.f32.gmra.mxu0 %v637
        %v639 = vpop.f32.mrf.mxu0
        %v640 = vadd.f32 %v519, %v639
        %v641 = vand.u32 %v427, 4294901760
        %642 = vmatmul.f32.gmra.mxu0 %v641
        %v643 = vpop.f32.mrf.mxu0
        %v644 = vadd.f32 %v527, %v643
        %v645 = vand.u32 %v430, 4294901760
        %646 = vmatmul.f32.gmra.mxu0 %v645
        %v647 = vpop.f32.mrf.mxu0
        %v648 = vadd.f32 %v535, %v647
        %v649 = vand.u32 %v433, 4294901760
        %650 = vmatmul.f32.gmra.mxu0 %v649
        %v651 = vpop.f32.mrf.mxu0
        %v652 = vadd.f32 %v543, %v651
        %v653 = vand.u32 %v436, 4294901760
        %654 = vmatmul.f32.gmra.mxu0 %v653
        %v655 = vpop.f32.mrf.mxu0
        %v656 = vadd.f32 %v551, %v655
        %v657 = vand.u32 %v439, 4294901760
        %658 = vmatmul.f32.gmra.mxu0 %v657
        %v659 = vpop.f32.mrf.mxu0
        %v660 = vadd.f32 %v559, %v659
        %v661 = vand.u32 %v442, 4294901760
        %662 = vmatmul.f32.gmra.mxu0 %v661
        %v663 = vpop.f32.mrf.mxu0
        %v664 = vadd.f32 %v567, %v663
        %v665 = vand.u32 %v445, 4294901760
        %666 = vmatmul.f32.gmra.mxu0 %v665
        %v667 = vpop.f32.mrf.mxu0
        %v668 = vadd.f32 %v575, %v667
        %v669 = vand.u32 %v448, 4294901760
        %670 = vmatmul.f32.gmra.mxu0 %v669
        %v671 = vpop.f32.mrf.mxu0
        %v672 = vadd.f32 %v583, %v671
        %v673 = vand.u32 %v451, 4294901760
        %674 = vmatmul.f32.gmra.mxu0 %v673
        %v675 = vpop.f32.mrf.mxu0
        %v676 = vadd.f32 %v591, %v675
        %v677 = vand.u32 %v454, 4294901760
        %678 = vmatmul.f32.gmra.mxu0 %v677
        %v679 = vpop.f32.mrf.mxu0
        %v680 = vadd.f32 %v599, %v679
        %681 = vdwg.mxu0
        %682 = vmatpush.msra.mxu0 0.0
        %683 = vmatpush.msra.mxu0 0.0
        %684 = vmatpush.msra.mxu0 0.0
        %685 = vmatpush.msra.mxu0 0.0
        %686 = vmatpush.msra.mxu0 0.0
        %687 = vmatpush.msra.mxu0 0.0
        %688 = vmatpush.msra.mxu0 0.0
        %689 = vmatpush.msra.mxu0 0.0
        %690 = vmatpush.msra.mxu0 0.0
        %691 = vmatpush.msra.mxu0 0.0
        %692 = vmatpush.msra.mxu0 0.0
        %693 = vmatpush.msra.mxu0 0.0
        %694 = vmatpush.msra.mxu0 0.0
        %695 = vmatpush.msra.mxu0 0.0
        %696 = vmatpush.msra.mxu0 0.0
        %697 = vmatpush.msra.mxu0 0.0
        %v698 = vand.u32 %v409, 4294901760
        %v699 = vsub.f32 %v409, %v698
        %700 = vmatmul.f32.gmra.mxu0 %v699
        %v701 = vpop.f32.mrf.mxu0
        %v702 = vadd.f32 %v620, %v701
        %v703 = vand.u32 %v412, 4294901760
        %v704 = vsub.f32 %v412, %v703
        %705 = vmatmul.f32.gmra.mxu0 %v704
        %v706 = vpop.f32.mrf.mxu0
        %v707 = vadd.f32 %v624, %v706
        %v708 = vand.u32 %v415, 4294901760
        %v709 = vsub.f32 %v415, %v708
        %710 = vmatmul.f32.gmra.mxu0 %v709
        %v711 = vpop.f32.mrf.mxu0
        %v712 = vadd.f32 %v628, %v711
        %v713 = vand.u32 %v418, 4294901760
        %v714 = vsub.f32 %v418, %v713
        %715 = vmatmul.f32.gmra.mxu0 %v714
        %v716 = vpop.f32.mrf.mxu0
        %v717 = vadd.f32 %v632, %v716
        %v718 = vand.u32 %v421, 4294901760
        %v719 = vsub.f32 %v421, %v718
        %720 = vmatmul.f32.gmra.mxu0 %v719
        %v721 = vpop.f32.mrf.mxu0
        %v722 = vadd.f32 %v636, %v721
        %v723 = vand.u32 %v424, 4294901760
        %v724 = vsub.f32 %v424, %v723
        %725 = vmatmul.f32.gmra.mxu0 %v724
        %v726 = vpop.f32.mrf.mxu0
        %v727 = vadd.f32 %v640, %v726
        %v728 = vand.u32 %v427, 4294901760
        %v729 = vsub.f32 %v427, %v728
        %730 = vmatmul.f32.gmra.mxu0 %v729
        %v731 = vpop.f32.mrf.mxu0
        %v732 = vadd.f32 %v644, %v731
        %v733 = vand.u32 %v430, 4294901760
        %v734 = vsub.f32 %v430, %v733
        %735 = vmatmul.f32.gmra.mxu0 %v734
        %v736 = vpop.f32.mrf.mxu0
        %v737 = vadd.f32 %v648, %v736
        %v738 = vand.u32 %v433, 4294901760
        %v739 = vsub.f32 %v433, %v738
        %740 = vmatmul.f32.gmra.mxu0 %v739
        %v741 = vpop.f32.mrf.mxu0
        %v742 = vadd.f32 %v652, %v741
        %v743 = vand.u32 %v436, 4294901760
        %v744 = vsub.f32 %v436, %v743
        %745 = vmatmul.f32.gmra.mxu0 %v744
        %v746 = vpop.f32.mrf.mxu0
        %v747 = vadd.f32 %v656, %v746
        %v748 = vand.u32 %v439, 4294901760
        %v749 = vsub.f32 %v439, %v748
        %750 = vmatmul.f32.gmra.mxu0 %v749
        %v751 = vpop.f32.mrf.mxu0
        %v752 = vadd.f32 %v660, %v751
        %v753 = vand.u32 %v442, 4294901760
        %v754 = vsub.f32 %v442, %v753
        %755 = vmatmul.f32.gmra.mxu0 %v754
        %v756 = vpop.f32.mrf.mxu0
        %v757 = vadd.f32 %v664, %v756
        %v758 = vand.u32 %v445, 4294901760
        %v759 = vsub.f32 %v445, %v758
        %760 = vmatmul.f32.gmra.mxu0 %v759
        %v761 = vpop.f32.mrf.mxu0
        %v762 = vadd.f32 %v668, %v761
        %v763 = vand.u32 %v448, 4294901760
        %v764 = vsub.f32 %v448, %v763
        %765 = vmatmul.f32.gmra.mxu0 %v764
        %v766 = vpop.f32.mrf.mxu0
        %v767 = vadd.f32 %v672, %v766
        %v768 = vand.u32 %v451, 4294901760
        %v769 = vsub.f32 %v451, %v768
        %770 = vmatmul.f32.gmra.mxu0 %v769
        %v771 = vpop.f32.mrf.mxu0
        %v772 = vadd.f32 %v676, %v771
        %v773 = vand.u32 %v454, 4294901760
        %v774 = vsub.f32 %v454, %v773
        %775 = vmatmul.f32.gmra.mxu0 %v774
        %v776 = vpop.f32.mrf.mxu0
        %v777 = vadd.f32 %v680, %v776
        %778 = vdwg.mxu0
        %779 = vmatpush.msra.mxu0 0.0
        %780 = vmatpush.msra.mxu0 0.0
        %781 = vmatpush.msra.mxu0 0.0
        %782 = vmatpush.msra.mxu0 0.0
        %783 = vmatpush.msra.mxu0 0.0
        %784 = vmatpush.msra.mxu0 0.0
        %785 = vmatpush.msra.mxu0 0.0
        %786 = vmatpush.msra.mxu0 0.0
        %787 = vmatpush.msra.mxu0 0.0
        %788 = vmatpush.msra.mxu0 0.0
        %789 = vmatpush.msra.mxu0 0.0
        %790 = vmatpush.msra.mxu0 0.0
        %791 = vmatpush.msra.mxu0 1.0
        %792 = vmatpush.msra.mxu0 1.0
        %793 = vmatpush.msra.mxu0 1.0
        %794 = vmatpush.msra.mxu0 1.0
        %v795 = vand.u32 %v409, 4294901760
        %v796 = vsub.f32 %v409, %v795
        %v797 = vand.u32 %v796, 4294901760
        %798 = vmatmul.f32.gmra.mxu0 %v797
        %v799 = vpop.f32.mrf.mxu0
        %v800 = vadd.f32 %v702, %v799
        %v801 = vand.u32 %v412, 4294901760
        %v802 = vsub.f32 %v412, %v801
        %v803 = vand.u32 %v802, 4294901760
        %804 = vmatmul.f32.gmra.mxu0 %v803
        %v805 = vpop.f32.mrf.mxu0
        %v806 = vadd.f32 %v707, %v805
        %v807 = vand.u32 %v415, 4294901760
        %v808 = vsub.f32 %v415, %v807
        %v809 = vand.u32 %v808, 4294901760
        %810 = vmatmul.f32.gmra.mxu0 %v809
        %v811 = vpop.f32.mrf.mxu0
        %v812 = vadd.f32 %v712, %v811
        %v813 = vand.u32 %v418, 4294901760
        %v814 = vsub.f32 %v418, %v813
        %v815 = vand.u32 %v814, 4294901760
        %816 = vmatmul.f32.gmra.mxu0 %v815
        %v817 = vpop.f32.mrf.mxu0
        %v818 = vadd.f32 %v717, %v817
        %v819 = vand.u32 %v421, 4294901760
        %v820 = vsub.f32 %v421, %v819
        %v821 = vand.u32 %v820, 4294901760
        %822 = vmatmul.f32.gmra.mxu0 %v821
        %v823 = vpop.f32.mrf.mxu0
        %v824 = vadd.f32 %v722, %v823
        %v825 = vand.u32 %v424, 4294901760
        %v826 = vsub.f32 %v424, %v825
        %v827 = vand.u32 %v826, 4294901760
        %828 = vmatmul.f32.gmra.mxu0 %v827
        %v829 = vpop.f32.mrf.mxu0
        %v830 = vadd.f32 %v727, %v829
        %v831 = vand.u32 %v427, 4294901760
        %v832 = vsub.f32 %v427, %v831
        %v833 = vand.u32 %v832, 4294901760
        %834 = vmatmul.f32.gmra.mxu0 %v833
        %v835 = vpop.f32.mrf.mxu0
        %v836 = vadd.f32 %v732, %v835
        %v837 = vand.u32 %v430, 4294901760
        %v838 = vsub.f32 %v430, %v837
        %v839 = vand.u32 %v838, 4294901760
        %840 = vmatmul.f32.gmra.mxu0 %v839
        %v841 = vpop.f32.mrf.mxu0
        %v842 = vadd.f32 %v737, %v841
        %v843 = vand.u32 %v433, 4294901760
        %v844 = vsub.f32 %v433, %v843
        %v845 = vand.u32 %v844, 4294901760
        %846 = vmatmul.f32.gmra.mxu0 %v845
        %v847 = vpop.f32.mrf.mxu0
        %v848 = vadd.f32 %v742, %v847
        %v849 = vand.u32 %v436, 4294901760
        %v850 = vsub.f32 %v436, %v849
        %v851 = vand.u32 %v850, 4294901760
        %852 = vmatmul.f32.gmra.mxu0 %v851
        %v853 = vpop.f32.mrf.mxu0
        %v854 = vadd.f32 %v747, %v853
        %v855 = vand.u32 %v439, 4294901760
        %v856 = vsub.f32 %v439, %v855
        %v857 = vand.u32 %v856, 4294901760
        %858 = vmatmul.f32.gmra.mxu0 %v857
        %v859 = vpop.f32.mrf.mxu0
        %v860 = vadd.f32 %v752, %v859
        %v861 = vand.u32 %v442, 4294901760
        %v862 = vsub.f32 %v442, %v861
        %v863 = vand.u32 %v862, 4294901760
        %864 = vmatmul.f32.gmra.mxu0 %v863
        %v865 = vpop.f32.mrf.mxu0
        %v866 = vadd.f32 %v757, %v865
        %v867 = vand.u32 %v445, 4294901760
        %v868 = vsub.f32 %v445, %v867
        %v869 = vand.u32 %v868, 4294901760
        %870 = vmatmul.f32.gmra.mxu0 %v869
        %v871 = vpop.f32.mrf.mxu0
        %v872 = vadd.f32 %v762, %v871
        %v873 = vand.u32 %v448, 4294901760
        %v874 = vsub.f32 %v448, %v873
        %v875 = vand.u32 %v874, 4294901760
        %876 = vmatmul.f32.gmra.mxu0 %v875
        %v877 = vpop.f32.mrf.mxu0
        %v878 = vadd.f32 %v767, %v877
        %v879 = vand.u32 %v451, 4294901760
        %v880 = vsub.f32 %v451, %v879
        %v881 = vand.u32 %v880, 4294901760
        %882 = vmatmul.f32.gmra.mxu0 %v881
        %v883 = vpop.f32.mrf.mxu0
        %v884 = vadd.f32 %v772, %v883
        %v885 = vand.u32 %v454, 4294901760
        %v886 = vsub.f32 %v454, %v885
        %v887 = vand.u32 %v886, 4294901760
        %888 = vmatmul.f32.gmra.mxu0 %v887
        %v889 = vpop.f32.mrf.mxu0
        %v890 = vadd.f32 %v777, %v889
        %891 = vdwg.mxu0
        %892 = vmatpush.msra.mxu0 0.0
        %893 = vmatpush.msra.mxu0 0.0
        %894 = vmatpush.msra.mxu0 0.0
        %895 = vmatpush.msra.mxu0 0.0
        %896 = vmatpush.msra.mxu0 0.0
        %897 = vmatpush.msra.mxu0 0.0
        %898 = vmatpush.msra.mxu0 0.0
        %899 = vmatpush.msra.mxu0 0.0
        %900 = vmatpush.msra.mxu0 0.0
        %901 = vmatpush.msra.mxu0 0.0
        %902 = vmatpush.msra.mxu0 0.0
        %903 = vmatpush.msra.mxu0 0.0
        %904 = vmatpush.msra.mxu0 0.0
        %905 = vmatpush.msra.mxu0 0.0
        %906 = vmatpush.msra.mxu0 0.0
        %907 = vmatpush.msra.mxu0 0.0
        %v908 = vand.u32 %v409, 4294901760
        %909 = vmatmul.f32.gmra.mxu0 %v908
        %v910 = vpop.f32.mrf.mxu0
        %v911 = vadd.f32 %v800, %v910
        %v912 = vand.u32 %v412, 4294901760
        %913 = vmatmul.f32.gmra.mxu0 %v912
        %v914 = vpop.f32.mrf.mxu0
        %v915 = vadd.f32 %v806, %v914
        %v916 = vand.u32 %v415, 4294901760
        %917 = vmatmul.f32.gmra.mxu0 %v916
        %v918 = vpop.f32.mrf.mxu0
        %v919 = vadd.f32 %v812, %v918
        %v920 = vand.u32 %v418, 4294901760
        %921 = vmatmul.f32.gmra.mxu0 %v920
        %v922 = vpop.f32.mrf.mxu0
        %v923 = vadd.f32 %v818, %v922
        %v924 = vand.u32 %v421, 4294901760
        %925 = vmatmul.f32.gmra.mxu0 %v924
        %v926 = vpop.f32.mrf.mxu0
        %v927 = vadd.f32 %v824, %v926
        %v928 = vand.u32 %v424, 4294901760
        %929 = vmatmul.f32.gmra.mxu0 %v928
        %v930 = vpop.f32.mrf.mxu0
        %v931 = vadd.f32 %v830, %v930
        %v932 = vand.u32 %v427, 4294901760
        %933 = vmatmul.f32.gmra.mxu0 %v932
        %v934 = vpop.f32.mrf.mxu0
        %v935 = vadd.f32 %v836, %v934
        %v936 = vand.u32 %v430, 4294901760
        %937 = vmatmul.f32.gmra.mxu0 %v936
        %v938 = vpop.f32.mrf.mxu0
        %v939 = vadd.f32 %v842, %v938
        %v940 = vand.u32 %v433, 4294901760
        %941 = vmatmul.f32.gmra.mxu0 %v940
        %v942 = vpop.f32.mrf.mxu0
        %v943 = vadd.f32 %v848, %v942
        %v944 = vand.u32 %v436, 4294901760
        %945 = vmatmul.f32.gmra.mxu0 %v944
        %v946 = vpop.f32.mrf.mxu0
        %v947 = vadd.f32 %v854, %v946
        %v948 = vand.u32 %v439, 4294901760
        %949 = vmatmul.f32.gmra.mxu0 %v948
        %v950 = vpop.f32.mrf.mxu0
        %v951 = vadd.f32 %v860, %v950
        %v952 = vand.u32 %v442, 4294901760
        %953 = vmatmul.f32.gmra.mxu0 %v952
        %v954 = vpop.f32.mrf.mxu0
        %v955 = vadd.f32 %v866, %v954
        %v956 = vand.u32 %v445, 4294901760
        %957 = vmatmul.f32.gmra.mxu0 %v956
        %v958 = vpop.f32.mrf.mxu0
        %v959 = vadd.f32 %v872, %v958
        %v960 = vand.u32 %v448, 4294901760
        %961 = vmatmul.f32.gmra.mxu0 %v960
        %v962 = vpop.f32.mrf.mxu0
        %v963 = vadd.f32 %v878, %v962
        %v964 = vand.u32 %v451, 4294901760
        %965 = vmatmul.f32.gmra.mxu0 %v964
        %v966 = vpop.f32.mrf.mxu0
        %v967 = vadd.f32 %v884, %v966
        %v968 = vand.u32 %v454, 4294901760
        %969 = vmatmul.f32.gmra.mxu0 %v968
        %v970 = vpop.f32.mrf.mxu0
        %v971 = vadd.f32 %v890, %v970
        %972 = vdwg.mxu0
        %973 = vmatpush.msra.mxu0 0.0
        %974 = vmatpush.msra.mxu0 0.0
        %975 = vmatpush.msra.mxu0 0.0
        %976 = vmatpush.msra.mxu0 0.0
        %977 = vmatpush.msra.mxu0 0.0
        %978 = vmatpush.msra.mxu0 0.0
        %979 = vmatpush.msra.mxu0 0.0
        %980 = vmatpush.msra.mxu0 0.0
        %981 = vmatpush.msra.mxu0 0.0
        %982 = vmatpush.msra.mxu0 0.0
        %983 = vmatpush.msra.mxu0 0.0
        %984 = vmatpush.msra.mxu0 0.0
        %985 = vmatpush.msra.mxu0 1.0
        %986 = vmatpush.msra.mxu0 1.0
        %987 = vmatpush.msra.mxu0 1.0
        %988 = vmatpush.msra.mxu0 1.0
        %v989 = vand.u32 %v409, 4294901760
        %990 = vmatmul.f32.gmra.mxu0 %v989
        %v991 = vpop.f32.mrf.mxu0
        %v992 = vadd.f32 %v911, %v991
        %v993 = vand.u32 %v412, 4294901760
        %994 = vmatmul.f32.gmra.mxu0 %v993
        %v995 = vpop.f32.mrf.mxu0
        %v996 = vadd.f32 %v915, %v995
        %v997 = vand.u32 %v415, 4294901760
        %998 = vmatmul.f32.gmra.mxu0 %v997
        %v999 = vpop.f32.mrf.mxu0
        %v1000 = vadd.f32 %v919, %v999
        %v1001 = vand.u32 %v418, 4294901760
        %1002 = vmatmul.f32.gmra.mxu0 %v1001
        %v1003 = vpop.f32.mrf.mxu0
        %v1004 = vadd.f32 %v923, %v1003
        %v1005 = vand.u32 %v421, 4294901760
        %1006 = vmatmul.f32.gmra.mxu0 %v1005
        %v1007 = vpop.f32.mrf.mxu0
        %v1008 = vadd.f32 %v927, %v1007
        %v1009 = vand.u32 %v424, 4294901760
        %1010 = vmatmul.f32.gmra.mxu0 %v1009
        %v1011 = vpop.f32.mrf.mxu0
        %v1012 = vadd.f32 %v931, %v1011
        %v1013 = vand.u32 %v427, 4294901760
        %1014 = vmatmul.f32.gmra.mxu0 %v1013
        %v1015 = vpop.f32.mrf.mxu0
        %v1016 = vadd.f32 %v935, %v1015
        %v1017 = vand.u32 %v430, 4294901760
        %1018 = vmatmul.f32.gmra.mxu0 %v1017
        %v1019 = vpop.f32.mrf.mxu0
        %v1020 = vadd.f32 %v939, %v1019
        %v1021 = vand.u32 %v433, 4294901760
        %1022 = vmatmul.f32.gmra.mxu0 %v1021
        %v1023 = vpop.f32.mrf.mxu0
        %v1024 = vadd.f32 %v943, %v1023
        %v1025 = vand.u32 %v436, 4294901760
        %1026 = vmatmul.f32.gmra.mxu0 %v1025
        %v1027 = vpop.f32.mrf.mxu0
        %v1028 = vadd.f32 %v947, %v1027
        %v1029 = vand.u32 %v439, 4294901760
        %1030 = vmatmul.f32.gmra.mxu0 %v1029
        %v1031 = vpop.f32.mrf.mxu0
        %v1032 = vadd.f32 %v951, %v1031
        %v1033 = vand.u32 %v442, 4294901760
        %1034 = vmatmul.f32.gmra.mxu0 %v1033
        %v1035 = vpop.f32.mrf.mxu0
        %v1036 = vadd.f32 %v955, %v1035
        %v1037 = vand.u32 %v445, 4294901760
        %1038 = vmatmul.f32.gmra.mxu0 %v1037
        %v1039 = vpop.f32.mrf.mxu0
        %v1040 = vadd.f32 %v959, %v1039
        %v1041 = vand.u32 %v448, 4294901760
        %1042 = vmatmul.f32.gmra.mxu0 %v1041
        %v1043 = vpop.f32.mrf.mxu0
        %v1044 = vadd.f32 %v963, %v1043
        %v1045 = vand.u32 %v451, 4294901760
        %1046 = vmatmul.f32.gmra.mxu0 %v1045
        %v1047 = vpop.f32.mrf.mxu0
        %v1048 = vadd.f32 %v967, %v1047
        %v1049 = vand.u32 %v454, 4294901760
        %1050 = vmatmul.f32.gmra.mxu0 %v1049
        %v1051 = vpop.f32.mrf.mxu0
        %v1052 = vadd.f32 %v971, %v1051
        %1053 = vdwg.mxu0
        %v1054 = vrsqrt.pop %v992
        %v1055 = vmul.f32 %v1054, %v992
        %v1056 = vmul.f32 %v1055, %v1054
        %v1057 = vmul.f32 0.5, %v1056
        %v1058 = vsub.f32 1.5, %v1057
        %v1059 = vmul.f32 %v1054, %v1058
        %v1060 = vmul.f32 %v992, %v1059
        %vm1061 = vcmp.eq.f32.partialorder %v992, inf
        %v1062 = vsel %vm1061, %v992, %v1060
        %vm1063 = vcmp.eq.f32.partialorder %v992, 0.0
        %v1064 = vand.u32 %v992, 2147483648
        %v1065 = vsel %vm1063, %v1064, %v1062
        %v1066 = vrsqrt.pop %v996
        %v1067 = vmul.f32 %v1066, %v996
        %v1068 = vmul.f32 %v1067, %v1066
        %v1069 = vmul.f32 0.5, %v1068
        %v1070 = vsub.f32 1.5, %v1069
        %v1071 = vmul.f32 %v1066, %v1070
        %v1072 = vmul.f32 %v996, %v1071
        %vm1073 = vcmp.eq.f32.partialorder %v996, inf
        %v1074 = vsel %vm1073, %v996, %v1072
        %vm1075 = vcmp.eq.f32.partialorder %v996, 0.0
        %v1076 = vand.u32 %v996, 2147483648
        %v1077 = vsel %vm1075, %v1076, %v1074
        %v1078 = vrsqrt.pop %v1000
        %v1079 = vmul.f32 %v1078, %v1000
        %v1080 = vmul.f32 %v1079, %v1078
        %v1081 = vmul.f32 0.5, %v1080
        %v1082 = vsub.f32 1.5, %v1081
        %v1083 = vmul.f32 %v1078, %v1082
        %v1084 = vmul.f32 %v1000, %v1083
        %vm1085 = vcmp.eq.f32.partialorder %v1000, inf
        %v1086 = vsel %vm1085, %v1000, %v1084
        %vm1087 = vcmp.eq.f32.partialorder %v1000, 0.0
        %v1088 = vand.u32 %v1000, 2147483648
        %v1089 = vsel %vm1087, %v1088, %v1086
        %v1090 = vrsqrt.pop %v1004
        %v1091 = vmul.f32 %v1090, %v1004
        %v1092 = vmul.f32 %v1091, %v1090
        %v1093 = vmul.f32 0.5, %v1092
        %v1094 = vsub.f32 1.5, %v1093
        %v1095 = vmul.f32 %v1090, %v1094
        %v1096 = vmul.f32 %v1004, %v1095
        %vm1097 = vcmp.eq.f32.partialorder %v1004, inf
        %v1098 = vsel %vm1097, %v1004, %v1096
        %vm1099 = vcmp.eq.f32.partialorder %v1004, 0.0
        %v1100 = vand.u32 %v1004, 2147483648
        %v1101 = vsel %vm1099, %v1100, %v1098
        %v1102 = vrsqrt.pop %v1008
        %v1103 = vmul.f32 %v1102, %v1008
        %v1104 = vmul.f32 %v1103, %v1102
        %v1105 = vmul.f32 0.5, %v1104
        %v1106 = vsub.f32 1.5, %v1105
        %v1107 = vmul.f32 %v1102, %v1106
        %v1108 = vmul.f32 %v1008, %v1107
        %vm1109 = vcmp.eq.f32.partialorder %v1008, inf
        %v1110 = vsel %vm1109, %v1008, %v1108
        %vm1111 = vcmp.eq.f32.partialorder %v1008, 0.0
        %v1112 = vand.u32 %v1008, 2147483648
        %v1113 = vsel %vm1111, %v1112, %v1110
        %v1114 = vrsqrt.pop %v1012
        %v1115 = vmul.f32 %v1114, %v1012
        %v1116 = vmul.f32 %v1115, %v1114
        %v1117 = vmul.f32 0.5, %v1116
        %v1118 = vsub.f32 1.5, %v1117
        %v1119 = vmul.f32 %v1114, %v1118
        %v1120 = vmul.f32 %v1012, %v1119
        %vm1121 = vcmp.eq.f32.partialorder %v1012, inf
        %v1122 = vsel %vm1121, %v1012, %v1120
        %vm1123 = vcmp.eq.f32.partialorder %v1012, 0.0
        %v1124 = vand.u32 %v1012, 2147483648
        %v1125 = vsel %vm1123, %v1124, %v1122
        %v1126 = vrsqrt.pop %v1016
        %v1127 = vmul.f32 %v1126, %v1016
        %v1128 = vmul.f32 %v1127, %v1126
        %v1129 = vmul.f32 0.5, %v1128
        %v1130 = vsub.f32 1.5, %v1129
        %v1131 = vmul.f32 %v1126, %v1130
        %v1132 = vmul.f32 %v1016, %v1131
        %vm1133 = vcmp.eq.f32.partialorder %v1016, inf
        %v1134 = vsel %vm1133, %v1016, %v1132
        %vm1135 = vcmp.eq.f32.partialorder %v1016, 0.0
        %v1136 = vand.u32 %v1016, 2147483648
        %v1137 = vsel %vm1135, %v1136, %v1134
        %v1138 = vrsqrt.pop %v1020
        %v1139 = vmul.f32 %v1138, %v1020
        %v1140 = vmul.f32 %v1139, %v1138
        %v1141 = vmul.f32 0.5, %v1140
        %v1142 = vsub.f32 1.5, %v1141
        %v1143 = vmul.f32 %v1138, %v1142
        %v1144 = vmul.f32 %v1020, %v1143
        %vm1145 = vcmp.eq.f32.partialorder %v1020, inf
        %v1146 = vsel %vm1145, %v1020, %v1144
        %vm1147 = vcmp.eq.f32.partialorder %v1020, 0.0
        %v1148 = vand.u32 %v1020, 2147483648
        %v1149 = vsel %vm1147, %v1148, %v1146
        %v1150 = vrsqrt.pop %v1024
        %v1151 = vmul.f32 %v1150, %v1024
        %v1152 = vmul.f32 %v1151, %v1150
        %v1153 = vmul.f32 0.5, %v1152
        %v1154 = vsub.f32 1.5, %v1153
        %v1155 = vmul.f32 %v1150, %v1154
        %v1156 = vmul.f32 %v1024, %v1155
        %vm1157 = vcmp.eq.f32.partialorder %v1024, inf
        %v1158 = vsel %vm1157, %v1024, %v1156
        %vm1159 = vcmp.eq.f32.partialorder %v1024, 0.0
        %v1160 = vand.u32 %v1024, 2147483648
        %v1161 = vsel %vm1159, %v1160, %v1158
        %v1162 = vrsqrt.pop %v1028
        %v1163 = vmul.f32 %v1162, %v1028
        %v1164 = vmul.f32 %v1163, %v1162
        %v1165 = vmul.f32 0.5, %v1164
        %v1166 = vsub.f32 1.5, %v1165
        %v1167 = vmul.f32 %v1162, %v1166
        %v1168 = vmul.f32 %v1028, %v1167
        %vm1169 = vcmp.eq.f32.partialorder %v1028, inf
        %v1170 = vsel %vm1169, %v1028, %v1168
        %vm1171 = vcmp.eq.f32.partialorder %v1028, 0.0
        %v1172 = vand.u32 %v1028, 2147483648
        %v1173 = vsel %vm1171, %v1172, %v1170
        %v1174 = vrsqrt.pop %v1032
        %v1175 = vmul.f32 %v1174, %v1032
        %v1176 = vmul.f32 %v1175, %v1174
        %v1177 = vmul.f32 0.5, %v1176
        %v1178 = vsub.f32 1.5, %v1177
        %v1179 = vmul.f32 %v1174, %v1178
        %v1180 = vmul.f32 %v1032, %v1179
        %vm1181 = vcmp.eq.f32.partialorder %v1032, inf
        %v1182 = vsel %vm1181, %v1032, %v1180
        %vm1183 = vcmp.eq.f32.partialorder %v1032, 0.0
        %v1184 = vand.u32 %v1032, 2147483648
        %v1185 = vsel %vm1183, %v1184, %v1182
        %v1186 = vrsqrt.pop %v1036
        %v1187 = vmul.f32 %v1186, %v1036
        %v1188 = vmul.f32 %v1187, %v1186
        %v1189 = vmul.f32 0.5, %v1188
        %v1190 = vsub.f32 1.5, %v1189
        %v1191 = vmul.f32 %v1186, %v1190
        %v1192 = vmul.f32 %v1036, %v1191
        %vm1193 = vcmp.eq.f32.partialorder %v1036, inf
        %v1194 = vsel %vm1193, %v1036, %v1192
        %vm1195 = vcmp.eq.f32.partialorder %v1036, 0.0
        %v1196 = vand.u32 %v1036, 2147483648
        %v1197 = vsel %vm1195, %v1196, %v1194
        %v1198 = vrsqrt.pop %v1040
        %v1199 = vmul.f32 %v1198, %v1040
        %v1200 = vmul.f32 %v1199, %v1198
        %v1201 = vmul.f32 0.5, %v1200
        %v1202 = vsub.f32 1.5, %v1201
        %v1203 = vmul.f32 %v1198, %v1202
        %v1204 = vmul.f32 %v1040, %v1203
        %vm1205 = vcmp.eq.f32.partialorder %v1040, inf
        %v1206 = vsel %vm1205, %v1040, %v1204
        %vm1207 = vcmp.eq.f32.partialorder %v1040, 0.0
        %v1208 = vand.u32 %v1040, 2147483648
        %v1209 = vsel %vm1207, %v1208, %v1206
        %v1210 = vrsqrt.pop %v1044
        %v1211 = vmul.f32 %v1210, %v1044
        %v1212 = vmul.f32 %v1211, %v1210
        %v1213 = vmul.f32 0.5, %v1212
        %v1214 = vsub.f32 1.5, %v1213
        %v1215 = vmul.f32 %v1210, %v1214
        %v1216 = vmul.f32 %v1044, %v1215
        %vm1217 = vcmp.eq.f32.partialorder %v1044, inf
        %v1218 = vsel %vm1217, %v1044, %v1216
        %vm1219 = vcmp.eq.f32.partialorder %v1044, 0.0
        %v1220 = vand.u32 %v1044, 2147483648
        %v1221 = vsel %vm1219, %v1220, %v1218
        %v1222 = vrsqrt.pop %v1048
        %v1223 = vmul.f32 %v1222, %v1048
        %v1224 = vmul.f32 %v1223, %v1222
        %v1225 = vmul.f32 0.5, %v1224
        %v1226 = vsub.f32 1.5, %v1225
        %v1227 = vmul.f32 %v1222, %v1226
        %v1228 = vmul.f32 %v1048, %v1227
        %vm1229 = vcmp.eq.f32.partialorder %v1048, inf
        %v1230 = vsel %vm1229, %v1048, %v1228
        %vm1231 = vcmp.eq.f32.partialorder %v1048, 0.0
        %v1232 = vand.u32 %v1048, 2147483648
        %v1233 = vsel %vm1231, %v1232, %v1230
        %v1234 = vrsqrt.pop %v1052
        %v1235 = vmul.f32 %v1234, %v1052
        %v1236 = vmul.f32 %v1235, %v1234
        %v1237 = vmul.f32 0.5, %v1236
        %v1238 = vsub.f32 1.5, %v1237
        %v1239 = vmul.f32 %v1234, %v1238
        %v1240 = vmul.f32 %v1052, %v1239
        %vm1241 = vcmp.eq.f32.partialorder %v1052, inf
        %v1242 = vsel %vm1241, %v1052, %v1240
        %vm1243 = vcmp.eq.f32.partialorder %v1052, 0.0
        %v1244 = vand.u32 %v1052, 2147483648
        %v1245 = vsel %vm1243, %v1244, %v1242
        %v1246 = vadd.f32 %v1065, 1e-06
        %v1247 = vadd.f32 %v1077, 1e-06
        %v1248 = vadd.f32 %v1089, 1e-06
        %v1249 = vadd.f32 %v1101, 1e-06
        %v1250 = vadd.f32 %v1113, 1e-06
        %v1251 = vadd.f32 %v1125, 1e-06
        %v1252 = vadd.f32 %v1137, 1e-06
        %v1253 = vadd.f32 %v1149, 1e-06
        %v1254 = vadd.f32 %v1161, 1e-06
        %v1255 = vadd.f32 %v1173, 1e-06
        %v1256 = vadd.f32 %v1185, 1e-06
        %v1257 = vadd.f32 %v1197, 1e-06
        %v1258 = vadd.f32 %v1209, 1e-06
        %v1259 = vadd.f32 %v1221, 1e-06
        %v1260 = vadd.f32 %v1233, 1e-06
        %v1261 = vadd.f32 %v1245, 1e-06
        %v1262 = vrcp.pop %v1246
        %v1263 = vmul.f32 %v1246, %v1262
        %v1264 = vsub.f32 1.0, %v1263
        %v1265 = vmul.f32 %v1262, %v1264
        %v1266 = vadd.f32 %v1262, %v1265
        %vm1267 = vweird.f32 %v1246
        %vm1268 = vweird.f32 %v1262
        %vm1269 = vmor %vm1267, %vm1268
        %v1270 = vsel %vm1269, %v1262, %v1266
        %v1271 = vand.u32 2147483647, %v1246
        %vm1272 = vcmp.eq.f32.partialorder %v1271, 8.507059e+37
        %v1273 = vand.u32 %v1246, 2147483648
        %v1274 = vor.u32 1.1754944e-38, %v1273
        %v1275 = vsel %vm1272, %v1274, %v1270
        %v1276 = vmul.f32 1.0, %v1275
        %v1277 = vrcp.pop %v1247
        %v1278 = vmul.f32 %v1247, %v1277
        %v1279 = vsub.f32 1.0, %v1278
        %v1280 = vmul.f32 %v1277, %v1279
        %v1281 = vadd.f32 %v1277, %v1280
        %vm1282 = vweird.f32 %v1247
        %vm1283 = vweird.f32 %v1277
        %vm1284 = vmor %vm1282, %vm1283
        %v1285 = vsel %vm1284, %v1277, %v1281
        %v1286 = vand.u32 2147483647, %v1247
        %vm1287 = vcmp.eq.f32.partialorder %v1286, 8.507059e+37
        %v1288 = vand.u32 %v1247, 2147483648
        %v1289 = vor.u32 1.1754944e-38, %v1288
        %v1290 = vsel %vm1287, %v1289, %v1285
        %v1291 = vmul.f32 1.0, %v1290
        %v1292 = vrcp.pop %v1248
        %v1293 = vmul.f32 %v1248, %v1292
        %v1294 = vsub.f32 1.0, %v1293
        %v1295 = vmul.f32 %v1292, %v1294
        %v1296 = vadd.f32 %v1292, %v1295
        %vm1297 = vweird.f32 %v1248
        %vm1298 = vweird.f32 %v1292
        %vm1299 = vmor %vm1297, %vm1298
        %v1300 = vsel %vm1299, %v1292, %v1296
        %v1301 = vand.u32 2147483647, %v1248
        %vm1302 = vcmp.eq.f32.partialorder %v1301, 8.507059e+37
        %v1303 = vand.u32 %v1248, 2147483648
        %v1304 = vor.u32 1.1754944e-38, %v1303
        %v1305 = vsel %vm1302, %v1304, %v1300
        %v1306 = vmul.f32 1.0, %v1305
        %v1307 = vrcp.pop %v1249
        %v1308 = vmul.f32 %v1249, %v1307
        %v1309 = vsub.f32 1.0, %v1308
        %v1310 = vmul.f32 %v1307, %v1309
        %v1311 = vadd.f32 %v1307, %v1310
        %vm1312 = vweird.f32 %v1249
        %vm1313 = vweird.f32 %v1307
        %vm1314 = vmor %vm1312, %vm1313
        %v1315 = vsel %vm1314, %v1307, %v1311
        %v1316 = vand.u32 2147483647, %v1249
        %vm1317 = vcmp.eq.f32.partialorder %v1316, 8.507059e+37
        %v1318 = vand.u32 %v1249, 2147483648
        %v1319 = vor.u32 1.1754944e-38, %v1318
        %v1320 = vsel %vm1317, %v1319, %v1315
        %v1321 = vmul.f32 1.0, %v1320
        %v1322 = vrcp.pop %v1250
        %v1323 = vmul.f32 %v1250, %v1322
        %v1324 = vsub.f32 1.0, %v1323
        %v1325 = vmul.f32 %v1322, %v1324
        %v1326 = vadd.f32 %v1322, %v1325
        %vm1327 = vweird.f32 %v1250
        %vm1328 = vweird.f32 %v1322
        %vm1329 = vmor %vm1327, %vm1328
        %v1330 = vsel %vm1329, %v1322, %v1326
        %v1331 = vand.u32 2147483647, %v1250
        %vm1332 = vcmp.eq.f32.partialorder %v1331, 8.507059e+37
        %v1333 = vand.u32 %v1250, 2147483648
        %v1334 = vor.u32 1.1754944e-38, %v1333
        %v1335 = vsel %vm1332, %v1334, %v1330
        %v1336 = vmul.f32 1.0, %v1335
        %v1337 = vrcp.pop %v1251
        %v1338 = vmul.f32 %v1251, %v1337
        %v1339 = vsub.f32 1.0, %v1338
        %v1340 = vmul.f32 %v1337, %v1339
        %v1341 = vadd.f32 %v1337, %v1340
        %vm1342 = vweird.f32 %v1251
        %vm1343 = vweird.f32 %v1337
        %vm1344 = vmor %vm1342, %vm1343
        %v1345 = vsel %vm1344, %v1337, %v1341
        %v1346 = vand.u32 2147483647, %v1251
        %vm1347 = vcmp.eq.f32.partialorder %v1346, 8.507059e+37
        %v1348 = vand.u32 %v1251, 2147483648
        %v1349 = vor.u32 1.1754944e-38, %v1348
        %v1350 = vsel %vm1347, %v1349, %v1345
        %v1351 = vmul.f32 1.0, %v1350
        %v1352 = vrcp.pop %v1252
        %v1353 = vmul.f32 %v1252, %v1352
        %v1354 = vsub.f32 1.0, %v1353
        %v1355 = vmul.f32 %v1352, %v1354
        %v1356 = vadd.f32 %v1352, %v1355
        %vm1357 = vweird.f32 %v1252
        %vm1358 = vweird.f32 %v1352
        %vm1359 = vmor %vm1357, %vm1358
        %v1360 = vsel %vm1359, %v1352, %v1356
        %v1361 = vand.u32 2147483647, %v1252
        %vm1362 = vcmp.eq.f32.partialorder %v1361, 8.507059e+37
        %v1363 = vand.u32 %v1252, 2147483648
        %v1364 = vor.u32 1.1754944e-38, %v1363
        %v1365 = vsel %vm1362, %v1364, %v1360
        %v1366 = vmul.f32 1.0, %v1365
        %v1367 = vrcp.pop %v1253
        %v1368 = vmul.f32 %v1253, %v1367
        %v1369 = vsub.f32 1.0, %v1368
        %v1370 = vmul.f32 %v1367, %v1369
        %v1371 = vadd.f32 %v1367, %v1370
        %vm1372 = vweird.f32 %v1253
        %vm1373 = vweird.f32 %v1367
        %vm1374 = vmor %vm1372, %vm1373
        %v1375 = vsel %vm1374, %v1367, %v1371
        %v1376 = vand.u32 2147483647, %v1253
        %vm1377 = vcmp.eq.f32.partialorder %v1376, 8.507059e+37
        %v1378 = vand.u32 %v1253, 2147483648
        %v1379 = vor.u32 1.1754944e-38, %v1378
        %v1380 = vsel %vm1377, %v1379, %v1375
        %v1381 = vmul.f32 1.0, %v1380
        %v1382 = vrcp.pop %v1254
        %v1383 = vmul.f32 %v1254, %v1382
        %v1384 = vsub.f32 1.0, %v1383
        %v1385 = vmul.f32 %v1382, %v1384
        %v1386 = vadd.f32 %v1382, %v1385
        %vm1387 = vweird.f32 %v1254
        %vm1388 = vweird.f32 %v1382
        %vm1389 = vmor %vm1387, %vm1388
        %v1390 = vsel %vm1389, %v1382, %v1386
        %v1391 = vand.u32 2147483647, %v1254
        %vm1392 = vcmp.eq.f32.partialorder %v1391, 8.507059e+37
        %v1393 = vand.u32 %v1254, 2147483648
        %v1394 = vor.u32 1.1754944e-38, %v1393
        %v1395 = vsel %vm1392, %v1394, %v1390
        %v1396 = vmul.f32 1.0, %v1395
        %v1397 = vrcp.pop %v1255
        %v1398 = vmul.f32 %v1255, %v1397
        %v1399 = vsub.f32 1.0, %v1398
        %v1400 = vmul.f32 %v1397, %v1399
        %v1401 = vadd.f32 %v1397, %v1400
        %vm1402 = vweird.f32 %v1255
        %vm1403 = vweird.f32 %v1397
        %vm1404 = vmor %vm1402, %vm1403
        %v1405 = vsel %vm1404, %v1397, %v1401
        %v1406 = vand.u32 2147483647, %v1255
        %vm1407 = vcmp.eq.f32.partialorder %v1406, 8.507059e+37
        %v1408 = vand.u32 %v1255, 2147483648
        %v1409 = vor.u32 1.1754944e-38, %v1408
        %v1410 = vsel %vm1407, %v1409, %v1405
        %v1411 = vmul.f32 1.0, %v1410
        %v1412 = vrcp.pop %v1256
        %v1413 = vmul.f32 %v1256, %v1412
        %v1414 = vsub.f32 1.0, %v1413
        %v1415 = vmul.f32 %v1412, %v1414
        %v1416 = vadd.f32 %v1412, %v1415
        %vm1417 = vweird.f32 %v1256
        %vm1418 = vweird.f32 %v1412
        %vm1419 = vmor %vm1417, %vm1418
        %v1420 = vsel %vm1419, %v1412, %v1416
        %v1421 = vand.u32 2147483647, %v1256
        %vm1422 = vcmp.eq.f32.partialorder %v1421, 8.507059e+37
        %v1423 = vand.u32 %v1256, 2147483648
        %v1424 = vor.u32 1.1754944e-38, %v1423
        %v1425 = vsel %vm1422, %v1424, %v1420
        %v1426 = vmul.f32 1.0, %v1425
        %v1427 = vrcp.pop %v1257
        %v1428 = vmul.f32 %v1257, %v1427
        %v1429 = vsub.f32 1.0, %v1428
        %v1430 = vmul.f32 %v1427, %v1429
        %v1431 = vadd.f32 %v1427, %v1430
        %vm1432 = vweird.f32 %v1257
        %vm1433 = vweird.f32 %v1427
        %vm1434 = vmor %vm1432, %vm1433
        %v1435 = vsel %vm1434, %v1427, %v1431
        %v1436 = vand.u32 2147483647, %v1257
        %vm1437 = vcmp.eq.f32.partialorder %v1436, 8.507059e+37
        %v1438 = vand.u32 %v1257, 2147483648
        %v1439 = vor.u32 1.1754944e-38, %v1438
        %v1440 = vsel %vm1437, %v1439, %v1435
        %v1441 = vmul.f32 1.0, %v1440
        %v1442 = vrcp.pop %v1258
        %v1443 = vmul.f32 %v1258, %v1442
        %v1444 = vsub.f32 1.0, %v1443
        %v1445 = vmul.f32 %v1442, %v1444
        %v1446 = vadd.f32 %v1442, %v1445
        %vm1447 = vweird.f32 %v1258
        %vm1448 = vweird.f32 %v1442
        %vm1449 = vmor %vm1447, %vm1448
        %v1450 = vsel %vm1449, %v1442, %v1446
        %v1451 = vand.u32 2147483647, %v1258
        %vm1452 = vcmp.eq.f32.partialorder %v1451, 8.507059e+37
        %v1453 = vand.u32 %v1258, 2147483648
        %v1454 = vor.u32 1.1754944e-38, %v1453
        %v1455 = vsel %vm1452, %v1454, %v1450
        %v1456 = vmul.f32 1.0, %v1455
        %v1457 = vrcp.pop %v1259
        %v1458 = vmul.f32 %v1259, %v1457
        %v1459 = vsub.f32 1.0, %v1458
        %v1460 = vmul.f32 %v1457, %v1459
        %v1461 = vadd.f32 %v1457, %v1460
        %vm1462 = vweird.f32 %v1259
        %vm1463 = vweird.f32 %v1457
        %vm1464 = vmor %vm1462, %vm1463
        %v1465 = vsel %vm1464, %v1457, %v1461
        %v1466 = vand.u32 2147483647, %v1259
        %vm1467 = vcmp.eq.f32.partialorder %v1466, 8.507059e+37
        %v1468 = vand.u32 %v1259, 2147483648
        %v1469 = vor.u32 1.1754944e-38, %v1468
        %v1470 = vsel %vm1467, %v1469, %v1465
        %v1471 = vmul.f32 1.0, %v1470
        %v1472 = vrcp.pop %v1260
        %v1473 = vmul.f32 %v1260, %v1472
        %v1474 = vsub.f32 1.0, %v1473
        %v1475 = vmul.f32 %v1472, %v1474
        %v1476 = vadd.f32 %v1472, %v1475
        %vm1477 = vweird.f32 %v1260
        %vm1478 = vweird.f32 %v1472
        %vm1479 = vmor %vm1477, %vm1478
        %v1480 = vsel %vm1479, %v1472, %v1476
        %v1481 = vand.u32 2147483647, %v1260
        %vm1482 = vcmp.eq.f32.partialorder %v1481, 8.507059e+37
        %v1483 = vand.u32 %v1260, 2147483648
        %v1484 = vor.u32 1.1754944e-38, %v1483
        %v1485 = vsel %vm1482, %v1484, %v1480
        %v1486 = vmul.f32 1.0, %v1485
        %v1487 = vrcp.pop %v1261
        %v1488 = vmul.f32 %v1261, %v1487
        %v1489 = vsub.f32 1.0, %v1488
        %v1490 = vmul.f32 %v1487, %v1489
        %v1491 = vadd.f32 %v1487, %v1490
        %vm1492 = vweird.f32 %v1261
        %vm1493 = vweird.f32 %v1487
        %vm1494 = vmor %vm1492, %vm1493
        %v1495 = vsel %vm1494, %v1487, %v1491
        %v1496 = vand.u32 2147483647, %v1261
        %vm1497 = vcmp.eq.f32.partialorder %v1496, 8.507059e+37
        %v1498 = vand.u32 %v1261, 2147483648
        %v1499 = vor.u32 1.1754944e-38, %v1498
        %v1500 = vsel %vm1497, %v1499, %v1495
        %v1501 = vmul.f32 1.0, %v1500
        %v1502 = vmul.f32 %v1276, %v1276
        %v1503 = vmul.f32 %v1291, %v1291
        %v1504 = vmul.f32 %v1306, %v1306
        %v1505 = vmul.f32 %v1321, %v1321
        %v1506 = vmul.f32 %v1336, %v1336
        %v1507 = vmul.f32 %v1351, %v1351
        %v1508 = vmul.f32 %v1366, %v1366
        %v1509 = vmul.f32 %v1381, %v1381
        %v1510 = vmul.f32 %v1396, %v1396
        %v1511 = vmul.f32 %v1411, %v1411
        %v1512 = vmul.f32 %v1426, %v1426
        %v1513 = vmul.f32 %v1441, %v1441
        %v1514 = vmul.f32 %v1456, %v1456
        %v1515 = vmul.f32 %v1471, %v1471
        %v1516 = vmul.f32 %v1486, %v1486
        %v1517 = vmul.f32 %v1501, %v1501
        %v1518 = vmul.f32 %v992, %v1502
        %v1519 = vmul.f32 %v996, %v1503
        %v1520 = vmul.f32 %v1000, %v1504
        %v1521 = vmul.f32 %v1004, %v1505
        %v1522 = vmul.f32 %v1008, %v1506
        %v1523 = vmul.f32 %v1012, %v1507
        %v1524 = vmul.f32 %v1016, %v1508
        %v1525 = vmul.f32 %v1020, %v1509
        %v1526 = vmul.f32 %v1024, %v1510
        %v1527 = vmul.f32 %v1028, %v1511
        %v1528 = vmul.f32 %v1032, %v1512
        %v1529 = vmul.f32 %v1036, %v1513
        %v1530 = vmul.f32 %v1040, %v1514
        %v1531 = vmul.f32 %v1044, %v1515
        %v1532 = vmul.f32 %v1048, %v1516
        %v1533 = vmul.f32 %v1052, %v1517
        %1535 = vset.pattern.permute.xlu0 0
        %1536 = vperm.xlu0 %1535, %v320
        %v1537 = vpop.permute.xlu0 %1536
        %1540 = vset.pattern.permute.xlu0 0
        %1541 = vperm.xlu0 %1540, %v321
        %v1542 = vpop.permute.xlu0 %1541
        %1545 = vset.pattern.permute.xlu0 0
        %1546 = vperm.xlu0 %1545, %v322
        %v1547 = vpop.permute.xlu0 %1546
        %1550 = vset.pattern.permute.xlu0 0
        %1551 = vperm.xlu0 %1550, %v323
        %v1552 = vpop.permute.xlu0 %1551
        %v1554 = vmul.f32 %v1537, %v316
        %v1555 = vmul.f32 %v1542, %v317
        %v1556 = vmul.f32 %v1547, %v318
        %v1557 = vmul.f32 %v1552, %v319
        %1558 = vset.pattern.permute.xlu0 1
        %1559 = vperm.xlu0 %1558, %v320
        %v1560 = vpop.permute.xlu0 %1559
        %1562 = vset.pattern.permute.xlu0 1
        %1563 = vperm.xlu0 %1562, %v321
        %v1564 = vpop.permute.xlu0 %1563
        %1566 = vset.pattern.permute.xlu0 1
        %1567 = vperm.xlu0 %1566, %v322
        %v1568 = vpop.permute.xlu0 %1567
        %1570 = vset.pattern.permute.xlu0 1
        %1571 = vperm.xlu0 %1570, %v323
        %v1572 = vpop.permute.xlu0 %1571
        %v1574 = vmul.f32 %v1560, %v316
        %v1575 = vmul.f32 %v1564, %v317
        %v1576 = vmul.f32 %v1568, %v318
        %v1577 = vmul.f32 %v1572, %v319
        %1578 = vxpose.xlu0.b32.start [1/16] %v312, 128
        %1579 = vxpose.xlu0.b32.cont [2/16] %v313, 128
        %1580 = vxpose.xlu0.b32.cont [3/16] %v314, 128
        %1581 = vxpose.xlu0.b32.cont [4/16] %v315, 128
        %1582 = vxpose.xlu0.b32.cont [5/16] 0.0, 128
        %1583 = vxpose.xlu0.b32.cont [6/16] 0.0, 128
        %1584 = vxpose.xlu0.b32.cont [7/16] 0.0, 128
        %1585 = vxpose.xlu0.b32.cont [8/16] 0.0, 128
        %1586 = vxpose.xlu0.b32.cont [9/16] 0.0, 128
        %1587 = vxpose.xlu0.b32.cont [10/16] 0.0, 128
        %1588 = vxpose.xlu0.b32.cont [11/16] 0.0, 128
        %1589 = vxpose.xlu0.b32.cont [12/16] 0.0, 128
        %1590 = vxpose.xlu0.b32.cont [13/16] 0.0, 128
        %1591 = vxpose.xlu0.b32.cont [14/16] 0.0, 128
        %1592 = vxpose.xlu0.b32.cont [15/16] 0.0, 128
        %1593 = vxpose.xlu0.b32.end [16/16] 0.0, 128
        %v1594 = vpop.trf.xlu0
        %v1595 = vpop.trf.xlu0
        %v1596 = vpop.trf.xlu0
        %v1597 = vpop.trf.xlu0
        %v1598 = vpop.trf.xlu0
        %v1599 = vpop.trf.xlu0
        %v1600 = vpop.trf.xlu0
        %v1601 = vpop.trf.xlu0
        %v1602 = vpop.trf.xlu0
        %v1603 = vpop.trf.xlu0
        %v1604 = vpop.trf.xlu0
        %v1605 = vpop.trf.xlu0
        %v1606 = vpop.trf.xlu0
        %v1607 = vpop.trf.xlu0
        %v1608 = vpop.trf.xlu0
        %v1609 = vpop.trf.xlu0
        %v1611 = vsel %vm407, %v1594, 0
        %v1614 = vsel %vm407, %v1595, 0
        %v1617 = vsel %vm407, %v1596, 0
        %v1620 = vsel %vm407, %v1597, 0
        %v1623 = vsel %vm407, %v1598, 0
        %v1626 = vsel %vm407, %v1599, 0
        %v1629 = vsel %vm407, %v1600, 0
        %v1632 = vsel %vm407, %v1601, 0
        %v1635 = vsel %vm407, %v1602, 0
        %v1638 = vsel %vm407, %v1603, 0
        %v1641 = vsel %vm407, %v1604, 0
        %v1644 = vsel %vm407, %v1605, 0
        %v1647 = vsel %vm407, %v1606, 0
        %v1650 = vsel %vm407, %v1607, 0
        %v1653 = vsel %vm407, %v1608, 0
        %v1656 = vsel %vm407, %v1609, 0
        %1658 = vmatpush.msra.mxu0 0.0
        %1659 = vmatpush.msra.mxu0 0.0
        %1660 = vmatpush.msra.mxu0 0.0
        %1661 = vmatpush.msra.mxu0 0.0
        %1662 = vmatpush.msra.mxu0 0.0
        %1663 = vmatpush.msra.mxu0 0.0
        %1664 = vmatpush.msra.mxu0 0.0
        %1665 = vmatpush.msra.mxu0 0.0
        %1666 = vmatpush.msra.mxu0 0.0
        %1667 = vmatpush.msra.mxu0 0.0
        %1668 = vmatpush.msra.mxu0 0.0
        %1669 = vmatpush.msra.mxu0 0.0
        %v1670 = vand.u32 %v1557, 4294901760
        %1671 = vmatpush.msra.mxu0 %v1670
        %v1672 = vand.u32 %v1556, 4294901760
        %1673 = vmatpush.msra.mxu0 %v1672
        %v1674 = vand.u32 %v1555, 4294901760
        %1675 = vmatpush.msra.mxu0 %v1674
        %v1676 = vand.u32 %v1554, 4294901760
        %1677 = vmatpush.msra.mxu0 %v1676
        %v1678 = vand.u32 %v1611, 4294901760
        %v1679 = vsub.f32 %v1611, %v1678
        %v1680 = vand.u32 %v1679, 4294901760
        %v1681 = vsub.f32 %v1679, %v1680
        %v1682 = vand.u32 %v1681, 4294901760
        %1683 = vmatmul.f32.gmra.mxu0 %v1682
        %v1684 = vpop.f32.mrf.mxu0
        %v1685 = vadd.f32 0.0, %v1684
        %v1686 = vand.u32 %v1614, 4294901760
        %v1687 = vsub.f32 %v1614, %v1686
        %v1688 = vand.u32 %v1687, 4294901760
        %v1689 = vsub.f32 %v1687, %v1688
        %v1690 = vand.u32 %v1689, 4294901760
        %1691 = vmatmul.f32.gmra.mxu0 %v1690
        %v1692 = vpop.f32.mrf.mxu0
        %v1693 = vadd.f32 0.0, %v1692
        %v1694 = vand.u32 %v1617, 4294901760
        %v1695 = vsub.f32 %v1617, %v1694
        %v1696 = vand.u32 %v1695, 4294901760
        %v1697 = vsub.f32 %v1695, %v1696
        %v1698 = vand.u32 %v1697, 4294901760
        %1699 = vmatmul.f32.gmra.mxu0 %v1698
        %v1700 = vpop.f32.mrf.mxu0
        %v1701 = vadd.f32 0.0, %v1700
        %v1702 = vand.u32 %v1620, 4294901760
        %v1703 = vsub.f32 %v1620, %v1702
        %v1704 = vand.u32 %v1703, 4294901760
        %v1705 = vsub.f32 %v1703, %v1704
        %v1706 = vand.u32 %v1705, 4294901760
        %1707 = vmatmul.f32.gmra.mxu0 %v1706
        %v1708 = vpop.f32.mrf.mxu0
        %v1709 = vadd.f32 0.0, %v1708
        %v1710 = vand.u32 %v1623, 4294901760
        %v1711 = vsub.f32 %v1623, %v1710
        %v1712 = vand.u32 %v1711, 4294901760
        %v1713 = vsub.f32 %v1711, %v1712
        %v1714 = vand.u32 %v1713, 4294901760
        %1715 = vmatmul.f32.gmra.mxu0 %v1714
        %v1716 = vpop.f32.mrf.mxu0
        %v1717 = vadd.f32 0.0, %v1716
        %v1718 = vand.u32 %v1626, 4294901760
        %v1719 = vsub.f32 %v1626, %v1718
        %v1720 = vand.u32 %v1719, 4294901760
        %v1721 = vsub.f32 %v1719, %v1720
        %v1722 = vand.u32 %v1721, 4294901760
        %1723 = vmatmul.f32.gmra.mxu0 %v1722
        %v1724 = vpop.f32.mrf.mxu0
        %v1725 = vadd.f32 0.0, %v1724
        %v1726 = vand.u32 %v1629, 4294901760
        %v1727 = vsub.f32 %v1629, %v1726
        %v1728 = vand.u32 %v1727, 4294901760
        %v1729 = vsub.f32 %v1727, %v1728
        %v1730 = vand.u32 %v1729, 4294901760
        %1731 = vmatmul.f32.gmra.mxu0 %v1730
        %v1732 = vpop.f32.mrf.mxu0
        %v1733 = vadd.f32 0.0, %v1732
        %v1734 = vand.u32 %v1632, 4294901760
        %v1735 = vsub.f32 %v1632, %v1734
        %v1736 = vand.u32 %v1735, 4294901760
        %v1737 = vsub.f32 %v1735, %v1736
        %v1738 = vand.u32 %v1737, 4294901760
        %1739 = vmatmul.f32.gmra.mxu0 %v1738
        %v1740 = vpop.f32.mrf.mxu0
        %v1741 = vadd.f32 0.0, %v1740
        %v1742 = vand.u32 %v1635, 4294901760
        %v1743 = vsub.f32 %v1635, %v1742
        %v1744 = vand.u32 %v1743, 4294901760
        %v1745 = vsub.f32 %v1743, %v1744
        %v1746 = vand.u32 %v1745, 4294901760
        %1747 = vmatmul.f32.gmra.mxu0 %v1746
        %v1748 = vpop.f32.mrf.mxu0
        %v1749 = vadd.f32 0.0, %v1748
        %v1750 = vand.u32 %v1638, 4294901760
        %v1751 = vsub.f32 %v1638, %v1750
        %v1752 = vand.u32 %v1751, 4294901760
        %v1753 = vsub.f32 %v1751, %v1752
        %v1754 = vand.u32 %v1753, 4294901760
        %1755 = vmatmul.f32.gmra.mxu0 %v1754
        %v1756 = vpop.f32.mrf.mxu0
        %v1757 = vadd.f32 0.0, %v1756
        %v1758 = vand.u32 %v1641, 4294901760
        %v1759 = vsub.f32 %v1641, %v1758
        %v1760 = vand.u32 %v1759, 4294901760
        %v1761 = vsub.f32 %v1759, %v1760
        %v1762 = vand.u32 %v1761, 4294901760
        %1763 = vmatmul.f32.gmra.mxu0 %v1762
        %v1764 = vpop.f32.mrf.mxu0
        %v1765 = vadd.f32 0.0, %v1764
        %v1766 = vand.u32 %v1644, 4294901760
        %v1767 = vsub.f32 %v1644, %v1766
        %v1768 = vand.u32 %v1767, 4294901760
        %v1769 = vsub.f32 %v1767, %v1768
        %v1770 = vand.u32 %v1769, 4294901760
        %1771 = vmatmul.f32.gmra.mxu0 %v1770
        %v1772 = vpop.f32.mrf.mxu0
        %v1773 = vadd.f32 0.0, %v1772
        %v1774 = vand.u32 %v1647, 4294901760
        %v1775 = vsub.f32 %v1647, %v1774
        %v1776 = vand.u32 %v1775, 4294901760
        %v1777 = vsub.f32 %v1775, %v1776
        %v1778 = vand.u32 %v1777, 4294901760
        %1779 = vmatmul.f32.gmra.mxu0 %v1778
        %v1780 = vpop.f32.mrf.mxu0
        %v1781 = vadd.f32 0.0, %v1780
        %v1782 = vand.u32 %v1650, 4294901760
        %v1783 = vsub.f32 %v1650, %v1782
        %v1784 = vand.u32 %v1783, 4294901760
        %v1785 = vsub.f32 %v1783, %v1784
        %v1786 = vand.u32 %v1785, 4294901760
        %1787 = vmatmul.f32.gmra.mxu0 %v1786
        %v1788 = vpop.f32.mrf.mxu0
        %v1789 = vadd.f32 0.0, %v1788
        %v1790 = vand.u32 %v1653, 4294901760
        %v1791 = vsub.f32 %v1653, %v1790
        %v1792 = vand.u32 %v1791, 4294901760
        %v1793 = vsub.f32 %v1791, %v1792
        %v1794 = vand.u32 %v1793, 4294901760
        %1795 = vmatmul.f32.gmra.mxu0 %v1794
        %v1796 = vpop.f32.mrf.mxu0
        %v1797 = vadd.f32 0.0, %v1796
        %v1798 = vand.u32 %v1656, 4294901760
        %v1799 = vsub.f32 %v1656, %v1798
        %v1800 = vand.u32 %v1799, 4294901760
        %v1801 = vsub.f32 %v1799, %v1800
        %v1802 = vand.u32 %v1801, 4294901760
        %1803 = vmatmul.f32.gmra.mxu0 %v1802
        %v1804 = vpop.f32.mrf.mxu0
        %v1805 = vadd.f32 0.0, %v1804
        %1806 = vdwg.mxu0
        %1807 = vmatpush.msra.mxu0 0.0
        %1808 = vmatpush.msra.mxu0 0.0
        %1809 = vmatpush.msra.mxu0 0.0
        %1810 = vmatpush.msra.mxu0 0.0
        %1811 = vmatpush.msra.mxu0 0.0
        %1812 = vmatpush.msra.mxu0 0.0
        %1813 = vmatpush.msra.mxu0 0.0
        %1814 = vmatpush.msra.mxu0 0.0
        %1815 = vmatpush.msra.mxu0 0.0
        %1816 = vmatpush.msra.mxu0 0.0
        %1817 = vmatpush.msra.mxu0 0.0
        %1818 = vmatpush.msra.mxu0 0.0
        %v1819 = vand.u32 %v1557, 4294901760
        %v1820 = vsub.f32 %v1557, %v1819
        %v1821 = vand.u32 %v1820, 4294901760
        %v1822 = vsub.f32 %v1820, %v1821
        %v1823 = vand.u32 %v1822, 4294901760
        %1824 = vmatpush.msra.mxu0 %v1823
        %v1825 = vand.u32 %v1556, 4294901760
        %v1826 = vsub.f32 %v1556, %v1825
        %v1827 = vand.u32 %v1826, 4294901760
        %v1828 = vsub.f32 %v1826, %v1827
        %v1829 = vand.u32 %v1828, 4294901760
        %1830 = vmatpush.msra.mxu0 %v1829
        %v1831 = vand.u32 %v1555, 4294901760
        %v1832 = vsub.f32 %v1555, %v1831
        %v1833 = vand.u32 %v1832, 4294901760
        %v1834 = vsub.f32 %v1832, %v1833
        %v1835 = vand.u32 %v1834, 4294901760
        %1836 = vmatpush.msra.mxu0 %v1835
        %v1837 = vand.u32 %v1554, 4294901760
        %v1838 = vsub.f32 %v1554, %v1837
        %v1839 = vand.u32 %v1838, 4294901760
        %v1840 = vsub.f32 %v1838, %v1839
        %v1841 = vand.u32 %v1840, 4294901760
        %1842 = vmatpush.msra.mxu0 %v1841
        %v1843 = vand.u32 %v1611, 4294901760
        %1844 = vmatmul.f32.gmra.mxu0 %v1843
        %v1845 = vpop.f32.mrf.mxu0
        %v1846 = vadd.f32 %v1685, %v1845
        %v1847 = vand.u32 %v1614, 4294901760
        %1848 = vmatmul.f32.gmra.mxu0 %v1847
        %v1849 = vpop.f32.mrf.mxu0
        %v1850 = vadd.f32 %v1693, %v1849
        %v1851 = vand.u32 %v1617, 4294901760
        %1852 = vmatmul.f32.gmra.mxu0 %v1851
        %v1853 = vpop.f32.mrf.mxu0
        %v1854 = vadd.f32 %v1701, %v1853
        %v1855 = vand.u32 %v1620, 4294901760
        %1856 = vmatmul.f32.gmra.mxu0 %v1855
        %v1857 = vpop.f32.mrf.mxu0
        %v1858 = vadd.f32 %v1709, %v1857
        %v1859 = vand.u32 %v1623, 4294901760
        %1860 = vmatmul.f32.gmra.mxu0 %v1859
        %v1861 = vpop.f32.mrf.mxu0
        %v1862 = vadd.f32 %v1717, %v1861
        %v1863 = vand.u32 %v1626, 4294901760
        %1864 = vmatmul.f32.gmra.mxu0 %v1863
        %v1865 = vpop.f32.mrf.mxu0
        %v1866 = vadd.f32 %v1725, %v1865
        %v1867 = vand.u32 %v1629, 4294901760
        %1868 = vmatmul.f32.gmra.mxu0 %v1867
        %v1869 = vpop.f32.mrf.mxu0
        %v1870 = vadd.f32 %v1733, %v1869
        %v1871 = vand.u32 %v1632, 4294901760
        %1872 = vmatmul.f32.gmra.mxu0 %v1871
        %v1873 = vpop.f32.mrf.mxu0
        %v1874 = vadd.f32 %v1741, %v1873
        %v1875 = vand.u32 %v1635, 4294901760
        %1876 = vmatmul.f32.gmra.mxu0 %v1875
        %v1877 = vpop.f32.mrf.mxu0
        %v1878 = vadd.f32 %v1749, %v1877
        %v1879 = vand.u32 %v1638, 4294901760
        %1880 = vmatmul.f32.gmra.mxu0 %v1879
        %v1881 = vpop.f32.mrf.mxu0
        %v1882 = vadd.f32 %v1757, %v1881
        %v1883 = vand.u32 %v1641, 4294901760
        %1884 = vmatmul.f32.gmra.mxu0 %v1883
        %v1885 = vpop.f32.mrf.mxu0
        %v1886 = vadd.f32 %v1765, %v1885
        %v1887 = vand.u32 %v1644, 4294901760
        %1888 = vmatmul.f32.gmra.mxu0 %v1887
        %v1889 = vpop.f32.mrf.mxu0
        %v1890 = vadd.f32 %v1773, %v1889
        %v1891 = vand.u32 %v1647, 4294901760
        %1892 = vmatmul.f32.gmra.mxu0 %v1891
        %v1893 = vpop.f32.mrf.mxu0
        %v1894 = vadd.f32 %v1781, %v1893
        %v1895 = vand.u32 %v1650, 4294901760
        %1896 = vmatmul.f32.gmra.mxu0 %v1895
        %v1897 = vpop.f32.mrf.mxu0
        %v1898 = vadd.f32 %v1789, %v1897
        %v1899 = vand.u32 %v1653, 4294901760
        %1900 = vmatmul.f32.gmra.mxu0 %v1899
        %v1901 = vpop.f32.mrf.mxu0
        %v1902 = vadd.f32 %v1797, %v1901
        %v1903 = vand.u32 %v1656, 4294901760
        %1904 = vmatmul.f32.gmra.mxu0 %v1903
        %v1905 = vpop.f32.mrf.mxu0
        %v1906 = vadd.f32 %v1805, %v1905
        %1907 = vdwg.mxu0
        %1908 = vmatpush.msra.mxu0 0.0
        %1909 = vmatpush.msra.mxu0 0.0
        %1910 = vmatpush.msra.mxu0 0.0
        %1911 = vmatpush.msra.mxu0 0.0
        %1912 = vmatpush.msra.mxu0 0.0
        %1913 = vmatpush.msra.mxu0 0.0
        %1914 = vmatpush.msra.mxu0 0.0
        %1915 = vmatpush.msra.mxu0 0.0
        %1916 = vmatpush.msra.mxu0 0.0
        %1917 = vmatpush.msra.mxu0 0.0
        %1918 = vmatpush.msra.mxu0 0.0
        %1919 = vmatpush.msra.mxu0 0.0
        %v1920 = vand.u32 %v1557, 4294901760
        %v1921 = vsub.f32 %v1557, %v1920
        %1922 = vmatpush.msra.mxu0 %v1921
        %v1923 = vand.u32 %v1556, 4294901760
        %v1924 = vsub.f32 %v1556, %v1923
        %1925 = vmatpush.msra.mxu0 %v1924
        %v1926 = vand.u32 %v1555, 4294901760
        %v1927 = vsub.f32 %v1555, %v1926
        %1928 = vmatpush.msra.mxu0 %v1927
        %v1929 = vand.u32 %v1554, 4294901760
        %v1930 = vsub.f32 %v1554, %v1929
        %1931 = vmatpush.msra.mxu0 %v1930
        %v1932 = vand.u32 %v1611, 4294901760
        %v1933 = vsub.f32 %v1611, %v1932
        %1934 = vmatmul.f32.gmra.mxu0 %v1933
        %v1935 = vpop.f32.mrf.mxu0
        %v1936 = vadd.f32 %v1846, %v1935
        %v1937 = vand.u32 %v1614, 4294901760
        %v1938 = vsub.f32 %v1614, %v1937
        %1939 = vmatmul.f32.gmra.mxu0 %v1938
        %v1940 = vpop.f32.mrf.mxu0
        %v1941 = vadd.f32 %v1850, %v1940
        %v1942 = vand.u32 %v1617, 4294901760
        %v1943 = vsub.f32 %v1617, %v1942
        %1944 = vmatmul.f32.gmra.mxu0 %v1943
        %v1945 = vpop.f32.mrf.mxu0
        %v1946 = vadd.f32 %v1854, %v1945
        %v1947 = vand.u32 %v1620, 4294901760
        %v1948 = vsub.f32 %v1620, %v1947
        %1949 = vmatmul.f32.gmra.mxu0 %v1948
        %v1950 = vpop.f32.mrf.mxu0
        %v1951 = vadd.f32 %v1858, %v1950
        %v1952 = vand.u32 %v1623, 4294901760
        %v1953 = vsub.f32 %v1623, %v1952
        %1954 = vmatmul.f32.gmra.mxu0 %v1953
        %v1955 = vpop.f32.mrf.mxu0
        %v1956 = vadd.f32 %v1862, %v1955
        %v1957 = vand.u32 %v1626, 4294901760
        %v1958 = vsub.f32 %v1626, %v1957
        %1959 = vmatmul.f32.gmra.mxu0 %v1958
        %v1960 = vpop.f32.mrf.mxu0
        %v1961 = vadd.f32 %v1866, %v1960
        %v1962 = vand.u32 %v1629, 4294901760
        %v1963 = vsub.f32 %v1629, %v1962
        %1964 = vmatmul.f32.gmra.mxu0 %v1963
        %v1965 = vpop.f32.mrf.mxu0
        %v1966 = vadd.f32 %v1870, %v1965
        %v1967 = vand.u32 %v1632, 4294901760
        %v1968 = vsub.f32 %v1632, %v1967
        %1969 = vmatmul.f32.gmra.mxu0 %v1968
        %v1970 = vpop.f32.mrf.mxu0
        %v1971 = vadd.f32 %v1874, %v1970
        %v1972 = vand.u32 %v1635, 4294901760
        %v1973 = vsub.f32 %v1635, %v1972
        %1974 = vmatmul.f32.gmra.mxu0 %v1973
        %v1975 = vpop.f32.mrf.mxu0
        %v1976 = vadd.f32 %v1878, %v1975
        %v1977 = vand.u32 %v1638, 4294901760
        %v1978 = vsub.f32 %v1638, %v1977
        %1979 = vmatmul.f32.gmra.mxu0 %v1978
        %v1980 = vpop.f32.mrf.mxu0
        %v1981 = vadd.f32 %v1882, %v1980
        %v1982 = vand.u32 %v1641, 4294901760
        %v1983 = vsub.f32 %v1641, %v1982
        %1984 = vmatmul.f32.gmra.mxu0 %v1983
        %v1985 = vpop.f32.mrf.mxu0
        %v1986 = vadd.f32 %v1886, %v1985
        %v1987 = vand.u32 %v1644, 4294901760
        %v1988 = vsub.f32 %v1644, %v1987
        %1989 = vmatmul.f32.gmra.mxu0 %v1988
        %v1990 = vpop.f32.mrf.mxu0
        %v1991 = vadd.f32 %v1890, %v1990
        %v1992 = vand.u32 %v1647, 4294901760
        %v1993 = vsub.f32 %v1647, %v1992
        %1994 = vmatmul.f32.gmra.mxu0 %v1993
        %v1995 = vpop.f32.mrf.mxu0
        %v1996 = vadd.f32 %v1894, %v1995
        %v1997 = vand.u32 %v1650, 4294901760
        %v1998 = vsub.f32 %v1650, %v1997
        %1999 = vmatmul.f32.gmra.mxu0 %v1998
        %v2000 = vpop.f32.mrf.mxu0
        %v2001 = vadd.f32 %v1898, %v2000
        %v2002 = vand.u32 %v1653, 4294901760
        %v2003 = vsub.f32 %v1653, %v2002
        %2004 = vmatmul.f32.gmra.mxu0 %v2003
        %v2005 = vpop.f32.mrf.mxu0
        %v2006 = vadd.f32 %v1902, %v2005
        %v2007 = vand.u32 %v1656, 4294901760
        %v2008 = vsub.f32 %v1656, %v2007
        %2009 = vmatmul.f32.gmra.mxu0 %v2008
        %v2010 = vpop.f32.mrf.mxu0
        %v2011 = vadd.f32 %v1906, %v2010
        %2012 = vdwg.mxu0
        %2013 = vmatpush.msra.mxu0 0.0
        %2014 = vmatpush.msra.mxu0 0.0
        %2015 = vmatpush.msra.mxu0 0.0
        %2016 = vmatpush.msra.mxu0 0.0
        %2017 = vmatpush.msra.mxu0 0.0
        %2018 = vmatpush.msra.mxu0 0.0
        %2019 = vmatpush.msra.mxu0 0.0
        %2020 = vmatpush.msra.mxu0 0.0
        %2021 = vmatpush.msra.mxu0 0.0
        %2022 = vmatpush.msra.mxu0 0.0
        %2023 = vmatpush.msra.mxu0 0.0
        %2024 = vmatpush.msra.mxu0 0.0
        %v2025 = vand.u32 %v1557, 4294901760
        %2026 = vmatpush.msra.mxu0 %v2025
        %v2027 = vand.u32 %v1556, 4294901760
        %2028 = vmatpush.msra.mxu0 %v2027
        %v2029 = vand.u32 %v1555, 4294901760
        %2030 = vmatpush.msra.mxu0 %v2029
        %v2031 = vand.u32 %v1554, 4294901760
        %2032 = vmatpush.msra.mxu0 %v2031
        %v2033 = vand.u32 %v1611, 4294901760
        %v2034 = vsub.f32 %v1611, %v2033
        %v2035 = vand.u32 %v2034, 4294901760
        %2036 = vmatmul.f32.gmra.mxu0 %v2035
        %v2037 = vpop.f32.mrf.mxu0
        %v2038 = vadd.f32 %v1936, %v2037
        %v2039 = vand.u32 %v1614, 4294901760
        %v2040 = vsub.f32 %v1614, %v2039
        %v2041 = vand.u32 %v2040, 4294901760
        %2042 = vmatmul.f32.gmra.mxu0 %v2041
        %v2043 = vpop.f32.mrf.mxu0
        %v2044 = vadd.f32 %v1941, %v2043
        %v2045 = vand.u32 %v1617, 4294901760
        %v2046 = vsub.f32 %v1617, %v2045
        %v2047 = vand.u32 %v2046, 4294901760
        %2048 = vmatmul.f32.gmra.mxu0 %v2047
        %v2049 = vpop.f32.mrf.mxu0
        %v2050 = vadd.f32 %v1946, %v2049
        %v2051 = vand.u32 %v1620, 4294901760
        %v2052 = vsub.f32 %v1620, %v2051
        %v2053 = vand.u32 %v2052, 4294901760
        %2054 = vmatmul.f32.gmra.mxu0 %v2053
        %v2055 = vpop.f32.mrf.mxu0
        %v2056 = vadd.f32 %v1951, %v2055
        %v2057 = vand.u32 %v1623, 4294901760
        %v2058 = vsub.f32 %v1623, %v2057
        %v2059 = vand.u32 %v2058, 4294901760
        %2060 = vmatmul.f32.gmra.mxu0 %v2059
        %v2061 = vpop.f32.mrf.mxu0
        %v2062 = vadd.f32 %v1956, %v2061
        %v2063 = vand.u32 %v1626, 4294901760
        %v2064 = vsub.f32 %v1626, %v2063
        %v2065 = vand.u32 %v2064, 4294901760
        %2066 = vmatmul.f32.gmra.mxu0 %v2065
        %v2067 = vpop.f32.mrf.mxu0
        %v2068 = vadd.f32 %v1961, %v2067
        %v2069 = vand.u32 %v1629, 4294901760
        %v2070 = vsub.f32 %v1629, %v2069
        %v2071 = vand.u32 %v2070, 4294901760
        %2072 = vmatmul.f32.gmra.mxu0 %v2071
        %v2073 = vpop.f32.mrf.mxu0
        %v2074 = vadd.f32 %v1966, %v2073
        %v2075 = vand.u32 %v1632, 4294901760
        %v2076 = vsub.f32 %v1632, %v2075
        %v2077 = vand.u32 %v2076, 4294901760
        %2078 = vmatmul.f32.gmra.mxu0 %v2077
        %v2079 = vpop.f32.mrf.mxu0
        %v2080 = vadd.f32 %v1971, %v2079
        %v2081 = vand.u32 %v1635, 4294901760
        %v2082 = vsub.f32 %v1635, %v2081
        %v2083 = vand.u32 %v2082, 4294901760
        %2084 = vmatmul.f32.gmra.mxu0 %v2083
        %v2085 = vpop.f32.mrf.mxu0
        %v2086 = vadd.f32 %v1976, %v2085
        %v2087 = vand.u32 %v1638, 4294901760
        %v2088 = vsub.f32 %v1638, %v2087
        %v2089 = vand.u32 %v2088, 4294901760
        %2090 = vmatmul.f32.gmra.mxu0 %v2089
        %v2091 = vpop.f32.mrf.mxu0
        %v2092 = vadd.f32 %v1981, %v2091
        %v2093 = vand.u32 %v1641, 4294901760
        %v2094 = vsub.f32 %v1641, %v2093
        %v2095 = vand.u32 %v2094, 4294901760
        %2096 = vmatmul.f32.gmra.mxu0 %v2095
        %v2097 = vpop.f32.mrf.mxu0
        %v2098 = vadd.f32 %v1986, %v2097
        %v2099 = vand.u32 %v1644, 4294901760
        %v2100 = vsub.f32 %v1644, %v2099
        %v2101 = vand.u32 %v2100, 4294901760
        %2102 = vmatmul.f32.gmra.mxu0 %v2101
        %v2103 = vpop.f32.mrf.mxu0
        %v2104 = vadd.f32 %v1991, %v2103
        %v2105 = vand.u32 %v1647, 4294901760
        %v2106 = vsub.f32 %v1647, %v2105
        %v2107 = vand.u32 %v2106, 4294901760
        %2108 = vmatmul.f32.gmra.mxu0 %v2107
        %v2109 = vpop.f32.mrf.mxu0
        %v2110 = vadd.f32 %v1996, %v2109
        %v2111 = vand.u32 %v1650, 4294901760
        %v2112 = vsub.f32 %v1650, %v2111
        %v2113 = vand.u32 %v2112, 4294901760
        %2114 = vmatmul.f32.gmra.mxu0 %v2113
        %v2115 = vpop.f32.mrf.mxu0
        %v2116 = vadd.f32 %v2001, %v2115
        %v2117 = vand.u32 %v1653, 4294901760
        %v2118 = vsub.f32 %v1653, %v2117
        %v2119 = vand.u32 %v2118, 4294901760
        %2120 = vmatmul.f32.gmra.mxu0 %v2119
        %v2121 = vpop.f32.mrf.mxu0
        %v2122 = vadd.f32 %v2006, %v2121
        %v2123 = vand.u32 %v1656, 4294901760
        %v2124 = vsub.f32 %v1656, %v2123
        %v2125 = vand.u32 %v2124, 4294901760
        %2126 = vmatmul.f32.gmra.mxu0 %v2125
        %v2127 = vpop.f32.mrf.mxu0
        %v2128 = vadd.f32 %v2011, %v2127
        %2129 = vdwg.mxu0
        %2130 = vmatpush.msra.mxu0 0.0
        %2131 = vmatpush.msra.mxu0 0.0
        %2132 = vmatpush.msra.mxu0 0.0
        %2133 = vmatpush.msra.mxu0 0.0
        %2134 = vmatpush.msra.mxu0 0.0
        %2135 = vmatpush.msra.mxu0 0.0
        %2136 = vmatpush.msra.mxu0 0.0
        %2137 = vmatpush.msra.mxu0 0.0
        %2138 = vmatpush.msra.mxu0 0.0
        %2139 = vmatpush.msra.mxu0 0.0
        %2140 = vmatpush.msra.mxu0 0.0
        %2141 = vmatpush.msra.mxu0 0.0
        %v2142 = vand.u32 %v1557, 4294901760
        %v2143 = vsub.f32 %v1557, %v2142
        %v2144 = vand.u32 %v2143, 4294901760
        %2145 = vmatpush.msra.mxu0 %v2144
        %v2146 = vand.u32 %v1556, 4294901760
        %v2147 = vsub.f32 %v1556, %v2146
        %v2148 = vand.u32 %v2147, 4294901760
        %2149 = vmatpush.msra.mxu0 %v2148
        %v2150 = vand.u32 %v1555, 4294901760
        %v2151 = vsub.f32 %v1555, %v2150
        %v2152 = vand.u32 %v2151, 4294901760
        %2153 = vmatpush.msra.mxu0 %v2152
        %v2154 = vand.u32 %v1554, 4294901760
        %v2155 = vsub.f32 %v1554, %v2154
        %v2156 = vand.u32 %v2155, 4294901760
        %2157 = vmatpush.msra.mxu0 %v2156
        %v2158 = vand.u32 %v1611, 4294901760
        %2159 = vmatmul.f32.gmra.mxu0 %v2158
        %v2160 = vpop.f32.mrf.mxu0
        %v2161 = vadd.f32 %v2038, %v2160
        %v2162 = vand.u32 %v1614, 4294901760
        %2163 = vmatmul.f32.gmra.mxu0 %v2162
        %v2164 = vpop.f32.mrf.mxu0
        %v2165 = vadd.f32 %v2044, %v2164
        %v2166 = vand.u32 %v1617, 4294901760
        %2167 = vmatmul.f32.gmra.mxu0 %v2166
        %v2168 = vpop.f32.mrf.mxu0
        %v2169 = vadd.f32 %v2050, %v2168
        %v2170 = vand.u32 %v1620, 4294901760
        %2171 = vmatmul.f32.gmra.mxu0 %v2170
        %v2172 = vpop.f32.mrf.mxu0
        %v2173 = vadd.f32 %v2056, %v2172
        %v2174 = vand.u32 %v1623, 4294901760
        %2175 = vmatmul.f32.gmra.mxu0 %v2174
        %v2176 = vpop.f32.mrf.mxu0
        %v2177 = vadd.f32 %v2062, %v2176
        %v2178 = vand.u32 %v1626, 4294901760
        %2179 = vmatmul.f32.gmra.mxu0 %v2178
        %v2180 = vpop.f32.mrf.mxu0
        %v2181 = vadd.f32 %v2068, %v2180
        %v2182 = vand.u32 %v1629, 4294901760
        %2183 = vmatmul.f32.gmra.mxu0 %v2182
        %v2184 = vpop.f32.mrf.mxu0
        %v2185 = vadd.f32 %v2074, %v2184
        %v2186 = vand.u32 %v1632, 4294901760
        %2187 = vmatmul.f32.gmra.mxu0 %v2186
        %v2188 = vpop.f32.mrf.mxu0
        %v2189 = vadd.f32 %v2080, %v2188
        %v2190 = vand.u32 %v1635, 4294901760
        %2191 = vmatmul.f32.gmra.mxu0 %v2190
        %v2192 = vpop.f32.mrf.mxu0
        %v2193 = vadd.f32 %v2086, %v2192
        %v2194 = vand.u32 %v1638, 4294901760
        %2195 = vmatmul.f32.gmra.mxu0 %v2194
        %v2196 = vpop.f32.mrf.mxu0
        %v2197 = vadd.f32 %v2092, %v2196
        %v2198 = vand.u32 %v1641, 4294901760
        %2199 = vmatmul.f32.gmra.mxu0 %v2198
        %v2200 = vpop.f32.mrf.mxu0
        %v2201 = vadd.f32 %v2098, %v2200
        %v2202 = vand.u32 %v1644, 4294901760
        %2203 = vmatmul.f32.gmra.mxu0 %v2202
        %v2204 = vpop.f32.mrf.mxu0
        %v2205 = vadd.f32 %v2104, %v2204
        %v2206 = vand.u32 %v1647, 4294901760
        %2207 = vmatmul.f32.gmra.mxu0 %v2206
        %v2208 = vpop.f32.mrf.mxu0
        %v2209 = vadd.f32 %v2110, %v2208
        %v2210 = vand.u32 %v1650, 4294901760
        %2211 = vmatmul.f32.gmra.mxu0 %v2210
        %v2212 = vpop.f32.mrf.mxu0
        %v2213 = vadd.f32 %v2116, %v2212
        %v2214 = vand.u32 %v1653, 4294901760
        %2215 = vmatmul.f32.gmra.mxu0 %v2214
        %v2216 = vpop.f32.mrf.mxu0
        %v2217 = vadd.f32 %v2122, %v2216
        %v2218 = vand.u32 %v1656, 4294901760
        %2219 = vmatmul.f32.gmra.mxu0 %v2218
        %v2220 = vpop.f32.mrf.mxu0
        %v2221 = vadd.f32 %v2128, %v2220
        %2222 = vdwg.mxu0
        %2223 = vmatpush.msra.mxu0 0.0
        %2224 = vmatpush.msra.mxu0 0.0
        %2225 = vmatpush.msra.mxu0 0.0
        %2226 = vmatpush.msra.mxu0 0.0
        %2227 = vmatpush.msra.mxu0 0.0
        %2228 = vmatpush.msra.mxu0 0.0
        %2229 = vmatpush.msra.mxu0 0.0
        %2230 = vmatpush.msra.mxu0 0.0
        %2231 = vmatpush.msra.mxu0 0.0
        %2232 = vmatpush.msra.mxu0 0.0
        %2233 = vmatpush.msra.mxu0 0.0
        %2234 = vmatpush.msra.mxu0 0.0
        %v2235 = vand.u32 %v1557, 4294901760
        %2236 = vmatpush.msra.mxu0 %v2235
        %v2237 = vand.u32 %v1556, 4294901760
        %2238 = vmatpush.msra.mxu0 %v2237
        %v2239 = vand.u32 %v1555, 4294901760
        %2240 = vmatpush.msra.mxu0 %v2239
        %v2241 = vand.u32 %v1554, 4294901760
        %2242 = vmatpush.msra.mxu0 %v2241
        %v2243 = vand.u32 %v1611, 4294901760
        %2244 = vmatmul.f32.gmra.mxu0 %v2243
        %v2245 = vpop.f32.mrf.mxu0
        %v2246 = vadd.f32 %v2161, %v2245
        %v2247 = vand.u32 %v1614, 4294901760
        %2248 = vmatmul.f32.gmra.mxu0 %v2247
        %v2249 = vpop.f32.mrf.mxu0
        %v2250 = vadd.f32 %v2165, %v2249
        %v2251 = vand.u32 %v1617, 4294901760
        %2252 = vmatmul.f32.gmra.mxu0 %v2251
        %v2253 = vpop.f32.mrf.mxu0
        %v2254 = vadd.f32 %v2169, %v2253
        %v2255 = vand.u32 %v1620, 4294901760
        %2256 = vmatmul.f32.gmra.mxu0 %v2255
        %v2257 = vpop.f32.mrf.mxu0
        %v2258 = vadd.f32 %v2173, %v2257
        %v2259 = vand.u32 %v1623, 4294901760
        %2260 = vmatmul.f32.gmra.mxu0 %v2259
        %v2261 = vpop.f32.mrf.mxu0
        %v2262 = vadd.f32 %v2177, %v2261
        %v2263 = vand.u32 %v1626, 4294901760
        %2264 = vmatmul.f32.gmra.mxu0 %v2263
        %v2265 = vpop.f32.mrf.mxu0
        %v2266 = vadd.f32 %v2181, %v2265
        %v2267 = vand.u32 %v1629, 4294901760
        %2268 = vmatmul.f32.gmra.mxu0 %v2267
        %v2269 = vpop.f32.mrf.mxu0
        %v2270 = vadd.f32 %v2185, %v2269
        %v2271 = vand.u32 %v1632, 4294901760
        %2272 = vmatmul.f32.gmra.mxu0 %v2271
        %v2273 = vpop.f32.mrf.mxu0
        %v2274 = vadd.f32 %v2189, %v2273
        %v2275 = vand.u32 %v1635, 4294901760
        %2276 = vmatmul.f32.gmra.mxu0 %v2275
        %v2277 = vpop.f32.mrf.mxu0
        %v2278 = vadd.f32 %v2193, %v2277
        %v2279 = vand.u32 %v1638, 4294901760
        %2280 = vmatmul.f32.gmra.mxu0 %v2279
        %v2281 = vpop.f32.mrf.mxu0
        %v2282 = vadd.f32 %v2197, %v2281
        %v2283 = vand.u32 %v1641, 4294901760
        %2284 = vmatmul.f32.gmra.mxu0 %v2283
        %v2285 = vpop.f32.mrf.mxu0
        %v2286 = vadd.f32 %v2201, %v2285
        %v2287 = vand.u32 %v1644, 4294901760
        %2288 = vmatmul.f32.gmra.mxu0 %v2287
        %v2289 = vpop.f32.mrf.mxu0
        %v2290 = vadd.f32 %v2205, %v2289
        %v2291 = vand.u32 %v1647, 4294901760
        %2292 = vmatmul.f32.gmra.mxu0 %v2291
        %v2293 = vpop.f32.mrf.mxu0
        %v2294 = vadd.f32 %v2209, %v2293
        %v2295 = vand.u32 %v1650, 4294901760
        %2296 = vmatmul.f32.gmra.mxu0 %v2295
        %v2297 = vpop.f32.mrf.mxu0
        %v2298 = vadd.f32 %v2213, %v2297
        %v2299 = vand.u32 %v1653, 4294901760
        %2300 = vmatmul.f32.gmra.mxu0 %v2299
        %v2301 = vpop.f32.mrf.mxu0
        %v2302 = vadd.f32 %v2217, %v2301
        %v2303 = vand.u32 %v1656, 4294901760
        %2304 = vmatmul.f32.gmra.mxu0 %v2303
        %v2305 = vpop.f32.mrf.mxu0
        %v2306 = vadd.f32 %v2221, %v2305
        %2307 = vdwg.mxu0
        %2308 = vmatpush.msra.mxu0 0.0
        %2309 = vmatpush.msra.mxu0 0.0
        %2310 = vmatpush.msra.mxu0 0.0
        %2311 = vmatpush.msra.mxu0 0.0
        %2312 = vmatpush.msra.mxu0 0.0
        %2313 = vmatpush.msra.mxu0 0.0
        %2314 = vmatpush.msra.mxu0 0.0
        %2315 = vmatpush.msra.mxu0 0.0
        %2316 = vmatpush.msra.mxu0 0.0
        %2317 = vmatpush.msra.mxu0 0.0
        %2318 = vmatpush.msra.mxu0 0.0
        %2319 = vmatpush.msra.mxu0 0.0
        %v2320 = vand.u32 %v1577, 4294901760
        %2321 = vmatpush.msra.mxu0 %v2320
        %v2322 = vand.u32 %v1576, 4294901760
        %2323 = vmatpush.msra.mxu0 %v2322
        %v2324 = vand.u32 %v1575, 4294901760
        %2325 = vmatpush.msra.mxu0 %v2324
        %v2326 = vand.u32 %v1574, 4294901760
        %2327 = vmatpush.msra.mxu0 %v2326
        %v2328 = vand.u32 %v1611, 4294901760
        %v2329 = vsub.f32 %v1611, %v2328
        %v2330 = vand.u32 %v2329, 4294901760
        %v2331 = vsub.f32 %v2329, %v2330
        %v2332 = vand.u32 %v2331, 4294901760
        %2333 = vmatmul.f32.gmra.mxu0 %v2332
        %v2334 = vpop.f32.mrf.mxu0
        %v2335 = vadd.f32 0.0, %v2334
        %v2336 = vand.u32 %v1614, 4294901760
        %v2337 = vsub.f32 %v1614, %v2336
        %v2338 = vand.u32 %v2337, 4294901760
        %v2339 = vsub.f32 %v2337, %v2338
        %v2340 = vand.u32 %v2339, 4294901760
        %2341 = vmatmul.f32.gmra.mxu0 %v2340
        %v2342 = vpop.f32.mrf.mxu0
        %v2343 = vadd.f32 0.0, %v2342
        %v2344 = vand.u32 %v1617, 4294901760
        %v2345 = vsub.f32 %v1617, %v2344
        %v2346 = vand.u32 %v2345, 4294901760
        %v2347 = vsub.f32 %v2345, %v2346
        %v2348 = vand.u32 %v2347, 4294901760
        %2349 = vmatmul.f32.gmra.mxu0 %v2348
        %v2350 = vpop.f32.mrf.mxu0
        %v2351 = vadd.f32 0.0, %v2350
        %v2352 = vand.u32 %v1620, 4294901760
        %v2353 = vsub.f32 %v1620, %v2352
        %v2354 = vand.u32 %v2353, 4294901760
        %v2355 = vsub.f32 %v2353, %v2354
        %v2356 = vand.u32 %v2355, 4294901760
        %2357 = vmatmul.f32.gmra.mxu0 %v2356
        %v2358 = vpop.f32.mrf.mxu0
        %v2359 = vadd.f32 0.0, %v2358
        %v2360 = vand.u32 %v1623, 4294901760
        %v2361 = vsub.f32 %v1623, %v2360
        %v2362 = vand.u32 %v2361, 4294901760
        %v2363 = vsub.f32 %v2361, %v2362
        %v2364 = vand.u32 %v2363, 4294901760
        %2365 = vmatmul.f32.gmra.mxu0 %v2364
        %v2366 = vpop.f32.mrf.mxu0
        %v2367 = vadd.f32 0.0, %v2366
        %v2368 = vand.u32 %v1626, 4294901760
        %v2369 = vsub.f32 %v1626, %v2368
        %v2370 = vand.u32 %v2369, 4294901760
        %v2371 = vsub.f32 %v2369, %v2370
        %v2372 = vand.u32 %v2371, 4294901760
        %2373 = vmatmul.f32.gmra.mxu0 %v2372
        %v2374 = vpop.f32.mrf.mxu0
        %v2375 = vadd.f32 0.0, %v2374
        %v2376 = vand.u32 %v1629, 4294901760
        %v2377 = vsub.f32 %v1629, %v2376
        %v2378 = vand.u32 %v2377, 4294901760
        %v2379 = vsub.f32 %v2377, %v2378
        %v2380 = vand.u32 %v2379, 4294901760
        %2381 = vmatmul.f32.gmra.mxu0 %v2380
        %v2382 = vpop.f32.mrf.mxu0
        %v2383 = vadd.f32 0.0, %v2382
        %v2384 = vand.u32 %v1632, 4294901760
        %v2385 = vsub.f32 %v1632, %v2384
        %v2386 = vand.u32 %v2385, 4294901760
        %v2387 = vsub.f32 %v2385, %v2386
        %v2388 = vand.u32 %v2387, 4294901760
        %2389 = vmatmul.f32.gmra.mxu0 %v2388
        %v2390 = vpop.f32.mrf.mxu0
        %v2391 = vadd.f32 0.0, %v2390
        %v2392 = vand.u32 %v1635, 4294901760
        %v2393 = vsub.f32 %v1635, %v2392
        %v2394 = vand.u32 %v2393, 4294901760
        %v2395 = vsub.f32 %v2393, %v2394
        %v2396 = vand.u32 %v2395, 4294901760
        %2397 = vmatmul.f32.gmra.mxu0 %v2396
        %v2398 = vpop.f32.mrf.mxu0
        %v2399 = vadd.f32 0.0, %v2398
        %v2400 = vand.u32 %v1638, 4294901760
        %v2401 = vsub.f32 %v1638, %v2400
        %v2402 = vand.u32 %v2401, 4294901760
        %v2403 = vsub.f32 %v2401, %v2402
        %v2404 = vand.u32 %v2403, 4294901760
        %2405 = vmatmul.f32.gmra.mxu0 %v2404
        %v2406 = vpop.f32.mrf.mxu0
        %v2407 = vadd.f32 0.0, %v2406
        %v2408 = vand.u32 %v1641, 4294901760
        %v2409 = vsub.f32 %v1641, %v2408
        %v2410 = vand.u32 %v2409, 4294901760
        %v2411 = vsub.f32 %v2409, %v2410
        %v2412 = vand.u32 %v2411, 4294901760
        %2413 = vmatmul.f32.gmra.mxu0 %v2412
        %v2414 = vpop.f32.mrf.mxu0
        %v2415 = vadd.f32 0.0, %v2414
        %v2416 = vand.u32 %v1644, 4294901760
        %v2417 = vsub.f32 %v1644, %v2416
        %v2418 = vand.u32 %v2417, 4294901760
        %v2419 = vsub.f32 %v2417, %v2418
        %v2420 = vand.u32 %v2419, 4294901760
        %2421 = vmatmul.f32.gmra.mxu0 %v2420
        %v2422 = vpop.f32.mrf.mxu0
        %v2423 = vadd.f32 0.0, %v2422
        %v2424 = vand.u32 %v1647, 4294901760
        %v2425 = vsub.f32 %v1647, %v2424
        %v2426 = vand.u32 %v2425, 4294901760
        %v2427 = vsub.f32 %v2425, %v2426
        %v2428 = vand.u32 %v2427, 4294901760
        %2429 = vmatmul.f32.gmra.mxu0 %v2428
        %v2430 = vpop.f32.mrf.mxu0
        %v2431 = vadd.f32 0.0, %v2430
        %v2432 = vand.u32 %v1650, 4294901760
        %v2433 = vsub.f32 %v1650, %v2432
        %v2434 = vand.u32 %v2433, 4294901760
        %v2435 = vsub.f32 %v2433, %v2434
        %v2436 = vand.u32 %v2435, 4294901760
        %2437 = vmatmul.f32.gmra.mxu0 %v2436
        %v2438 = vpop.f32.mrf.mxu0
        %v2439 = vadd.f32 0.0, %v2438
        %v2440 = vand.u32 %v1653, 4294901760
        %v2441 = vsub.f32 %v1653, %v2440
        %v2442 = vand.u32 %v2441, 4294901760
        %v2443 = vsub.f32 %v2441, %v2442
        %v2444 = vand.u32 %v2443, 4294901760
        %2445 = vmatmul.f32.gmra.mxu0 %v2444
        %v2446 = vpop.f32.mrf.mxu0
        %v2447 = vadd.f32 0.0, %v2446
        %v2448 = vand.u32 %v1656, 4294901760
        %v2449 = vsub.f32 %v1656, %v2448
        %v2450 = vand.u32 %v2449, 4294901760
        %v2451 = vsub.f32 %v2449, %v2450
        %v2452 = vand.u32 %v2451, 4294901760
        %2453 = vmatmul.f32.gmra.mxu0 %v2452
        %v2454 = vpop.f32.mrf.mxu0
        %v2455 = vadd.f32 0.0, %v2454
        %2456 = vdwg.mxu0
        %2457 = vmatpush.msra.mxu0 0.0
        %2458 = vmatpush.msra.mxu0 0.0
        %2459 = vmatpush.msra.mxu0 0.0
        %2460 = vmatpush.msra.mxu0 0.0
        %2461 = vmatpush.msra.mxu0 0.0
        %2462 = vmatpush.msra.mxu0 0.0
        %2463 = vmatpush.msra.mxu0 0.0
        %2464 = vmatpush.msra.mxu0 0.0
        %2465 = vmatpush.msra.mxu0 0.0
        %2466 = vmatpush.msra.mxu0 0.0
        %2467 = vmatpush.msra.mxu0 0.0
        %2468 = vmatpush.msra.mxu0 0.0
        %v2469 = vand.u32 %v1577, 4294901760
        %v2470 = vsub.f32 %v1577, %v2469
        %v2471 = vand.u32 %v2470, 4294901760
        %v2472 = vsub.f32 %v2470, %v2471
        %v2473 = vand.u32 %v2472, 4294901760
        %2474 = vmatpush.msra.mxu0 %v2473
        %v2475 = vand.u32 %v1576, 4294901760
        %v2476 = vsub.f32 %v1576, %v2475
        %v2477 = vand.u32 %v2476, 4294901760
        %v2478 = vsub.f32 %v2476, %v2477
        %v2479 = vand.u32 %v2478, 4294901760
        %2480 = vmatpush.msra.mxu0 %v2479
        %v2481 = vand.u32 %v1575, 4294901760
        %v2482 = vsub.f32 %v1575, %v2481
        %v2483 = vand.u32 %v2482, 4294901760
        %v2484 = vsub.f32 %v2482, %v2483
        %v2485 = vand.u32 %v2484, 4294901760
        %2486 = vmatpush.msra.mxu0 %v2485
        %v2487 = vand.u32 %v1574, 4294901760
        %v2488 = vsub.f32 %v1574, %v2487
        %v2489 = vand.u32 %v2488, 4294901760
        %v2490 = vsub.f32 %v2488, %v2489
        %v2491 = vand.u32 %v2490, 4294901760
        %2492 = vmatpush.msra.mxu0 %v2491
        %v2493 = vand.u32 %v1611, 4294901760
        %2494 = vmatmul.f32.gmra.mxu0 %v2493
        %v2495 = vpop.f32.mrf.mxu0
        %v2496 = vadd.f32 %v2335, %v2495
        %v2497 = vand.u32 %v1614, 4294901760
        %2498 = vmatmul.f32.gmra.mxu0 %v2497
        %v2499 = vpop.f32.mrf.mxu0
        %v2500 = vadd.f32 %v2343, %v2499
        %v2501 = vand.u32 %v1617, 4294901760
        %2502 = vmatmul.f32.gmra.mxu0 %v2501
        %v2503 = vpop.f32.mrf.mxu0
        %v2504 = vadd.f32 %v2351, %v2503
        %v2505 = vand.u32 %v1620, 4294901760
        %2506 = vmatmul.f32.gmra.mxu0 %v2505
        %v2507 = vpop.f32.mrf.mxu0
        %v2508 = vadd.f32 %v2359, %v2507
        %v2509 = vand.u32 %v1623, 4294901760
        %2510 = vmatmul.f32.gmra.mxu0 %v2509
        %v2511 = vpop.f32.mrf.mxu0
        %v2512 = vadd.f32 %v2367, %v2511
        %v2513 = vand.u32 %v1626, 4294901760
        %2514 = vmatmul.f32.gmra.mxu0 %v2513
        %v2515 = vpop.f32.mrf.mxu0
        %v2516 = vadd.f32 %v2375, %v2515
        %v2517 = vand.u32 %v1629, 4294901760
        %2518 = vmatmul.f32.gmra.mxu0 %v2517
        %v2519 = vpop.f32.mrf.mxu0
        %v2520 = vadd.f32 %v2383, %v2519
        %v2521 = vand.u32 %v1632, 4294901760
        %2522 = vmatmul.f32.gmra.mxu0 %v2521
        %v2523 = vpop.f32.mrf.mxu0
        %v2524 = vadd.f32 %v2391, %v2523
        %v2525 = vand.u32 %v1635, 4294901760
        %2526 = vmatmul.f32.gmra.mxu0 %v2525
        %v2527 = vpop.f32.mrf.mxu0
        %v2528 = vadd.f32 %v2399, %v2527
        %v2529 = vand.u32 %v1638, 4294901760
        %2530 = vmatmul.f32.gmra.mxu0 %v2529
        %v2531 = vpop.f32.mrf.mxu0
        %v2532 = vadd.f32 %v2407, %v2531
        %v2533 = vand.u32 %v1641, 4294901760
        %2534 = vmatmul.f32.gmra.mxu0 %v2533
        %v2535 = vpop.f32.mrf.mxu0
        %v2536 = vadd.f32 %v2415, %v2535
        %v2537 = vand.u32 %v1644, 4294901760
        %2538 = vmatmul.f32.gmra.mxu0 %v2537
        %v2539 = vpop.f32.mrf.mxu0
        %v2540 = vadd.f32 %v2423, %v2539
        %v2541 = vand.u32 %v1647, 4294901760
        %2542 = vmatmul.f32.gmra.mxu0 %v2541
        %v2543 = vpop.f32.mrf.mxu0
        %v2544 = vadd.f32 %v2431, %v2543
        %v2545 = vand.u32 %v1650, 4294901760
        %2546 = vmatmul.f32.gmra.mxu0 %v2545
        %v2547 = vpop.f32.mrf.mxu0
        %v2548 = vadd.f32 %v2439, %v2547
        %v2549 = vand.u32 %v1653, 4294901760
        %2550 = vmatmul.f32.gmra.mxu0 %v2549
        %v2551 = vpop.f32.mrf.mxu0
        %v2552 = vadd.f32 %v2447, %v2551
        %v2553 = vand.u32 %v1656, 4294901760
        %2554 = vmatmul.f32.gmra.mxu0 %v2553
        %v2555 = vpop.f32.mrf.mxu0
        %v2556 = vadd.f32 %v2455, %v2555
        %2557 = vdwg.mxu0
        %2558 = vmatpush.msra.mxu0 0.0
        %2559 = vmatpush.msra.mxu0 0.0
        %2560 = vmatpush.msra.mxu0 0.0
        %2561 = vmatpush.msra.mxu0 0.0
        %2562 = vmatpush.msra.mxu0 0.0
        %2563 = vmatpush.msra.mxu0 0.0
        %2564 = vmatpush.msra.mxu0 0.0
        %2565 = vmatpush.msra.mxu0 0.0
        %2566 = vmatpush.msra.mxu0 0.0
        %2567 = vmatpush.msra.mxu0 0.0
        %2568 = vmatpush.msra.mxu0 0.0
        %2569 = vmatpush.msra.mxu0 0.0
        %v2570 = vand.u32 %v1577, 4294901760
        %v2571 = vsub.f32 %v1577, %v2570
        %2572 = vmatpush.msra.mxu0 %v2571
        %v2573 = vand.u32 %v1576, 4294901760
        %v2574 = vsub.f32 %v1576, %v2573
        %2575 = vmatpush.msra.mxu0 %v2574
        %v2576 = vand.u32 %v1575, 4294901760
        %v2577 = vsub.f32 %v1575, %v2576
        %2578 = vmatpush.msra.mxu0 %v2577
        %v2579 = vand.u32 %v1574, 4294901760
        %v2580 = vsub.f32 %v1574, %v2579
        %2581 = vmatpush.msra.mxu0 %v2580
        %v2582 = vand.u32 %v1611, 4294901760
        %v2583 = vsub.f32 %v1611, %v2582
        %2584 = vmatmul.f32.gmra.mxu0 %v2583
        %v2585 = vpop.f32.mrf.mxu0
        %v2586 = vadd.f32 %v2496, %v2585
        %v2587 = vand.u32 %v1614, 4294901760
        %v2588 = vsub.f32 %v1614, %v2587
        %2589 = vmatmul.f32.gmra.mxu0 %v2588
        %v2590 = vpop.f32.mrf.mxu0
        %v2591 = vadd.f32 %v2500, %v2590
        %v2592 = vand.u32 %v1617, 4294901760
        %v2593 = vsub.f32 %v1617, %v2592
        %2594 = vmatmul.f32.gmra.mxu0 %v2593
        %v2595 = vpop.f32.mrf.mxu0
        %v2596 = vadd.f32 %v2504, %v2595
        %v2597 = vand.u32 %v1620, 4294901760
        %v2598 = vsub.f32 %v1620, %v2597
        %2599 = vmatmul.f32.gmra.mxu0 %v2598
        %v2600 = vpop.f32.mrf.mxu0
        %v2601 = vadd.f32 %v2508, %v2600
        %v2602 = vand.u32 %v1623, 4294901760
        %v2603 = vsub.f32 %v1623, %v2602
        %2604 = vmatmul.f32.gmra.mxu0 %v2603
        %v2605 = vpop.f32.mrf.mxu0
        %v2606 = vadd.f32 %v2512, %v2605
        %v2607 = vand.u32 %v1626, 4294901760
        %v2608 = vsub.f32 %v1626, %v2607
        %2609 = vmatmul.f32.gmra.mxu0 %v2608
        %v2610 = vpop.f32.mrf.mxu0
        %v2611 = vadd.f32 %v2516, %v2610
        %v2612 = vand.u32 %v1629, 4294901760
        %v2613 = vsub.f32 %v1629, %v2612
        %2614 = vmatmul.f32.gmra.mxu0 %v2613
        %v2615 = vpop.f32.mrf.mxu0
        %v2616 = vadd.f32 %v2520, %v2615
        %v2617 = vand.u32 %v1632, 4294901760
        %v2618 = vsub.f32 %v1632, %v2617
        %2619 = vmatmul.f32.gmra.mxu0 %v2618
        %v2620 = vpop.f32.mrf.mxu0
        %v2621 = vadd.f32 %v2524, %v2620
        %v2622 = vand.u32 %v1635, 4294901760
        %v2623 = vsub.f32 %v1635, %v2622
        %2624 = vmatmul.f32.gmra.mxu0 %v2623
        %v2625 = vpop.f32.mrf.mxu0
        %v2626 = vadd.f32 %v2528, %v2625
        %v2627 = vand.u32 %v1638, 4294901760
        %v2628 = vsub.f32 %v1638, %v2627
        %2629 = vmatmul.f32.gmra.mxu0 %v2628
        %v2630 = vpop.f32.mrf.mxu0
        %v2631 = vadd.f32 %v2532, %v2630
        %v2632 = vand.u32 %v1641, 4294901760
        %v2633 = vsub.f32 %v1641, %v2632
        %2634 = vmatmul.f32.gmra.mxu0 %v2633
        %v2635 = vpop.f32.mrf.mxu0
        %v2636 = vadd.f32 %v2536, %v2635
        %v2637 = vand.u32 %v1644, 4294901760
        %v2638 = vsub.f32 %v1644, %v2637
        %2639 = vmatmul.f32.gmra.mxu0 %v2638
        %v2640 = vpop.f32.mrf.mxu0
        %v2641 = vadd.f32 %v2540, %v2640
        %v2642 = vand.u32 %v1647, 4294901760
        %v2643 = vsub.f32 %v1647, %v2642
        %2644 = vmatmul.f32.gmra.mxu0 %v2643
        %v2645 = vpop.f32.mrf.mxu0
        %v2646 = vadd.f32 %v2544, %v2645
        %v2647 = vand.u32 %v1650, 4294901760
        %v2648 = vsub.f32 %v1650, %v2647
        %2649 = vmatmul.f32.gmra.mxu0 %v2648
        %v2650 = vpop.f32.mrf.mxu0
        %v2651 = vadd.f32 %v2548, %v2650
        %v2652 = vand.u32 %v1653, 4294901760
        %v2653 = vsub.f32 %v1653, %v2652
        %2654 = vmatmul.f32.gmra.mxu0 %v2653
        %v2655 = vpop.f32.mrf.mxu0
        %v2656 = vadd.f32 %v2552, %v2655
        %v2657 = vand.u32 %v1656, 4294901760
        %v2658 = vsub.f32 %v1656, %v2657
        %2659 = vmatmul.f32.gmra.mxu0 %v2658
        %v2660 = vpop.f32.mrf.mxu0
        %v2661 = vadd.f32 %v2556, %v2660
        %2662 = vdwg.mxu0
        %2663 = vmatpush.msra.mxu0 0.0
        %2664 = vmatpush.msra.mxu0 0.0
        %2665 = vmatpush.msra.mxu0 0.0
        %2666 = vmatpush.msra.mxu0 0.0
        %2667 = vmatpush.msra.mxu0 0.0
        %2668 = vmatpush.msra.mxu0 0.0
        %2669 = vmatpush.msra.mxu0 0.0
        %2670 = vmatpush.msra.mxu0 0.0
        %2671 = vmatpush.msra.mxu0 0.0
        %2672 = vmatpush.msra.mxu0 0.0
        %2673 = vmatpush.msra.mxu0 0.0
        %2674 = vmatpush.msra.mxu0 0.0
        %v2675 = vand.u32 %v1577, 4294901760
        %2676 = vmatpush.msra.mxu0 %v2675
        %v2677 = vand.u32 %v1576, 4294901760
        %2678 = vmatpush.msra.mxu0 %v2677
        %v2679 = vand.u32 %v1575, 4294901760
        %2680 = vmatpush.msra.mxu0 %v2679
        %v2681 = vand.u32 %v1574, 4294901760
        %2682 = vmatpush.msra.mxu0 %v2681
        %v2683 = vand.u32 %v1611, 4294901760
        %v2684 = vsub.f32 %v1611, %v2683
        %v2685 = vand.u32 %v2684, 4294901760
        %2686 = vmatmul.f32.gmra.mxu0 %v2685
        %v2687 = vpop.f32.mrf.mxu0
        %v2688 = vadd.f32 %v2586, %v2687
        %v2689 = vand.u32 %v1614, 4294901760
        %v2690 = vsub.f32 %v1614, %v2689
        %v2691 = vand.u32 %v2690, 4294901760
        %2692 = vmatmul.f32.gmra.mxu0 %v2691
        %v2693 = vpop.f32.mrf.mxu0
        %v2694 = vadd.f32 %v2591, %v2693
        %v2695 = vand.u32 %v1617, 4294901760
        %v2696 = vsub.f32 %v1617, %v2695
        %v2697 = vand.u32 %v2696, 4294901760
        %2698 = vmatmul.f32.gmra.mxu0 %v2697
        %v2699 = vpop.f32.mrf.mxu0
        %v2700 = vadd.f32 %v2596, %v2699
        %v2701 = vand.u32 %v1620, 4294901760
        %v2702 = vsub.f32 %v1620, %v2701
        %v2703 = vand.u32 %v2702, 4294901760
        %2704 = vmatmul.f32.gmra.mxu0 %v2703
        %v2705 = vpop.f32.mrf.mxu0
        %v2706 = vadd.f32 %v2601, %v2705
        %v2707 = vand.u32 %v1623, 4294901760
        %v2708 = vsub.f32 %v1623, %v2707
        %v2709 = vand.u32 %v2708, 4294901760
        %2710 = vmatmul.f32.gmra.mxu0 %v2709
        %v2711 = vpop.f32.mrf.mxu0
        %v2712 = vadd.f32 %v2606, %v2711
        %v2713 = vand.u32 %v1626, 4294901760
        %v2714 = vsub.f32 %v1626, %v2713
        %v2715 = vand.u32 %v2714, 4294901760
        %2716 = vmatmul.f32.gmra.mxu0 %v2715
        %v2717 = vpop.f32.mrf.mxu0
        %v2718 = vadd.f32 %v2611, %v2717
        %v2719 = vand.u32 %v1629, 4294901760
        %v2720 = vsub.f32 %v1629, %v2719
        %v2721 = vand.u32 %v2720, 4294901760
        %2722 = vmatmul.f32.gmra.mxu0 %v2721
        %v2723 = vpop.f32.mrf.mxu0
        %v2724 = vadd.f32 %v2616, %v2723
        %v2725 = vand.u32 %v1632, 4294901760
        %v2726 = vsub.f32 %v1632, %v2725
        %v2727 = vand.u32 %v2726, 4294901760
        %2728 = vmatmul.f32.gmra.mxu0 %v2727
        %v2729 = vpop.f32.mrf.mxu0
        %v2730 = vadd.f32 %v2621, %v2729
        %v2731 = vand.u32 %v1635, 4294901760
        %v2732 = vsub.f32 %v1635, %v2731
        %v2733 = vand.u32 %v2732, 4294901760
        %2734 = vmatmul.f32.gmra.mxu0 %v2733
        %v2735 = vpop.f32.mrf.mxu0
        %v2736 = vadd.f32 %v2626, %v2735
        %v2737 = vand.u32 %v1638, 4294901760
        %v2738 = vsub.f32 %v1638, %v2737
        %v2739 = vand.u32 %v2738, 4294901760
        %2740 = vmatmul.f32.gmra.mxu0 %v2739
        %v2741 = vpop.f32.mrf.mxu0
        %v2742 = vadd.f32 %v2631, %v2741
        %v2743 = vand.u32 %v1641, 4294901760
        %v2744 = vsub.f32 %v1641, %v2743
        %v2745 = vand.u32 %v2744, 4294901760
        %2746 = vmatmul.f32.gmra.mxu0 %v2745
        %v2747 = vpop.f32.mrf.mxu0
        %v2748 = vadd.f32 %v2636, %v2747
        %v2749 = vand.u32 %v1644, 4294901760
        %v2750 = vsub.f32 %v1644, %v2749
        %v2751 = vand.u32 %v2750, 4294901760
        %2752 = vmatmul.f32.gmra.mxu0 %v2751
        %v2753 = vpop.f32.mrf.mxu0
        %v2754 = vadd.f32 %v2641, %v2753
        %v2755 = vand.u32 %v1647, 4294901760
        %v2756 = vsub.f32 %v1647, %v2755
        %v2757 = vand.u32 %v2756, 4294901760
        %2758 = vmatmul.f32.gmra.mxu0 %v2757
        %v2759 = vpop.f32.mrf.mxu0
        %v2760 = vadd.f32 %v2646, %v2759
        %v2761 = vand.u32 %v1650, 4294901760
        %v2762 = vsub.f32 %v1650, %v2761
        %v2763 = vand.u32 %v2762, 4294901760
        %2764 = vmatmul.f32.gmra.mxu0 %v2763
        %v2765 = vpop.f32.mrf.mxu0
        %v2766 = vadd.f32 %v2651, %v2765
        %v2767 = vand.u32 %v1653, 4294901760
        %v2768 = vsub.f32 %v1653, %v2767
        %v2769 = vand.u32 %v2768, 4294901760
        %2770 = vmatmul.f32.gmra.mxu0 %v2769
        %v2771 = vpop.f32.mrf.mxu0
        %v2772 = vadd.f32 %v2656, %v2771
        %v2773 = vand.u32 %v1656, 4294901760
        %v2774 = vsub.f32 %v1656, %v2773
        %v2775 = vand.u32 %v2774, 4294901760
        %2776 = vmatmul.f32.gmra.mxu0 %v2775
        %v2777 = vpop.f32.mrf.mxu0
        %v2778 = vadd.f32 %v2661, %v2777
        %2779 = vdwg.mxu0
        %2780 = vmatpush.msra.mxu0 0.0
        %2781 = vmatpush.msra.mxu0 0.0
        %2782 = vmatpush.msra.mxu0 0.0
        %2783 = vmatpush.msra.mxu0 0.0
        %2784 = vmatpush.msra.mxu0 0.0
        %2785 = vmatpush.msra.mxu0 0.0
        %2786 = vmatpush.msra.mxu0 0.0
        %2787 = vmatpush.msra.mxu0 0.0
        %2788 = vmatpush.msra.mxu0 0.0
        %2789 = vmatpush.msra.mxu0 0.0
        %2790 = vmatpush.msra.mxu0 0.0
        %2791 = vmatpush.msra.mxu0 0.0
        %v2792 = vand.u32 %v1577, 4294901760
        %v2793 = vsub.f32 %v1577, %v2792
        %v2794 = vand.u32 %v2793, 4294901760
        %2795 = vmatpush.msra.mxu0 %v2794
        %v2796 = vand.u32 %v1576, 4294901760
        %v2797 = vsub.f32 %v1576, %v2796
        %v2798 = vand.u32 %v2797, 4294901760
        %2799 = vmatpush.msra.mxu0 %v2798
        %v2800 = vand.u32 %v1575, 4294901760
        %v2801 = vsub.f32 %v1575, %v2800
        %v2802 = vand.u32 %v2801, 4294901760
        %2803 = vmatpush.msra.mxu0 %v2802
        %v2804 = vand.u32 %v1574, 4294901760
        %v2805 = vsub.f32 %v1574, %v2804
        %v2806 = vand.u32 %v2805, 4294901760
        %2807 = vmatpush.msra.mxu0 %v2806
        %v2808 = vand.u32 %v1611, 4294901760
        %2809 = vmatmul.f32.gmra.mxu0 %v2808
        %v2810 = vpop.f32.mrf.mxu0
        %v2811 = vadd.f32 %v2688, %v2810
        %v2812 = vand.u32 %v1614, 4294901760
        %2813 = vmatmul.f32.gmra.mxu0 %v2812
        %v2814 = vpop.f32.mrf.mxu0
        %v2815 = vadd.f32 %v2694, %v2814
        %v2816 = vand.u32 %v1617, 4294901760
        %2817 = vmatmul.f32.gmra.mxu0 %v2816
        %v2818 = vpop.f32.mrf.mxu0
        %v2819 = vadd.f32 %v2700, %v2818
        %v2820 = vand.u32 %v1620, 4294901760
        %2821 = vmatmul.f32.gmra.mxu0 %v2820
        %v2822 = vpop.f32.mrf.mxu0
        %v2823 = vadd.f32 %v2706, %v2822
        %v2824 = vand.u32 %v1623, 4294901760
        %2825 = vmatmul.f32.gmra.mxu0 %v2824
        %v2826 = vpop.f32.mrf.mxu0
        %v2827 = vadd.f32 %v2712, %v2826
        %v2828 = vand.u32 %v1626, 4294901760
        %2829 = vmatmul.f32.gmra.mxu0 %v2828
        %v2830 = vpop.f32.mrf.mxu0
        %v2831 = vadd.f32 %v2718, %v2830
        %v2832 = vand.u32 %v1629, 4294901760
        %2833 = vmatmul.f32.gmra.mxu0 %v2832
        %v2834 = vpop.f32.mrf.mxu0
        %v2835 = vadd.f32 %v2724, %v2834
        %v2836 = vand.u32 %v1632, 4294901760
        %2837 = vmatmul.f32.gmra.mxu0 %v2836
        %v2838 = vpop.f32.mrf.mxu0
        %v2839 = vadd.f32 %v2730, %v2838
        %v2840 = vand.u32 %v1635, 4294901760
        %2841 = vmatmul.f32.gmra.mxu0 %v2840
        %v2842 = vpop.f32.mrf.mxu0
        %v2843 = vadd.f32 %v2736, %v2842
        %v2844 = vand.u32 %v1638, 4294901760
        %2845 = vmatmul.f32.gmra.mxu0 %v2844
        %v2846 = vpop.f32.mrf.mxu0
        %v2847 = vadd.f32 %v2742, %v2846
        %v2848 = vand.u32 %v1641, 4294901760
        %2849 = vmatmul.f32.gmra.mxu0 %v2848
        %v2850 = vpop.f32.mrf.mxu0
        %v2851 = vadd.f32 %v2748, %v2850
        %v2852 = vand.u32 %v1644, 4294901760
        %2853 = vmatmul.f32.gmra.mxu0 %v2852
        %v2854 = vpop.f32.mrf.mxu0
        %v2855 = vadd.f32 %v2754, %v2854
        %v2856 = vand.u32 %v1647, 4294901760
        %2857 = vmatmul.f32.gmra.mxu0 %v2856
        %v2858 = vpop.f32.mrf.mxu0
        %v2859 = vadd.f32 %v2760, %v2858
        %v2860 = vand.u32 %v1650, 4294901760
        %2861 = vmatmul.f32.gmra.mxu0 %v2860
        %v2862 = vpop.f32.mrf.mxu0
        %v2863 = vadd.f32 %v2766, %v2862
        %v2864 = vand.u32 %v1653, 4294901760
        %2865 = vmatmul.f32.gmra.mxu0 %v2864
        %v2866 = vpop.f32.mrf.mxu0
        %v2867 = vadd.f32 %v2772, %v2866
        %v2868 = vand.u32 %v1656, 4294901760
        %2869 = vmatmul.f32.gmra.mxu0 %v2868
        %v2870 = vpop.f32.mrf.mxu0
        %v2871 = vadd.f32 %v2778, %v2870
        %2872 = vdwg.mxu0
        %2873 = vmatpush.msra.mxu0 0.0
        %2874 = vmatpush.msra.mxu0 0.0
        %2875 = vmatpush.msra.mxu0 0.0
        %2876 = vmatpush.msra.mxu0 0.0
        %2877 = vmatpush.msra.mxu0 0.0
        %2878 = vmatpush.msra.mxu0 0.0
        %2879 = vmatpush.msra.mxu0 0.0
        %2880 = vmatpush.msra.mxu0 0.0
        %2881 = vmatpush.msra.mxu0 0.0
        %2882 = vmatpush.msra.mxu0 0.0
        %2883 = vmatpush.msra.mxu0 0.0
        %2884 = vmatpush.msra.mxu0 0.0
        %v2885 = vand.u32 %v1577, 4294901760
        %2886 = vmatpush.msra.mxu0 %v2885
        %v2887 = vand.u32 %v1576, 4294901760
        %2888 = vmatpush.msra.mxu0 %v2887
        %v2889 = vand.u32 %v1575, 4294901760
        %2890 = vmatpush.msra.mxu0 %v2889
        %v2891 = vand.u32 %v1574, 4294901760
        %2892 = vmatpush.msra.mxu0 %v2891
        %v2893 = vand.u32 %v1611, 4294901760
        %2894 = vmatmul.f32.gmra.mxu0 %v2893
        %v2895 = vpop.f32.mrf.mxu0
        %v2896 = vadd.f32 %v2811, %v2895
        %v2897 = vand.u32 %v1614, 4294901760
        %2898 = vmatmul.f32.gmra.mxu0 %v2897
        %v2899 = vpop.f32.mrf.mxu0
        %v2900 = vadd.f32 %v2815, %v2899
        %v2901 = vand.u32 %v1617, 4294901760
        %2902 = vmatmul.f32.gmra.mxu0 %v2901
        %v2903 = vpop.f32.mrf.mxu0
        %v2904 = vadd.f32 %v2819, %v2903
        %v2905 = vand.u32 %v1620, 4294901760
        %2906 = vmatmul.f32.gmra.mxu0 %v2905
        %v2907 = vpop.f32.mrf.mxu0
        %v2908 = vadd.f32 %v2823, %v2907
        %v2909 = vand.u32 %v1623, 4294901760
        %2910 = vmatmul.f32.gmra.mxu0 %v2909
        %v2911 = vpop.f32.mrf.mxu0
        %v2912 = vadd.f32 %v2827, %v2911
        %v2913 = vand.u32 %v1626, 4294901760
        %2914 = vmatmul.f32.gmra.mxu0 %v2913
        %v2915 = vpop.f32.mrf.mxu0
        %v2916 = vadd.f32 %v2831, %v2915
        %v2917 = vand.u32 %v1629, 4294901760
        %2918 = vmatmul.f32.gmra.mxu0 %v2917
        %v2919 = vpop.f32.mrf.mxu0
        %v2920 = vadd.f32 %v2835, %v2919
        %v2921 = vand.u32 %v1632, 4294901760
        %2922 = vmatmul.f32.gmra.mxu0 %v2921
        %v2923 = vpop.f32.mrf.mxu0
        %v2924 = vadd.f32 %v2839, %v2923
        %v2925 = vand.u32 %v1635, 4294901760
        %2926 = vmatmul.f32.gmra.mxu0 %v2925
        %v2927 = vpop.f32.mrf.mxu0
        %v2928 = vadd.f32 %v2843, %v2927
        %v2929 = vand.u32 %v1638, 4294901760
        %2930 = vmatmul.f32.gmra.mxu0 %v2929
        %v2931 = vpop.f32.mrf.mxu0
        %v2932 = vadd.f32 %v2847, %v2931
        %v2933 = vand.u32 %v1641, 4294901760
        %2934 = vmatmul.f32.gmra.mxu0 %v2933
        %v2935 = vpop.f32.mrf.mxu0
        %v2936 = vadd.f32 %v2851, %v2935
        %v2937 = vand.u32 %v1644, 4294901760
        %2938 = vmatmul.f32.gmra.mxu0 %v2937
        %v2939 = vpop.f32.mrf.mxu0
        %v2940 = vadd.f32 %v2855, %v2939
        %v2941 = vand.u32 %v1647, 4294901760
        %2942 = vmatmul.f32.gmra.mxu0 %v2941
        %v2943 = vpop.f32.mrf.mxu0
        %v2944 = vadd.f32 %v2859, %v2943
        %v2945 = vand.u32 %v1650, 4294901760
        %2946 = vmatmul.f32.gmra.mxu0 %v2945
        %v2947 = vpop.f32.mrf.mxu0
        %v2948 = vadd.f32 %v2863, %v2947
        %v2949 = vand.u32 %v1653, 4294901760
        %2950 = vmatmul.f32.gmra.mxu0 %v2949
        %v2951 = vpop.f32.mrf.mxu0
        %v2952 = vadd.f32 %v2867, %v2951
        %v2953 = vand.u32 %v1656, 4294901760
        %2954 = vmatmul.f32.gmra.mxu0 %v2953
        %v2955 = vpop.f32.mrf.mxu0
        %v2956 = vadd.f32 %v2871, %v2955
        %2957 = vdwg.mxu0
        %2958 = vmatpush.msra.mxu0 0.0
        %2959 = vmatpush.msra.mxu0 0.0
        %2960 = vmatpush.msra.mxu0 0.0
        %2961 = vmatpush.msra.mxu0 0.0
        %2962 = vmatpush.msra.mxu0 0.0
        %2963 = vmatpush.msra.mxu0 0.0
        %2964 = vmatpush.msra.mxu0 0.0
        %2965 = vmatpush.msra.mxu0 0.0
        %2966 = vmatpush.msra.mxu0 0.0
        %2967 = vmatpush.msra.mxu0 0.0
        %2968 = vmatpush.msra.mxu0 0.0
        %2969 = vmatpush.msra.mxu0 0.0
        %v2970 = vand.u32 %v368, 4294901760
        %2971 = vmatpush.msra.mxu0 %v2970
        %v2972 = vand.u32 %v367, 4294901760
        %2973 = vmatpush.msra.mxu0 %v2972
        %v2974 = vand.u32 %v366, 4294901760
        %2975 = vmatpush.msra.mxu0 %v2974
        %v2976 = vand.u32 %v365, 4294901760
        %2977 = vmatpush.msra.mxu0 %v2976
        %v2978 = vand.u32 %v1611, 4294901760
        %v2979 = vsub.f32 %v1611, %v2978
        %v2980 = vand.u32 %v2979, 4294901760
        %v2981 = vsub.f32 %v2979, %v2980
        %v2982 = vand.u32 %v2981, 4294901760
        %2983 = vmatmul.f32.gmra.mxu0 %v2982
        %v2984 = vpop.f32.mrf.mxu0
        %v2985 = vadd.f32 0.0, %v2984
        %v2986 = vand.u32 %v1614, 4294901760
        %v2987 = vsub.f32 %v1614, %v2986
        %v2988 = vand.u32 %v2987, 4294901760
        %v2989 = vsub.f32 %v2987, %v2988
        %v2990 = vand.u32 %v2989, 4294901760
        %2991 = vmatmul.f32.gmra.mxu0 %v2990
        %v2992 = vpop.f32.mrf.mxu0
        %v2993 = vadd.f32 0.0, %v2992
        %v2994 = vand.u32 %v1617, 4294901760
        %v2995 = vsub.f32 %v1617, %v2994
        %v2996 = vand.u32 %v2995, 4294901760
        %v2997 = vsub.f32 %v2995, %v2996
        %v2998 = vand.u32 %v2997, 4294901760
        %2999 = vmatmul.f32.gmra.mxu0 %v2998
        %v3000 = vpop.f32.mrf.mxu0
        %v3001 = vadd.f32 0.0, %v3000
        %v3002 = vand.u32 %v1620, 4294901760
        %v3003 = vsub.f32 %v1620, %v3002
        %v3004 = vand.u32 %v3003, 4294901760
        %v3005 = vsub.f32 %v3003, %v3004
        %v3006 = vand.u32 %v3005, 4294901760
        %3007 = vmatmul.f32.gmra.mxu0 %v3006
        %v3008 = vpop.f32.mrf.mxu0
        %v3009 = vadd.f32 0.0, %v3008
        %v3010 = vand.u32 %v1623, 4294901760
        %v3011 = vsub.f32 %v1623, %v3010
        %v3012 = vand.u32 %v3011, 4294901760
        %v3013 = vsub.f32 %v3011, %v3012
        %v3014 = vand.u32 %v3013, 4294901760
        %3015 = vmatmul.f32.gmra.mxu0 %v3014
        %v3016 = vpop.f32.mrf.mxu0
        %v3017 = vadd.f32 0.0, %v3016
        %v3018 = vand.u32 %v1626, 4294901760
        %v3019 = vsub.f32 %v1626, %v3018
        %v3020 = vand.u32 %v3019, 4294901760
        %v3021 = vsub.f32 %v3019, %v3020
        %v3022 = vand.u32 %v3021, 4294901760
        %3023 = vmatmul.f32.gmra.mxu0 %v3022
        %v3024 = vpop.f32.mrf.mxu0
        %v3025 = vadd.f32 0.0, %v3024
        %v3026 = vand.u32 %v1629, 4294901760
        %v3027 = vsub.f32 %v1629, %v3026
        %v3028 = vand.u32 %v3027, 4294901760
        %v3029 = vsub.f32 %v3027, %v3028
        %v3030 = vand.u32 %v3029, 4294901760
        %3031 = vmatmul.f32.gmra.mxu0 %v3030
        %v3032 = vpop.f32.mrf.mxu0
        %v3033 = vadd.f32 0.0, %v3032
        %v3034 = vand.u32 %v1632, 4294901760
        %v3035 = vsub.f32 %v1632, %v3034
        %v3036 = vand.u32 %v3035, 4294901760
        %v3037 = vsub.f32 %v3035, %v3036
        %v3038 = vand.u32 %v3037, 4294901760
        %3039 = vmatmul.f32.gmra.mxu0 %v3038
        %v3040 = vpop.f32.mrf.mxu0
        %v3041 = vadd.f32 0.0, %v3040
        %v3042 = vand.u32 %v1635, 4294901760
        %v3043 = vsub.f32 %v1635, %v3042
        %v3044 = vand.u32 %v3043, 4294901760
        %v3045 = vsub.f32 %v3043, %v3044
        %v3046 = vand.u32 %v3045, 4294901760
        %3047 = vmatmul.f32.gmra.mxu0 %v3046
        %v3048 = vpop.f32.mrf.mxu0
        %v3049 = vadd.f32 0.0, %v3048
        %v3050 = vand.u32 %v1638, 4294901760
        %v3051 = vsub.f32 %v1638, %v3050
        %v3052 = vand.u32 %v3051, 4294901760
        %v3053 = vsub.f32 %v3051, %v3052
        %v3054 = vand.u32 %v3053, 4294901760
        %3055 = vmatmul.f32.gmra.mxu0 %v3054
        %v3056 = vpop.f32.mrf.mxu0
        %v3057 = vadd.f32 0.0, %v3056
        %v3058 = vand.u32 %v1641, 4294901760
        %v3059 = vsub.f32 %v1641, %v3058
        %v3060 = vand.u32 %v3059, 4294901760
        %v3061 = vsub.f32 %v3059, %v3060
        %v3062 = vand.u32 %v3061, 4294901760
        %3063 = vmatmul.f32.gmra.mxu0 %v3062
        %v3064 = vpop.f32.mrf.mxu0
        %v3065 = vadd.f32 0.0, %v3064
        %v3066 = vand.u32 %v1644, 4294901760
        %v3067 = vsub.f32 %v1644, %v3066
        %v3068 = vand.u32 %v3067, 4294901760
        %v3069 = vsub.f32 %v3067, %v3068
        %v3070 = vand.u32 %v3069, 4294901760
        %3071 = vmatmul.f32.gmra.mxu0 %v3070
        %v3072 = vpop.f32.mrf.mxu0
        %v3073 = vadd.f32 0.0, %v3072
        %v3074 = vand.u32 %v1647, 4294901760
        %v3075 = vsub.f32 %v1647, %v3074
        %v3076 = vand.u32 %v3075, 4294901760
        %v3077 = vsub.f32 %v3075, %v3076
        %v3078 = vand.u32 %v3077, 4294901760
        %3079 = vmatmul.f32.gmra.mxu0 %v3078
        %v3080 = vpop.f32.mrf.mxu0
        %v3081 = vadd.f32 0.0, %v3080
        %v3082 = vand.u32 %v1650, 4294901760
        %v3083 = vsub.f32 %v1650, %v3082
        %v3084 = vand.u32 %v3083, 4294901760
        %v3085 = vsub.f32 %v3083, %v3084
        %v3086 = vand.u32 %v3085, 4294901760
        %3087 = vmatmul.f32.gmra.mxu0 %v3086
        %v3088 = vpop.f32.mrf.mxu0
        %v3089 = vadd.f32 0.0, %v3088
        %v3090 = vand.u32 %v1653, 4294901760
        %v3091 = vsub.f32 %v1653, %v3090
        %v3092 = vand.u32 %v3091, 4294901760
        %v3093 = vsub.f32 %v3091, %v3092
        %v3094 = vand.u32 %v3093, 4294901760
        %3095 = vmatmul.f32.gmra.mxu0 %v3094
        %v3096 = vpop.f32.mrf.mxu0
        %v3097 = vadd.f32 0.0, %v3096
        %v3098 = vand.u32 %v1656, 4294901760
        %v3099 = vsub.f32 %v1656, %v3098
        %v3100 = vand.u32 %v3099, 4294901760
        %v3101 = vsub.f32 %v3099, %v3100
        %v3102 = vand.u32 %v3101, 4294901760
        %3103 = vmatmul.f32.gmra.mxu0 %v3102
        %v3104 = vpop.f32.mrf.mxu0
        %v3105 = vadd.f32 0.0, %v3104
        %3106 = vdwg.mxu0
        %3107 = vmatpush.msra.mxu0 0.0
        %3108 = vmatpush.msra.mxu0 0.0
        %3109 = vmatpush.msra.mxu0 0.0
        %3110 = vmatpush.msra.mxu0 0.0
        %3111 = vmatpush.msra.mxu0 0.0
        %3112 = vmatpush.msra.mxu0 0.0
        %3113 = vmatpush.msra.mxu0 0.0
        %3114 = vmatpush.msra.mxu0 0.0
        %3115 = vmatpush.msra.mxu0 0.0
        %3116 = vmatpush.msra.mxu0 0.0
        %3117 = vmatpush.msra.mxu0 0.0
        %3118 = vmatpush.msra.mxu0 0.0
        %v3119 = vand.u32 %v368, 4294901760
        %v3120 = vsub.f32 %v368, %v3119
        %v3121 = vand.u32 %v3120, 4294901760
        %v3122 = vsub.f32 %v3120, %v3121
        %v3123 = vand.u32 %v3122, 4294901760
        %3124 = vmatpush.msra.mxu0 %v3123
        %v3125 = vand.u32 %v367, 4294901760
        %v3126 = vsub.f32 %v367, %v3125
        %v3127 = vand.u32 %v3126, 4294901760
        %v3128 = vsub.f32 %v3126, %v3127
        %v3129 = vand.u32 %v3128, 4294901760
        %3130 = vmatpush.msra.mxu0 %v3129
        %v3131 = vand.u32 %v366, 4294901760
        %v3132 = vsub.f32 %v366, %v3131
        %v3133 = vand.u32 %v3132, 4294901760
        %v3134 = vsub.f32 %v3132, %v3133
        %v3135 = vand.u32 %v3134, 4294901760
        %3136 = vmatpush.msra.mxu0 %v3135
        %v3137 = vand.u32 %v365, 4294901760
        %v3138 = vsub.f32 %v365, %v3137
        %v3139 = vand.u32 %v3138, 4294901760
        %v3140 = vsub.f32 %v3138, %v3139
        %v3141 = vand.u32 %v3140, 4294901760
        %3142 = vmatpush.msra.mxu0 %v3141
        %v3143 = vand.u32 %v1611, 4294901760
        %3144 = vmatmul.f32.gmra.mxu0 %v3143
        %v3145 = vpop.f32.mrf.mxu0
        %v3146 = vadd.f32 %v2985, %v3145
        %v3147 = vand.u32 %v1614, 4294901760
        %3148 = vmatmul.f32.gmra.mxu0 %v3147
        %v3149 = vpop.f32.mrf.mxu0
        %v3150 = vadd.f32 %v2993, %v3149
        %v3151 = vand.u32 %v1617, 4294901760
        %3152 = vmatmul.f32.gmra.mxu0 %v3151
        %v3153 = vpop.f32.mrf.mxu0
        %v3154 = vadd.f32 %v3001, %v3153
        %v3155 = vand.u32 %v1620, 4294901760
        %3156 = vmatmul.f32.gmra.mxu0 %v3155
        %v3157 = vpop.f32.mrf.mxu0
        %v3158 = vadd.f32 %v3009, %v3157
        %v3159 = vand.u32 %v1623, 4294901760
        %3160 = vmatmul.f32.gmra.mxu0 %v3159
        %v3161 = vpop.f32.mrf.mxu0
        %v3162 = vadd.f32 %v3017, %v3161
        %v3163 = vand.u32 %v1626, 4294901760
        %3164 = vmatmul.f32.gmra.mxu0 %v3163
        %v3165 = vpop.f32.mrf.mxu0
        %v3166 = vadd.f32 %v3025, %v3165
        %v3167 = vand.u32 %v1629, 4294901760
        %3168 = vmatmul.f32.gmra.mxu0 %v3167
        %v3169 = vpop.f32.mrf.mxu0
        %v3170 = vadd.f32 %v3033, %v3169
        %v3171 = vand.u32 %v1632, 4294901760
        %3172 = vmatmul.f32.gmra.mxu0 %v3171
        %v3173 = vpop.f32.mrf.mxu0
        %v3174 = vadd.f32 %v3041, %v3173
        %v3175 = vand.u32 %v1635, 4294901760
        %3176 = vmatmul.f32.gmra.mxu0 %v3175
        %v3177 = vpop.f32.mrf.mxu0
        %v3178 = vadd.f32 %v3049, %v3177
        %v3179 = vand.u32 %v1638, 4294901760
        %3180 = vmatmul.f32.gmra.mxu0 %v3179
        %v3181 = vpop.f32.mrf.mxu0
        %v3182 = vadd.f32 %v3057, %v3181
        %v3183 = vand.u32 %v1641, 4294901760
        %3184 = vmatmul.f32.gmra.mxu0 %v3183
        %v3185 = vpop.f32.mrf.mxu0
        %v3186 = vadd.f32 %v3065, %v3185
        %v3187 = vand.u32 %v1644, 4294901760
        %3188 = vmatmul.f32.gmra.mxu0 %v3187
        %v3189 = vpop.f32.mrf.mxu0
        %v3190 = vadd.f32 %v3073, %v3189
        %v3191 = vand.u32 %v1647, 4294901760
        %3192 = vmatmul.f32.gmra.mxu0 %v3191
        %v3193 = vpop.f32.mrf.mxu0
        %v3194 = vadd.f32 %v3081, %v3193
        %v3195 = vand.u32 %v1650, 4294901760
        %3196 = vmatmul.f32.gmra.mxu0 %v3195
        %v3197 = vpop.f32.mrf.mxu0
        %v3198 = vadd.f32 %v3089, %v3197
        %v3199 = vand.u32 %v1653, 4294901760
        %3200 = vmatmul.f32.gmra.mxu0 %v3199
        %v3201 = vpop.f32.mrf.mxu0
        %v3202 = vadd.f32 %v3097, %v3201
        %v3203 = vand.u32 %v1656, 4294901760
        %3204 = vmatmul.f32.gmra.mxu0 %v3203
        %v3205 = vpop.f32.mrf.mxu0
        %v3206 = vadd.f32 %v3105, %v3205
        %3207 = vdwg.mxu0
        %3208 = vmatpush.msra.mxu0 0.0
        %3209 = vmatpush.msra.mxu0 0.0
        %3210 = vmatpush.msra.mxu0 0.0
        %3211 = vmatpush.msra.mxu0 0.0
        %3212 = vmatpush.msra.mxu0 0.0
        %3213 = vmatpush.msra.mxu0 0.0
        %3214 = vmatpush.msra.mxu0 0.0
        %3215 = vmatpush.msra.mxu0 0.0
        %3216 = vmatpush.msra.mxu0 0.0
        %3217 = vmatpush.msra.mxu0 0.0
        %3218 = vmatpush.msra.mxu0 0.0
        %3219 = vmatpush.msra.mxu0 0.0
        %v3220 = vand.u32 %v368, 4294901760
        %v3221 = vsub.f32 %v368, %v3220
        %3222 = vmatpush.msra.mxu0 %v3221
        %v3223 = vand.u32 %v367, 4294901760
        %v3224 = vsub.f32 %v367, %v3223
        %3225 = vmatpush.msra.mxu0 %v3224
        %v3226 = vand.u32 %v366, 4294901760
        %v3227 = vsub.f32 %v366, %v3226
        %3228 = vmatpush.msra.mxu0 %v3227
        %v3229 = vand.u32 %v365, 4294901760
        %v3230 = vsub.f32 %v365, %v3229
        %3231 = vmatpush.msra.mxu0 %v3230
        %v3232 = vand.u32 %v1611, 4294901760
        %v3233 = vsub.f32 %v1611, %v3232
        %3234 = vmatmul.f32.gmra.mxu0 %v3233
        %v3235 = vpop.f32.mrf.mxu0
        %v3236 = vadd.f32 %v3146, %v3235
        %v3237 = vand.u32 %v1614, 4294901760
        %v3238 = vsub.f32 %v1614, %v3237
        %3239 = vmatmul.f32.gmra.mxu0 %v3238
        %v3240 = vpop.f32.mrf.mxu0
        %v3241 = vadd.f32 %v3150, %v3240
        %v3242 = vand.u32 %v1617, 4294901760
        %v3243 = vsub.f32 %v1617, %v3242
        %3244 = vmatmul.f32.gmra.mxu0 %v3243
        %v3245 = vpop.f32.mrf.mxu0
        %v3246 = vadd.f32 %v3154, %v3245
        %v3247 = vand.u32 %v1620, 4294901760
        %v3248 = vsub.f32 %v1620, %v3247
        %3249 = vmatmul.f32.gmra.mxu0 %v3248
        %v3250 = vpop.f32.mrf.mxu0
        %v3251 = vadd.f32 %v3158, %v3250
        %v3252 = vand.u32 %v1623, 4294901760
        %v3253 = vsub.f32 %v1623, %v3252
        %3254 = vmatmul.f32.gmra.mxu0 %v3253
        %v3255 = vpop.f32.mrf.mxu0
        %v3256 = vadd.f32 %v3162, %v3255
        %v3257 = vand.u32 %v1626, 4294901760
        %v3258 = vsub.f32 %v1626, %v3257
        %3259 = vmatmul.f32.gmra.mxu0 %v3258
        %v3260 = vpop.f32.mrf.mxu0
        %v3261 = vadd.f32 %v3166, %v3260
        %v3262 = vand.u32 %v1629, 4294901760
        %v3263 = vsub.f32 %v1629, %v3262
        %3264 = vmatmul.f32.gmra.mxu0 %v3263
        %v3265 = vpop.f32.mrf.mxu0
        %v3266 = vadd.f32 %v3170, %v3265
        %v3267 = vand.u32 %v1632, 4294901760
        %v3268 = vsub.f32 %v1632, %v3267
        %3269 = vmatmul.f32.gmra.mxu0 %v3268
        %v3270 = vpop.f32.mrf.mxu0
        %v3271 = vadd.f32 %v3174, %v3270
        %v3272 = vand.u32 %v1635, 4294901760
        %v3273 = vsub.f32 %v1635, %v3272
        %3274 = vmatmul.f32.gmra.mxu0 %v3273
        %v3275 = vpop.f32.mrf.mxu0
        %v3276 = vadd.f32 %v3178, %v3275
        %v3277 = vand.u32 %v1638, 4294901760
        %v3278 = vsub.f32 %v1638, %v3277
        %3279 = vmatmul.f32.gmra.mxu0 %v3278
        %v3280 = vpop.f32.mrf.mxu0
        %v3281 = vadd.f32 %v3182, %v3280
        %v3282 = vand.u32 %v1641, 4294901760
        %v3283 = vsub.f32 %v1641, %v3282
        %3284 = vmatmul.f32.gmra.mxu0 %v3283
        %v3285 = vpop.f32.mrf.mxu0
        %v3286 = vadd.f32 %v3186, %v3285
        %v3287 = vand.u32 %v1644, 4294901760
        %v3288 = vsub.f32 %v1644, %v3287
        %3289 = vmatmul.f32.gmra.mxu0 %v3288
        %v3290 = vpop.f32.mrf.mxu0
        %v3291 = vadd.f32 %v3190, %v3290
        %v3292 = vand.u32 %v1647, 4294901760
        %v3293 = vsub.f32 %v1647, %v3292
        %3294 = vmatmul.f32.gmra.mxu0 %v3293
        %v3295 = vpop.f32.mrf.mxu0
        %v3296 = vadd.f32 %v3194, %v3295
        %v3297 = vand.u32 %v1650, 4294901760
        %v3298 = vsub.f32 %v1650, %v3297
        %3299 = vmatmul.f32.gmra.mxu0 %v3298
        %v3300 = vpop.f32.mrf.mxu0
        %v3301 = vadd.f32 %v3198, %v3300
        %v3302 = vand.u32 %v1653, 4294901760
        %v3303 = vsub.f32 %v1653, %v3302
        %3304 = vmatmul.f32.gmra.mxu0 %v3303
        %v3305 = vpop.f32.mrf.mxu0
        %v3306 = vadd.f32 %v3202, %v3305
        %v3307 = vand.u32 %v1656, 4294901760
        %v3308 = vsub.f32 %v1656, %v3307
        %3309 = vmatmul.f32.gmra.mxu0 %v3308
        %v3310 = vpop.f32.mrf.mxu0
        %v3311 = vadd.f32 %v3206, %v3310
        %3312 = vdwg.mxu0
        %3313 = vmatpush.msra.mxu0 0.0
        %3314 = vmatpush.msra.mxu0 0.0
        %3315 = vmatpush.msra.mxu0 0.0
        %3316 = vmatpush.msra.mxu0 0.0
        %3317 = vmatpush.msra.mxu0 0.0
        %3318 = vmatpush.msra.mxu0 0.0
        %3319 = vmatpush.msra.mxu0 0.0
        %3320 = vmatpush.msra.mxu0 0.0
        %3321 = vmatpush.msra.mxu0 0.0
        %3322 = vmatpush.msra.mxu0 0.0
        %3323 = vmatpush.msra.mxu0 0.0
        %3324 = vmatpush.msra.mxu0 0.0
        %v3325 = vand.u32 %v368, 4294901760
        %3326 = vmatpush.msra.mxu0 %v3325
        %v3327 = vand.u32 %v367, 4294901760
        %3328 = vmatpush.msra.mxu0 %v3327
        %v3329 = vand.u32 %v366, 4294901760
        %3330 = vmatpush.msra.mxu0 %v3329
        %v3331 = vand.u32 %v365, 4294901760
        %3332 = vmatpush.msra.mxu0 %v3331
        %v3333 = vand.u32 %v1611, 4294901760
        %v3334 = vsub.f32 %v1611, %v3333
        %v3335 = vand.u32 %v3334, 4294901760
        %3336 = vmatmul.f32.gmra.mxu0 %v3335
        %v3337 = vpop.f32.mrf.mxu0
        %v3338 = vadd.f32 %v3236, %v3337
        %v3339 = vand.u32 %v1614, 4294901760
        %v3340 = vsub.f32 %v1614, %v3339
        %v3341 = vand.u32 %v3340, 4294901760
        %3342 = vmatmul.f32.gmra.mxu0 %v3341
        %v3343 = vpop.f32.mrf.mxu0
        %v3344 = vadd.f32 %v3241, %v3343
        %v3345 = vand.u32 %v1617, 4294901760
        %v3346 = vsub.f32 %v1617, %v3345
        %v3347 = vand.u32 %v3346, 4294901760
        %3348 = vmatmul.f32.gmra.mxu0 %v3347
        %v3349 = vpop.f32.mrf.mxu0
        %v3350 = vadd.f32 %v3246, %v3349
        %v3351 = vand.u32 %v1620, 4294901760
        %v3352 = vsub.f32 %v1620, %v3351
        %v3353 = vand.u32 %v3352, 4294901760
        %3354 = vmatmul.f32.gmra.mxu0 %v3353
        %v3355 = vpop.f32.mrf.mxu0
        %v3356 = vadd.f32 %v3251, %v3355
        %v3357 = vand.u32 %v1623, 4294901760
        %v3358 = vsub.f32 %v1623, %v3357
        %v3359 = vand.u32 %v3358, 4294901760
        %3360 = vmatmul.f32.gmra.mxu0 %v3359
        %v3361 = vpop.f32.mrf.mxu0
        %v3362 = vadd.f32 %v3256, %v3361
        %v3363 = vand.u32 %v1626, 4294901760
        %v3364 = vsub.f32 %v1626, %v3363
        %v3365 = vand.u32 %v3364, 4294901760
        %3366 = vmatmul.f32.gmra.mxu0 %v3365
        %v3367 = vpop.f32.mrf.mxu0
        %v3368 = vadd.f32 %v3261, %v3367
        %v3369 = vand.u32 %v1629, 4294901760
        %v3370 = vsub.f32 %v1629, %v3369
        %v3371 = vand.u32 %v3370, 4294901760
        %3372 = vmatmul.f32.gmra.mxu0 %v3371
        %v3373 = vpop.f32.mrf.mxu0
        %v3374 = vadd.f32 %v3266, %v3373
        %v3375 = vand.u32 %v1632, 4294901760
        %v3376 = vsub.f32 %v1632, %v3375
        %v3377 = vand.u32 %v3376, 4294901760
        %3378 = vmatmul.f32.gmra.mxu0 %v3377
        %v3379 = vpop.f32.mrf.mxu0
        %v3380 = vadd.f32 %v3271, %v3379
        %v3381 = vand.u32 %v1635, 4294901760
        %v3382 = vsub.f32 %v1635, %v3381
        %v3383 = vand.u32 %v3382, 4294901760
        %3384 = vmatmul.f32.gmra.mxu0 %v3383
        %v3385 = vpop.f32.mrf.mxu0
        %v3386 = vadd.f32 %v3276, %v3385
        %v3387 = vand.u32 %v1638, 4294901760
        %v3388 = vsub.f32 %v1638, %v3387
        %v3389 = vand.u32 %v3388, 4294901760
        %3390 = vmatmul.f32.gmra.mxu0 %v3389
        %v3391 = vpop.f32.mrf.mxu0
        %v3392 = vadd.f32 %v3281, %v3391
        %v3393 = vand.u32 %v1641, 4294901760
        %v3394 = vsub.f32 %v1641, %v3393
        %v3395 = vand.u32 %v3394, 4294901760
        %3396 = vmatmul.f32.gmra.mxu0 %v3395
        %v3397 = vpop.f32.mrf.mxu0
        %v3398 = vadd.f32 %v3286, %v3397
        %v3399 = vand.u32 %v1644, 4294901760
        %v3400 = vsub.f32 %v1644, %v3399
        %v3401 = vand.u32 %v3400, 4294901760
        %3402 = vmatmul.f32.gmra.mxu0 %v3401
        %v3403 = vpop.f32.mrf.mxu0
        %v3404 = vadd.f32 %v3291, %v3403
        %v3405 = vand.u32 %v1647, 4294901760
        %v3406 = vsub.f32 %v1647, %v3405
        %v3407 = vand.u32 %v3406, 4294901760
        %3408 = vmatmul.f32.gmra.mxu0 %v3407
        %v3409 = vpop.f32.mrf.mxu0
        %v3410 = vadd.f32 %v3296, %v3409
        %v3411 = vand.u32 %v1650, 4294901760
        %v3412 = vsub.f32 %v1650, %v3411
        %v3413 = vand.u32 %v3412, 4294901760
        %3414 = vmatmul.f32.gmra.mxu0 %v3413
        %v3415 = vpop.f32.mrf.mxu0
        %v3416 = vadd.f32 %v3301, %v3415
        %v3417 = vand.u32 %v1653, 4294901760
        %v3418 = vsub.f32 %v1653, %v3417
        %v3419 = vand.u32 %v3418, 4294901760
        %3420 = vmatmul.f32.gmra.mxu0 %v3419
        %v3421 = vpop.f32.mrf.mxu0
        %v3422 = vadd.f32 %v3306, %v3421
        %v3423 = vand.u32 %v1656, 4294901760
        %v3424 = vsub.f32 %v1656, %v3423
        %v3425 = vand.u32 %v3424, 4294901760
        %3426 = vmatmul.f32.gmra.mxu0 %v3425
        %v3427 = vpop.f32.mrf.mxu0
        %v3428 = vadd.f32 %v3311, %v3427
        %3429 = vdwg.mxu0
        %3430 = vmatpush.msra.mxu0 0.0
        %3431 = vmatpush.msra.mxu0 0.0
        %3432 = vmatpush.msra.mxu0 0.0
        %3433 = vmatpush.msra.mxu0 0.0
        %3434 = vmatpush.msra.mxu0 0.0
        %3435 = vmatpush.msra.mxu0 0.0
        %3436 = vmatpush.msra.mxu0 0.0
        %3437 = vmatpush.msra.mxu0 0.0
        %3438 = vmatpush.msra.mxu0 0.0
        %3439 = vmatpush.msra.mxu0 0.0
        %3440 = vmatpush.msra.mxu0 0.0
        %3441 = vmatpush.msra.mxu0 0.0
        %v3442 = vand.u32 %v368, 4294901760
        %v3443 = vsub.f32 %v368, %v3442
        %v3444 = vand.u32 %v3443, 4294901760
        %3445 = vmatpush.msra.mxu0 %v3444
        %v3446 = vand.u32 %v367, 4294901760
        %v3447 = vsub.f32 %v367, %v3446
        %v3448 = vand.u32 %v3447, 4294901760
        %3449 = vmatpush.msra.mxu0 %v3448
        %v3450 = vand.u32 %v366, 4294901760
        %v3451 = vsub.f32 %v366, %v3450
        %v3452 = vand.u32 %v3451, 4294901760
        %3453 = vmatpush.msra.mxu0 %v3452
        %v3454 = vand.u32 %v365, 4294901760
        %v3455 = vsub.f32 %v365, %v3454
        %v3456 = vand.u32 %v3455, 4294901760
        %3457 = vmatpush.msra.mxu0 %v3456
        %v3458 = vand.u32 %v1611, 4294901760
        %3459 = vmatmul.f32.gmra.mxu0 %v3458
        %v3460 = vpop.f32.mrf.mxu0
        %v3461 = vadd.f32 %v3338, %v3460
        %v3462 = vand.u32 %v1614, 4294901760
        %3463 = vmatmul.f32.gmra.mxu0 %v3462
        %v3464 = vpop.f32.mrf.mxu0
        %v3465 = vadd.f32 %v3344, %v3464
        %v3466 = vand.u32 %v1617, 4294901760
        %3467 = vmatmul.f32.gmra.mxu0 %v3466
        %v3468 = vpop.f32.mrf.mxu0
        %v3469 = vadd.f32 %v3350, %v3468
        %v3470 = vand.u32 %v1620, 4294901760
        %3471 = vmatmul.f32.gmra.mxu0 %v3470
        %v3472 = vpop.f32.mrf.mxu0
        %v3473 = vadd.f32 %v3356, %v3472
        %v3474 = vand.u32 %v1623, 4294901760
        %3475 = vmatmul.f32.gmra.mxu0 %v3474
        %v3476 = vpop.f32.mrf.mxu0
        %v3477 = vadd.f32 %v3362, %v3476
        %v3478 = vand.u32 %v1626, 4294901760
        %3479 = vmatmul.f32.gmra.mxu0 %v3478
        %v3480 = vpop.f32.mrf.mxu0
        %v3481 = vadd.f32 %v3368, %v3480
        %v3482 = vand.u32 %v1629, 4294901760
        %3483 = vmatmul.f32.gmra.mxu0 %v3482
        %v3484 = vpop.f32.mrf.mxu0
        %v3485 = vadd.f32 %v3374, %v3484
        %v3486 = vand.u32 %v1632, 4294901760
        %3487 = vmatmul.f32.gmra.mxu0 %v3486
        %v3488 = vpop.f32.mrf.mxu0
        %v3489 = vadd.f32 %v3380, %v3488
        %v3490 = vand.u32 %v1635, 4294901760
        %3491 = vmatmul.f32.gmra.mxu0 %v3490
        %v3492 = vpop.f32.mrf.mxu0
        %v3493 = vadd.f32 %v3386, %v3492
        %v3494 = vand.u32 %v1638, 4294901760
        %3495 = vmatmul.f32.gmra.mxu0 %v3494
        %v3496 = vpop.f32.mrf.mxu0
        %v3497 = vadd.f32 %v3392, %v3496
        %v3498 = vand.u32 %v1641, 4294901760
        %3499 = vmatmul.f32.gmra.mxu0 %v3498
        %v3500 = vpop.f32.mrf.mxu0
        %v3501 = vadd.f32 %v3398, %v3500
        %v3502 = vand.u32 %v1644, 4294901760
        %3503 = vmatmul.f32.gmra.mxu0 %v3502
        %v3504 = vpop.f32.mrf.mxu0
        %v3505 = vadd.f32 %v3404, %v3504
        %v3506 = vand.u32 %v1647, 4294901760
        %3507 = vmatmul.f32.gmra.mxu0 %v3506
        %v3508 = vpop.f32.mrf.mxu0
        %v3509 = vadd.f32 %v3410, %v3508
        %v3510 = vand.u32 %v1650, 4294901760
        %3511 = vmatmul.f32.gmra.mxu0 %v3510
        %v3512 = vpop.f32.mrf.mxu0
        %v3513 = vadd.f32 %v3416, %v3512
        %v3514 = vand.u32 %v1653, 4294901760
        %3515 = vmatmul.f32.gmra.mxu0 %v3514
        %v3516 = vpop.f32.mrf.mxu0
        %v3517 = vadd.f32 %v3422, %v3516
        %v3518 = vand.u32 %v1656, 4294901760
        %3519 = vmatmul.f32.gmra.mxu0 %v3518
        %v3520 = vpop.f32.mrf.mxu0
        %v3521 = vadd.f32 %v3428, %v3520
        %3522 = vdwg.mxu0
        %3523 = vmatpush.msra.mxu0 0.0
        %3524 = vmatpush.msra.mxu0 0.0
        %3525 = vmatpush.msra.mxu0 0.0
        %3526 = vmatpush.msra.mxu0 0.0
        %3527 = vmatpush.msra.mxu0 0.0
        %3528 = vmatpush.msra.mxu0 0.0
        %3529 = vmatpush.msra.mxu0 0.0
        %3530 = vmatpush.msra.mxu0 0.0
        %3531 = vmatpush.msra.mxu0 0.0
        %3532 = vmatpush.msra.mxu0 0.0
        %3533 = vmatpush.msra.mxu0 0.0
        %3534 = vmatpush.msra.mxu0 0.0
        %v3535 = vand.u32 %v368, 4294901760
        %3536 = vmatpush.msra.mxu0 %v3535
        %v3537 = vand.u32 %v367, 4294901760
        %3538 = vmatpush.msra.mxu0 %v3537
        %v3539 = vand.u32 %v366, 4294901760
        %3540 = vmatpush.msra.mxu0 %v3539
        %v3541 = vand.u32 %v365, 4294901760
        %3542 = vmatpush.msra.mxu0 %v3541
        %v3543 = vand.u32 %v1611, 4294901760
        %3544 = vmatmul.f32.gmra.mxu0 %v3543
        %v3545 = vpop.f32.mrf.mxu0
        %v3546 = vadd.f32 %v3461, %v3545
        %v3547 = vand.u32 %v1614, 4294901760
        %3548 = vmatmul.f32.gmra.mxu0 %v3547
        %v3549 = vpop.f32.mrf.mxu0
        %v3550 = vadd.f32 %v3465, %v3549
        %v3551 = vand.u32 %v1617, 4294901760
        %3552 = vmatmul.f32.gmra.mxu0 %v3551
        %v3553 = vpop.f32.mrf.mxu0
        %v3554 = vadd.f32 %v3469, %v3553
        %v3555 = vand.u32 %v1620, 4294901760
        %3556 = vmatmul.f32.gmra.mxu0 %v3555
        %v3557 = vpop.f32.mrf.mxu0
        %v3558 = vadd.f32 %v3473, %v3557
        %v3559 = vand.u32 %v1623, 4294901760
        %3560 = vmatmul.f32.gmra.mxu0 %v3559
        %v3561 = vpop.f32.mrf.mxu0
        %v3562 = vadd.f32 %v3477, %v3561
        %v3563 = vand.u32 %v1626, 4294901760
        %3564 = vmatmul.f32.gmra.mxu0 %v3563
        %v3565 = vpop.f32.mrf.mxu0
        %v3566 = vadd.f32 %v3481, %v3565
        %v3567 = vand.u32 %v1629, 4294901760
        %3568 = vmatmul.f32.gmra.mxu0 %v3567
        %v3569 = vpop.f32.mrf.mxu0
        %v3570 = vadd.f32 %v3485, %v3569
        %v3571 = vand.u32 %v1632, 4294901760
        %3572 = vmatmul.f32.gmra.mxu0 %v3571
        %v3573 = vpop.f32.mrf.mxu0
        %v3574 = vadd.f32 %v3489, %v3573
        %v3575 = vand.u32 %v1635, 4294901760
        %3576 = vmatmul.f32.gmra.mxu0 %v3575
        %v3577 = vpop.f32.mrf.mxu0
        %v3578 = vadd.f32 %v3493, %v3577
        %v3579 = vand.u32 %v1638, 4294901760
        %3580 = vmatmul.f32.gmra.mxu0 %v3579
        %v3581 = vpop.f32.mrf.mxu0
        %v3582 = vadd.f32 %v3497, %v3581
        %v3583 = vand.u32 %v1641, 4294901760
        %3584 = vmatmul.f32.gmra.mxu0 %v3583
        %v3585 = vpop.f32.mrf.mxu0
        %v3586 = vadd.f32 %v3501, %v3585
        %v3587 = vand.u32 %v1644, 4294901760
        %3588 = vmatmul.f32.gmra.mxu0 %v3587
        %v3589 = vpop.f32.mrf.mxu0
        %v3590 = vadd.f32 %v3505, %v3589
        %v3591 = vand.u32 %v1647, 4294901760
        %3592 = vmatmul.f32.gmra.mxu0 %v3591
        %v3593 = vpop.f32.mrf.mxu0
        %v3594 = vadd.f32 %v3509, %v3593
        %v3595 = vand.u32 %v1650, 4294901760
        %3596 = vmatmul.f32.gmra.mxu0 %v3595
        %v3597 = vpop.f32.mrf.mxu0
        %v3598 = vadd.f32 %v3513, %v3597
        %v3599 = vand.u32 %v1653, 4294901760
        %3600 = vmatmul.f32.gmra.mxu0 %v3599
        %v3601 = vpop.f32.mrf.mxu0
        %v3602 = vadd.f32 %v3517, %v3601
        %v3603 = vand.u32 %v1656, 4294901760
        %3604 = vmatmul.f32.gmra.mxu0 %v3603
        %v3605 = vpop.f32.mrf.mxu0
        %v3606 = vadd.f32 %v3521, %v3605
        %3607 = vdwg.mxu0
        %s3608 = sld [smem:[#allocation8]]
        %v3609 = vstv %s3608
        %v3610 = vadd.f32 %v2246, %v3609
        %v3611 = vadd.f32 %v2250, %v3609
        %v3612 = vadd.f32 %v2254, %v3609
        %v3613 = vadd.f32 %v2258, %v3609
        %v3614 = vadd.f32 %v2262, %v3609
        %v3615 = vadd.f32 %v2266, %v3609
        %v3616 = vadd.f32 %v2270, %v3609
        %v3617 = vadd.f32 %v2274, %v3609
        %v3618 = vadd.f32 %v2278, %v3609
        %v3619 = vadd.f32 %v2282, %v3609
        %v3620 = vadd.f32 %v2286, %v3609
        %v3621 = vadd.f32 %v2290, %v3609
        %v3622 = vadd.f32 %v2294, %v3609
        %v3623 = vadd.f32 %v2298, %v3609
        %v3624 = vadd.f32 %v2302, %v3609
        %v3625 = vadd.f32 %v2306, %v3609
        %3626 = vst [vmem:[%s304] sm:$0xff] %v3610
        %3627 = vst [vmem:[%s304 + $0x8] sm:$0xff] %v3611
        %3628 = vst [vmem:[%s304 + $0x10] sm:$0xff] %v3612
        %3629 = vst [vmem:[%s304 + $0x18] sm:$0xff] %v3613
        %3630 = vst [vmem:[%s304 + $0x20] sm:$0xff] %v3614
        %3631 = vst [vmem:[%s304 + $0x28] sm:$0xff] %v3615
        %3632 = vst [vmem:[%s304 + $0x30] sm:$0xff] %v3616
        %3633 = vst [vmem:[%s304 + $0x38] sm:$0xff] %v3617
        %3634 = vst [vmem:[%s304 + $0x40] sm:$0xff] %v3618
        %3635 = vst [vmem:[%s304 + $0x48] sm:$0xff] %v3619
        %3636 = vst [vmem:[%s304 + $0x50] sm:$0xff] %v3620
        %3637 = vst [vmem:[%s304 + $0x58] sm:$0xff] %v3621
        %3638 = vst [vmem:[%s304 + $0x60] sm:$0xff] %v3622
        %3639 = vst [vmem:[%s304 + $0x68] sm:$0xff] %v3623
        %3640 = vst [vmem:[%s304 + $0x70] sm:$0xff] %v3624
        %3641 = vst [vmem:[%s304 + $0x78] sm:$0xff] %v3625
        %s3642 = sld [smem:[#allocation8 + $0x1]]
        %v3643 = vstv %s3642
        %v3644 = vadd.f32 %v2896, %v3643
        %v3645 = vadd.f32 %v2900, %v3643
        %v3646 = vadd.f32 %v2904, %v3643
        %v3647 = vadd.f32 %v2908, %v3643
        %v3648 = vadd.f32 %v2912, %v3643
        %v3649 = vadd.f32 %v2916, %v3643
        %v3650 = vadd.f32 %v2920, %v3643
        %v3651 = vadd.f32 %v2924, %v3643
        %v3652 = vadd.f32 %v2928, %v3643
        %v3653 = vadd.f32 %v2932, %v3643
        %v3654 = vadd.f32 %v2936, %v3643
        %v3655 = vadd.f32 %v2940, %v3643
        %v3656 = vadd.f32 %v2944, %v3643
        %v3657 = vadd.f32 %v2948, %v3643
        %v3658 = vadd.f32 %v2952, %v3643
        %v3659 = vadd.f32 %v2956, %v3643
        %s3660 = scalar_lea.vmem %s304, 128 [#allocation9]
        %3661 = vst [vmem:[%s3660] sm:$0xff] %v3644
        %3662 = vst [vmem:[%s3660 + $0x8] sm:$0xff] %v3645
        %3663 = vst [vmem:[%s3660 + $0x10] sm:$0xff] %v3646
        %3664 = vst [vmem:[%s3660 + $0x18] sm:$0xff] %v3647
        %3665 = vst [vmem:[%s3660 + $0x20] sm:$0xff] %v3648
        %3666 = vst [vmem:[%s3660 + $0x28] sm:$0xff] %v3649
        %3667 = vst [vmem:[%s3660 + $0x30] sm:$0xff] %v3650
        %3668 = vst [vmem:[%s3660 + $0x38] sm:$0xff] %v3651
        %3669 = vst [vmem:[%s3660 + $0x40] sm:$0xff] %v3652
        %3670 = vst [vmem:[%s3660 + $0x48] sm:$0xff] %v3653
        %3671 = vst [vmem:[%s3660 + $0x50] sm:$0xff] %v3654
        %3672 = vst [vmem:[%s3660 + $0x58] sm:$0xff] %v3655
        %3673 = vst [vmem:[%s3660 + $0x60] sm:$0xff] %v3656
        %3674 = vst [vmem:[%s3660 + $0x68] sm:$0xff] %v3657
        %3675 = vst [vmem:[%s3660 + $0x70] sm:$0xff] %v3658
        %3676 = vst [vmem:[%s3660 + $0x78] sm:$0xff] %v3659
        %3678 = vset.pattern.permute.xlu0 0
        %3679 = vperm.xlu0 %3678, %v1518
        %v3680 = vpop.permute.xlu0 %3679
        %3683 = vset.pattern.permute.xlu0 0
        %3684 = vperm.xlu0 %3683, %v1519
        %v3685 = vpop.permute.xlu0 %3684
        %3688 = vset.pattern.permute.xlu0 0
        %3689 = vperm.xlu0 %3688, %v1520
        %v3690 = vpop.permute.xlu0 %3689
        %3693 = vset.pattern.permute.xlu0 0
        %3694 = vperm.xlu0 %3693, %v1521
        %v3695 = vpop.permute.xlu0 %3694
        %3698 = vset.pattern.permute.xlu0 0
        %3699 = vperm.xlu0 %3698, %v1522
        %v3700 = vpop.permute.xlu0 %3699
        %3703 = vset.pattern.permute.xlu0 0
        %3704 = vperm.xlu0 %3703, %v1523
        %v3705 = vpop.permute.xlu0 %3704
        %3708 = vset.pattern.permute.xlu0 0
        %3709 = vperm.xlu0 %3708, %v1524
        %v3710 = vpop.permute.xlu0 %3709
        %3713 = vset.pattern.permute.xlu0 0
        %3714 = vperm.xlu0 %3713, %v1525
        %v3715 = vpop.permute.xlu0 %3714
        %3718 = vset.pattern.permute.xlu0 0
        %3719 = vperm.xlu0 %3718, %v1526
        %v3720 = vpop.permute.xlu0 %3719
        %3723 = vset.pattern.permute.xlu0 0
        %3724 = vperm.xlu0 %3723, %v1527
        %v3725 = vpop.permute.xlu0 %3724
        %3728 = vset.pattern.permute.xlu0 0
        %3729 = vperm.xlu0 %3728, %v1528
        %v3730 = vpop.permute.xlu0 %3729
        %3733 = vset.pattern.permute.xlu0 0
        %3734 = vperm.xlu0 %3733, %v1529
        %v3735 = vpop.permute.xlu0 %3734
        %3738 = vset.pattern.permute.xlu0 0
        %3739 = vperm.xlu0 %3738, %v1530
        %v3740 = vpop.permute.xlu0 %3739
        %3743 = vset.pattern.permute.xlu0 0
        %3744 = vperm.xlu0 %3743, %v1531
        %v3745 = vpop.permute.xlu0 %3744
        %3748 = vset.pattern.permute.xlu0 0
        %3749 = vperm.xlu0 %3748, %v1532
        %v3750 = vpop.permute.xlu0 %3749
        %3753 = vset.pattern.permute.xlu0 0
        %3754 = vperm.xlu0 %3753, %v1533
        %v3755 = vpop.permute.xlu0 %3754
        %v3757 = vadd.f32 %v3680, %v370
        %v3758 = vadd.f32 %v3685, %v370
        %v3759 = vadd.f32 %v3690, %v370
        %v3760 = vadd.f32 %v3695, %v370
        %v3761 = vadd.f32 %v3700, %v370
        %v3762 = vadd.f32 %v3705, %v370
        %v3763 = vadd.f32 %v3710, %v370
        %v3764 = vadd.f32 %v3715, %v370
        %v3765 = vadd.f32 %v3720, %v370
        %v3766 = vadd.f32 %v3725, %v370
        %v3767 = vadd.f32 %v3730, %v370
        %v3768 = vadd.f32 %v3735, %v370
        %v3769 = vadd.f32 %v3740, %v370
        %v3770 = vadd.f32 %v3745, %v370
        %v3771 = vadd.f32 %v3750, %v370
        %v3772 = vadd.f32 %v3755, %v370
        %v3773 = vmul.f32 %v1276, 2.0
        %v3774 = vmul.f32 %v1291, 2.0
        %v3775 = vmul.f32 %v1306, 2.0
        %v3776 = vmul.f32 %v1321, 2.0
        %v3777 = vmul.f32 %v1336, 2.0
        %v3778 = vmul.f32 %v1351, 2.0
        %v3779 = vmul.f32 %v1366, 2.0
        %v3780 = vmul.f32 %v1381, 2.0
        %v3781 = vmul.f32 %v1396, 2.0
        %v3782 = vmul.f32 %v1411, 2.0
        %v3783 = vmul.f32 %v1426, 2.0
        %v3784 = vmul.f32 %v1441, 2.0
        %v3785 = vmul.f32 %v1456, 2.0
        %v3786 = vmul.f32 %v1471, 2.0
        %v3787 = vmul.f32 %v1486, 2.0
        %v3788 = vmul.f32 %v1501, 2.0
        %3790 = vset.pattern.permute.xlu0 0
        %3791 = vperm.xlu0 %3790, %v3773
        %v3792 = vpop.permute.xlu0 %3791
        %3795 = vset.pattern.permute.xlu0 0
        %3796 = vperm.xlu0 %3795, %v3774
        %v3797 = vpop.permute.xlu0 %3796
        %3800 = vset.pattern.permute.xlu0 0
        %3801 = vperm.xlu0 %3800, %v3775
        %v3802 = vpop.permute.xlu0 %3801
        %3805 = vset.pattern.permute.xlu0 0
        %3806 = vperm.xlu0 %3805, %v3776
        %v3807 = vpop.permute.xlu0 %3806
        %3810 = vset.pattern.permute.xlu0 0
        %3811 = vperm.xlu0 %3810, %v3777
        %v3812 = vpop.permute.xlu0 %3811
        %3815 = vset.pattern.permute.xlu0 0
        %3816 = vperm.xlu0 %3815, %v3778
        %v3817 = vpop.permute.xlu0 %3816
        %3820 = vset.pattern.permute.xlu0 0
        %3821 = vperm.xlu0 %3820, %v3779
        %v3822 = vpop.permute.xlu0 %3821
        %3825 = vset.pattern.permute.xlu0 0
        %3826 = vperm.xlu0 %3825, %v3780
        %v3827 = vpop.permute.xlu0 %3826
        %3830 = vset.pattern.permute.xlu0 0
        %3831 = vperm.xlu0 %3830, %v3781
        %v3832 = vpop.permute.xlu0 %3831
        %3835 = vset.pattern.permute.xlu0 0
        %3836 = vperm.xlu0 %3835, %v3782
        %v3837 = vpop.permute.xlu0 %3836
        %3840 = vset.pattern.permute.xlu0 0
        %3841 = vperm.xlu0 %3840, %v3783
        %v3842 = vpop.permute.xlu0 %3841
        %3845 = vset.pattern.permute.xlu0 0
        %3846 = vperm.xlu0 %3845, %v3784
        %v3847 = vpop.permute.xlu0 %3846
        %3850 = vset.pattern.permute.xlu0 0
        %3851 = vperm.xlu0 %3850, %v3785
        %v3852 = vpop.permute.xlu0 %3851
        %3855 = vset.pattern.permute.xlu0 0
        %3856 = vperm.xlu0 %3855, %v3786
        %v3857 = vpop.permute.xlu0 %3856
        %3860 = vset.pattern.permute.xlu0 0
        %3861 = vperm.xlu0 %3860, %v3787
        %v3862 = vpop.permute.xlu0 %3861
        %3865 = vset.pattern.permute.xlu0 0
        %3866 = vperm.xlu0 %3865, %v3788
        %v3867 = vpop.permute.xlu0 %3866
        %v3869 = vmul.f32 %v3792, %v3546
        %v3870 = vmul.f32 %v3797, %v3550
        %v3871 = vmul.f32 %v3802, %v3554
        %v3872 = vmul.f32 %v3807, %v3558
        %v3873 = vmul.f32 %v3812, %v3562
        %v3874 = vmul.f32 %v3817, %v3566
        %v3875 = vmul.f32 %v3822, %v3570
        %v3876 = vmul.f32 %v3827, %v3574
        %v3877 = vmul.f32 %v3832, %v3578
        %v3878 = vmul.f32 %v3837, %v3582
        %v3879 = vmul.f32 %v3842, %v3586
        %v3880 = vmul.f32 %v3847, %v3590
        %v3881 = vmul.f32 %v3852, %v3594
        %v3882 = vmul.f32 %v3857, %v3598
        %v3883 = vmul.f32 %v3862, %v3602
        %v3884 = vmul.f32 %v3867, %v3606
        %v3885 = vsub.f32 %v3757, %v3869
        %v3886 = vsub.f32 %v3758, %v3870
        %v3887 = vsub.f32 %v3759, %v3871
        %v3888 = vsub.f32 %v3760, %v3872
        %v3889 = vsub.f32 %v3761, %v3873
        %v3890 = vsub.f32 %v3762, %v3874
        %v3891 = vsub.f32 %v3763, %v3875
        %v3892 = vsub.f32 %v3764, %v3876
        %v3893 = vsub.f32 %v3765, %v3877
        %v3894 = vsub.f32 %v3766, %v3878
        %v3895 = vsub.f32 %v3767, %v3879
        %v3896 = vsub.f32 %v3768, %v3880
        %v3897 = vsub.f32 %v3769, %v3881
        %v3898 = vsub.f32 %v3770, %v3882
        %v3899 = vsub.f32 %v3771, %v3883
        %v3900 = vsub.f32 %v3772, %v3884
        %v3901 = vmax.f32 %v3885, 0.0
        %v3902 = vmax.f32 %v3886, 0.0
        %v3903 = vmax.f32 %v3887, 0.0
        %v3904 = vmax.f32 %v3888, 0.0
        %v3905 = vmax.f32 %v3889, 0.0
        %v3906 = vmax.f32 %v3890, 0.0
        %v3907 = vmax.f32 %v3891, 0.0
        %v3908 = vmax.f32 %v3892, 0.0
        %v3909 = vmax.f32 %v3893, 0.0
        %v3910 = vmax.f32 %v3894, 0.0
        %v3911 = vmax.f32 %v3895, 0.0
        %v3912 = vmax.f32 %v3896, 0.0
        %v3913 = vmax.f32 %v3897, 0.0
        %v3914 = vmax.f32 %v3898, 0.0
        %v3915 = vmax.f32 %v3899, 0.0
        %v3916 = vmax.f32 %v3900, 0.0
        %v3917 = vrsqrt.pop %v3901
        %v3918 = vmul.f32 %v3917, %v3901
        %v3919 = vmul.f32 %v3918, %v3917
        %v3920 = vmul.f32 0.5, %v3919
        %v3921 = vsub.f32 1.5, %v3920
        %v3922 = vmul.f32 %v3917, %v3921
        %v3923 = vmul.f32 %v3901, %v3922
        %vm3924 = vcmp.eq.f32.partialorder %v3901, inf
        %v3925 = vsel %vm3924, %v3901, %v3923
        %vm3926 = vcmp.eq.f32.partialorder %v3901, 0.0
        %v3927 = vand.u32 %v3901, 2147483648
        %v3928 = vsel %vm3926, %v3927, %v3925
        %v3929 = vrsqrt.pop %v3902
        %v3930 = vmul.f32 %v3929, %v3902
        %v3931 = vmul.f32 %v3930, %v3929
        %v3932 = vmul.f32 0.5, %v3931
        %v3933 = vsub.f32 1.5, %v3932
        %v3934 = vmul.f32 %v3929, %v3933
        %v3935 = vmul.f32 %v3902, %v3934
        %vm3936 = vcmp.eq.f32.partialorder %v3902, inf
        %v3937 = vsel %vm3936, %v3902, %v3935
        %vm3938 = vcmp.eq.f32.partialorder %v3902, 0.0
        %v3939 = vand.u32 %v3902, 2147483648
        %v3940 = vsel %vm3938, %v3939, %v3937
        %v3941 = vrsqrt.pop %v3903
        %v3942 = vmul.f32 %v3941, %v3903
        %v3943 = vmul.f32 %v3942, %v3941
        %v3944 = vmul.f32 0.5, %v3943
        %v3945 = vsub.f32 1.5, %v3944
        %v3946 = vmul.f32 %v3941, %v3945
        %v3947 = vmul.f32 %v3903, %v3946
        %vm3948 = vcmp.eq.f32.partialorder %v3903, inf
        %v3949 = vsel %vm3948, %v3903, %v3947
        %vm3950 = vcmp.eq.f32.partialorder %v3903, 0.0
        %v3951 = vand.u32 %v3903, 2147483648
        %v3952 = vsel %vm3950, %v3951, %v3949
        %v3953 = vrsqrt.pop %v3904
        %v3954 = vmul.f32 %v3953, %v3904
        %v3955 = vmul.f32 %v3954, %v3953
        %v3956 = vmul.f32 0.5, %v3955
        %v3957 = vsub.f32 1.5, %v3956
        %v3958 = vmul.f32 %v3953, %v3957
        %v3959 = vmul.f32 %v3904, %v3958
        %vm3960 = vcmp.eq.f32.partialorder %v3904, inf
        %v3961 = vsel %vm3960, %v3904, %v3959
        %vm3962 = vcmp.eq.f32.partialorder %v3904, 0.0
        %v3963 = vand.u32 %v3904, 2147483648
        %v3964 = vsel %vm3962, %v3963, %v3961
        %v3965 = vrsqrt.pop %v3905
        %v3966 = vmul.f32 %v3965, %v3905
        %v3967 = vmul.f32 %v3966, %v3965
        %v3968 = vmul.f32 0.5, %v3967
        %v3969 = vsub.f32 1.5, %v3968
        %v3970 = vmul.f32 %v3965, %v3969
        %v3971 = vmul.f32 %v3905, %v3970
        %vm3972 = vcmp.eq.f32.partialorder %v3905, inf
        %v3973 = vsel %vm3972, %v3905, %v3971
        %vm3974 = vcmp.eq.f32.partialorder %v3905, 0.0
        %v3975 = vand.u32 %v3905, 2147483648
        %v3976 = vsel %vm3974, %v3975, %v3973
        %v3977 = vrsqrt.pop %v3906
        %v3978 = vmul.f32 %v3977, %v3906
        %v3979 = vmul.f32 %v3978, %v3977
        %v3980 = vmul.f32 0.5, %v3979
        %v3981 = vsub.f32 1.5, %v3980
        %v3982 = vmul.f32 %v3977, %v3981
        %v3983 = vmul.f32 %v3906, %v3982
        %vm3984 = vcmp.eq.f32.partialorder %v3906, inf
        %v3985 = vsel %vm3984, %v3906, %v3983
        %vm3986 = vcmp.eq.f32.partialorder %v3906, 0.0
        %v3987 = vand.u32 %v3906, 2147483648
        %v3988 = vsel %vm3986, %v3987, %v3985
        %v3989 = vrsqrt.pop %v3907
        %v3990 = vmul.f32 %v3989, %v3907
        %v3991 = vmul.f32 %v3990, %v3989
        %v3992 = vmul.f32 0.5, %v3991
        %v3993 = vsub.f32 1.5, %v3992
        %v3994 = vmul.f32 %v3989, %v3993
        %v3995 = vmul.f32 %v3907, %v3994
        %vm3996 = vcmp.eq.f32.partialorder %v3907, inf
        %v3997 = vsel %vm3996, %v3907, %v3995
        %vm3998 = vcmp.eq.f32.partialorder %v3907, 0.0
        %v3999 = vand.u32 %v3907, 2147483648
        %v4000 = vsel %vm3998, %v3999, %v3997
        %v4001 = vrsqrt.pop %v3908
        %v4002 = vmul.f32 %v4001, %v3908
        %v4003 = vmul.f32 %v4002, %v4001
        %v4004 = vmul.f32 0.5, %v4003
        %v4005 = vsub.f32 1.5, %v4004
        %v4006 = vmul.f32 %v4001, %v4005
        %v4007 = vmul.f32 %v3908, %v4006
        %vm4008 = vcmp.eq.f32.partialorder %v3908, inf
        %v4009 = vsel %vm4008, %v3908, %v4007
        %vm4010 = vcmp.eq.f32.partialorder %v3908, 0.0
        %v4011 = vand.u32 %v3908, 2147483648
        %v4012 = vsel %vm4010, %v4011, %v4009
        %v4013 = vrsqrt.pop %v3909
        %v4014 = vmul.f32 %v4013, %v3909
        %v4015 = vmul.f32 %v4014, %v4013
        %v4016 = vmul.f32 0.5, %v4015
        %v4017 = vsub.f32 1.5, %v4016
        %v4018 = vmul.f32 %v4013, %v4017
        %v4019 = vmul.f32 %v3909, %v4018
        %vm4020 = vcmp.eq.f32.partialorder %v3909, inf
        %v4021 = vsel %vm4020, %v3909, %v4019
        %vm4022 = vcmp.eq.f32.partialorder %v3909, 0.0
        %v4023 = vand.u32 %v3909, 2147483648
        %v4024 = vsel %vm4022, %v4023, %v4021
        %v4025 = vrsqrt.pop %v3910
        %v4026 = vmul.f32 %v4025, %v3910
        %v4027 = vmul.f32 %v4026, %v4025
        %v4028 = vmul.f32 0.5, %v4027
        %v4029 = vsub.f32 1.5, %v4028
        %v4030 = vmul.f32 %v4025, %v4029
        %v4031 = vmul.f32 %v3910, %v4030
        %vm4032 = vcmp.eq.f32.partialorder %v3910, inf
        %v4033 = vsel %vm4032, %v3910, %v4031
        %vm4034 = vcmp.eq.f32.partialorder %v3910, 0.0
        %v4035 = vand.u32 %v3910, 2147483648
        %v4036 = vsel %vm4034, %v4035, %v4033
        %v4037 = vrsqrt.pop %v3911
        %v4038 = vmul.f32 %v4037, %v3911
        %v4039 = vmul.f32 %v4038, %v4037
        %v4040 = vmul.f32 0.5, %v4039
        %v4041 = vsub.f32 1.5, %v4040
        %v4042 = vmul.f32 %v4037, %v4041
        %v4043 = vmul.f32 %v3911, %v4042
        %vm4044 = vcmp.eq.f32.partialorder %v3911, inf
        %v4045 = vsel %vm4044, %v3911, %v4043
        %vm4046 = vcmp.eq.f32.partialorder %v3911, 0.0
        %v4047 = vand.u32 %v3911, 2147483648
        %v4048 = vsel %vm4046, %v4047, %v4045
        %v4049 = vrsqrt.pop %v3912
        %v4050 = vmul.f32 %v4049, %v3912
        %v4051 = vmul.f32 %v4050, %v4049
        %v4052 = vmul.f32 0.5, %v4051
        %v4053 = vsub.f32 1.5, %v4052
        %v4054 = vmul.f32 %v4049, %v4053
        %v4055 = vmul.f32 %v3912, %v4054
        %vm4056 = vcmp.eq.f32.partialorder %v3912, inf
        %v4057 = vsel %vm4056, %v3912, %v4055
        %vm4058 = vcmp.eq.f32.partialorder %v3912, 0.0
        %v4059 = vand.u32 %v3912, 2147483648
        %v4060 = vsel %vm4058, %v4059, %v4057
        %v4061 = vrsqrt.pop %v3913
        %v4062 = vmul.f32 %v4061, %v3913
        %v4063 = vmul.f32 %v4062, %v4061
        %v4064 = vmul.f32 0.5, %v4063
        %v4065 = vsub.f32 1.5, %v4064
        %v4066 = vmul.f32 %v4061, %v4065
        %v4067 = vmul.f32 %v3913, %v4066
        %vm4068 = vcmp.eq.f32.partialorder %v3913, inf
        %v4069 = vsel %vm4068, %v3913, %v4067
        %vm4070 = vcmp.eq.f32.partialorder %v3913, 0.0
        %v4071 = vand.u32 %v3913, 2147483648
        %v4072 = vsel %vm4070, %v4071, %v4069
        %v4073 = vrsqrt.pop %v3914
        %v4074 = vmul.f32 %v4073, %v3914
        %v4075 = vmul.f32 %v4074, %v4073
        %v4076 = vmul.f32 0.5, %v4075
        %v4077 = vsub.f32 1.5, %v4076
        %v4078 = vmul.f32 %v4073, %v4077
        %v4079 = vmul.f32 %v3914, %v4078
        %vm4080 = vcmp.eq.f32.partialorder %v3914, inf
        %v4081 = vsel %vm4080, %v3914, %v4079
        %vm4082 = vcmp.eq.f32.partialorder %v3914, 0.0
        %v4083 = vand.u32 %v3914, 2147483648
        %v4084 = vsel %vm4082, %v4083, %v4081
        %v4085 = vrsqrt.pop %v3915
        %v4086 = vmul.f32 %v4085, %v3915
        %v4087 = vmul.f32 %v4086, %v4085
        %v4088 = vmul.f32 0.5, %v4087
        %v4089 = vsub.f32 1.5, %v4088
        %v4090 = vmul.f32 %v4085, %v4089
        %v4091 = vmul.f32 %v3915, %v4090
        %vm4092 = vcmp.eq.f32.partialorder %v3915, inf
        %v4093 = vsel %vm4092, %v3915, %v4091
        %vm4094 = vcmp.eq.f32.partialorder %v3915, 0.0
        %v4095 = vand.u32 %v3915, 2147483648
        %v4096 = vsel %vm4094, %v4095, %v4093
        %v4097 = vrsqrt.pop %v3916
        %v4098 = vmul.f32 %v4097, %v3916
        %v4099 = vmul.f32 %v4098, %v4097
        %v4100 = vmul.f32 0.5, %v4099
        %v4101 = vsub.f32 1.5, %v4100
        %v4102 = vmul.f32 %v4097, %v4101
        %v4103 = vmul.f32 %v3916, %v4102
        %vm4104 = vcmp.eq.f32.partialorder %v3916, inf
        %v4105 = vsel %vm4104, %v3916, %v4103
        %vm4106 = vcmp.eq.f32.partialorder %v3916, 0.0
        %v4107 = vand.u32 %v3916, 2147483648
        %v4108 = vsel %vm4106, %v4107, %v4105
        %4109 = vst [vmem:[%s311] sm:$0xff] %v3928
        %4110 = vst [vmem:[%s311 + $0x8] sm:$0xff] %v3940
        %4111 = vst [vmem:[%s311 + $0x10] sm:$0xff] %v3952
        %4112 = vst [vmem:[%s311 + $0x18] sm:$0xff] %v3964
        %4113 = vst [vmem:[%s311 + $0x20] sm:$0xff] %v3976
        %4114 = vst [vmem:[%s311 + $0x28] sm:$0xff] %v3988
        %4115 = vst [vmem:[%s311 + $0x30] sm:$0xff] %v4000
        %4116 = vst [vmem:[%s311 + $0x38] sm:$0xff] %v4012
        %4117 = vst [vmem:[%s311 + $0x40] sm:$0xff] %v4024
        %4118 = vst [vmem:[%s311 + $0x48] sm:$0xff] %v4036
        %4119 = vst [vmem:[%s311 + $0x50] sm:$0xff] %v4048
        %4120 = vst [vmem:[%s311 + $0x58] sm:$0xff] %v4060
        %4121 = vst [vmem:[%s311 + $0x60] sm:$0xff] %v4072
        %4122 = vst [vmem:[%s311 + $0x68] sm:$0xff] %v4084
        %4123 = vst [vmem:[%s311 + $0x70] sm:$0xff] %v4096
        %4124 = vst [vmem:[%s311 + $0x78] sm:$0xff] %v4108
        %s4125 = sand.u32 %s132, 1
        %s4126 = scalar_lea.sflag [#allocation4], %s4125
        %s4127 = sand.u32 %s132, 1
        %s4128 = smul.addr %s4127, 256
        %s4129 = scalar_lea.vmem [#allocation9], %s4128
        %s4130 = sand.u32 %s158, 1
        %s4131 = scalar_lea.sflag [#allocation11], %s4130
        %s4132 = sand.u32 %s158, 1
        %s4133 = smul.addr %s4132, 128
        %s4134 = scalar_lea.vmem [#allocation10], %s4133
        // Predicated region
        $region49: #{tpu_custom_call.1} parent=35 // pred_check
          %p4135 = pneg %p142
        $region50: #{tpu_custom_call.1} parent=35 // pred_check_branch
          %4137 = sbr.rel (%p4135) target = $region52
        $region51: #{tpu_custom_call.1} parent=35 // pred_region
          %4139 = vsyncadd %s4126, 0
          %s4140 = smul.addr %s30, 32
          %s4141 = smul.addr %s4140, 8
          %s4142 = scalar_lea.hbm %s4, %s4141
          %s4143 = sshll.u32 %s4129, 4
          %s4144 = int_to_ptr.vmem [resolvable:$true] %s4143
          %s4145 = sshll.u32 %s4142, 4
          %s4146 = int_to_ptr.hbm [resolvable:$true] %s4145
          %4151 = dma.vmem_to_hbm [thread:$0]  %s4144, 4096, %s4146, %s4126, 128, 128, 8
        $region52: #{tpu_custom_call.1} parent=35 // pred_fallthru
          _
        // Predicated region
        $region53: #{tpu_custom_call.1} parent=35 // pred_check
          %p4152 = pneg %p168
        $region54: #{tpu_custom_call.1} parent=35 // pred_check_branch
          %4154 = sbr.rel (%p4152) target = $region56
        $region55: #{tpu_custom_call.1} parent=35 // pred_region
          %4156 = vsyncadd %s4131, 0
          %s4157 = smul.addr %s30, 16
          %s4158 = smul.addr %s4157, 8
          %s4159 = scalar_lea.hbm %s5, %s4158
          %s4160 = sshll.u32 %s4134, 4
          %s4161 = int_to_ptr.vmem [resolvable:$true] %s4160
          %s4162 = sshll.u32 %s4159, 4
          %s4163 = int_to_ptr.hbm [resolvable:$true] %s4162
          %4168 = dma.vmem_to_hbm [thread:$0]  %s4161, 2048, %s4163, %s4131, 128, 128, 8
        $region56: #{tpu_custom_call.1} parent=35 // pred_fallthru
          _
      $region36: #{tpu_custom_call.1} parent=5 // pred_fallthru
        _
      %p4169 = scmp.le.s32.totalorder 2, %s25
      // Predicated region
      $region57: #{tpu_custom_call.1} parent=5 // pred_check
        %p4170 = pneg %p4169
      $region58: #{tpu_custom_call.1} parent=5 // pred_check_branch
        %4172 = sbr.rel (%p4170) target = $region60
      $region59: #{tpu_custom_call.1} parent=5 // pred_region
        %s4173 = ssub.s32 %s25, 2
        // Predicated region
        $region61: #{tpu_custom_call.1} parent=59 // pred_check
          %p4174 = pneg %p148
        $region62: #{tpu_custom_call.1} parent=59 // pred_check_branch
          %4176 = sbr.rel (%p4174) target = $region64
        $region63: #{tpu_custom_call.1} parent=59 // pred_region
          %s4177 = sand.u32 %s133, 1
          %s4178 = scalar_lea.sflag [#allocation4], %s4177
          %s4179 = sand.u32 %s133, 1
          %s4180 = smul.addr %s4179, 256
          %s4181 = scalar_lea.vmem [#allocation9], %s4180
          %4183 = dma.done %s4178, 4096
        $region64: #{tpu_custom_call.1} parent=59 // pred_fallthru
          _
        // Predicated region
        $region65: #{tpu_custom_call.1} parent=59 // pred_check
          %p4184 = pneg %p174
        $region66: #{tpu_custom_call.1} parent=59 // pred_check_branch
          %4186 = sbr.rel (%p4184) target = $region68
        $region67: #{tpu_custom_call.1} parent=59 // pred_region
          %s4187 = sand.u32 %s159, 1
          %s4188 = scalar_lea.sflag [#allocation11], %s4187
          %s4189 = sand.u32 %s159, 1
          %s4190 = smul.addr %s4189, 128
          %s4191 = scalar_lea.vmem [#allocation10], %s4190
          %4193 = dma.done %s4188, 2048
        $region68: #{tpu_custom_call.1} parent=59 // pred_fallthru
          _
      $region60: #{tpu_custom_call.1} parent=5 // pred_fallthru
        _
    $region6: #{tpu_custom_call.1} parent=1 // loop_footer
      %s29 = sadd.s32 1, %s25
    $region7: #{tpu_custom_call.1} parent=1 // loop_footer_branch
      %24 = sbr.rel target = $region3
    $region8: #{tpu_custom_call.1} parent=1 // loop_exit
      _
    %4194 = vsyncpa [#allocation3], 1
    %s4195 = scalar_lea.sflag [#allocation3], 1
    %4196 = vsyncpa %s4195, 1
    %4197 = vsyncpa [#allocation7], 1
    %s4198 = scalar_lea.sflag [#allocation7], 1
    %4199 = vsyncpa %s4198, 1
    %4200 = vsyncpa [#allocation4], 1
    %s4201 = scalar_lea.sflag [#allocation4], 1
    %4202 = vsyncpa %s4201, 1
    %4203 = vsyncpa [#allocation11], 1
    %s4204 = scalar_lea.sflag [#allocation11], 1
    %4205 = vsyncpa %s4204, 1
    %4206 = vsyncpa [#allocation5], 1
    %s4207 = scalar_lea.sflag [#allocation5], 1
    %4208 = vsyncpa %s4207, 1

</llo_original>
